<compile_context>
chip_gen: v7x
topology: tpu7x:2x2x1
jax: 0.10.0
libtpu: 0.0.40
codegen_flags: <defaults>
</compile_context>

<pallas_src>
import jax
import jax.numpy as jnp
from jax.experimental import pallas as pl
from jax.experimental.pallas import tpu as pltpu

BN_EPS = 1e-5
IN_DIM = 3200
HID = 128


def _generator_kernel(x1_ref, x2_ref, x3_ref, w1_ref, b1_ref, w2_ref, b2_ref,
                      o1_ref, o2_ref, o3_ref):
    # x*_ref: (bt, 3200)       w1_ref: (3200, 128) bf16   w2_ref: (128, 128) f32
    # b*_ref: (1, 128) f32 (BatchNorm already folded into weights/biases).
    w1 = w1_ref[...]
    b1 = b1_ref[...]
    w2 = w2_ref[...]
    b2 = b2_ref[...]

    def mlp(x):
        # Dropout(0.1) == identity in eval mode.
        # Linear1 (+ folded BatchNorm1): bf16 MXU matmul, f32 accumulation.
        z = jnp.dot(x.astype(jnp.bfloat16), w1,
                    preferred_element_type=jnp.float32) + b1
        # LeakyReLU(0.2)
        z = jnp.where(z >= 0.0, z, 0.2 * z)
        # Dropout == identity.  Linear2 (+ folded BatchNorm2): tiny f32 matmul.
        z = jnp.dot(z, w2, preferred_element_type=jnp.float32) + b2
        # Tanh (EUP)
        return jnp.tanh(z)

    # All three branches handled in the same grid step (weights loaded once).
    o1_ref[...] = mlp(x1_ref[...]).astype(o1_ref.dtype)
    o2_ref[...] = mlp(x2_ref[...]).astype(o2_ref.dtype)
    o3_ref[...] = mlp(x3_ref[...]).astype(o3_ref.dtype)


def generator_forward(in1, in2, in3, params, *, block_b=128):
    """Eval-mode forward: returns (trans(in1), trans(in2), trans(in3))."""
    assert block_b % 8 == 0
    B = in1.shape[0]
    x1 = in1.reshape(B, IN_DIM)
    x2 = in2.reshape(B, IN_DIM)
    x3 = in3.reshape(B, IN_DIM)

    (w1, b1, g1, be1, m1, v1, w2, b2, g2, be2, m2, v2) = params
    f32 = lambda a: a.astype(jnp.float32)

    # Fold BatchNorm (running stats) into the adjacent Linear:
    #   y = s*(x@W.T + b - m) + beta  ==  x @ (W*s[:,None]).T + ((b-m)*s + beta)
    s1 = f32(g1) * jax.lax.rsqrt(f32(v1) + BN_EPS)
    w1_eff = (f32(w1) * s1[:, None]).T.astype(jnp.bfloat16)       # (3200, 128)
    b1_eff = ((f32(b1) - f32(m1)) * s1 + f32(be1)).reshape(1, HID)
    s2 = f32(g2) * jax.lax.rsqrt(f32(v2) + BN_EPS)
    w2_eff = (f32(w2) * s2[:, None]).T                            # (128, 128)
    b2_eff = ((f32(b2) - f32(m2)) * s2 + f32(be2)).reshape(1, HID)

    # One batch tile per grid step (all three inputs processed in that step).
    bt = B if B <= block_b else block_b
    grid = (pl.cdiv(B, bt),)

    x_spec = pl.BlockSpec((bt, IN_DIM), lambda i: (i, 0))
    const = lambda shape: pl.BlockSpec(shape, lambda i: (0, 0))
    o_spec = pl.BlockSpec((bt, HID), lambda i: (i, 0))

    return pl.pallas_call(
        _generator_kernel,
        out_shape=tuple(jax.ShapeDtypeStruct((B, HID), jnp.float32)
                        for _ in range(3)),
        grid_spec=pltpu.PrefetchScalarGridSpec(
            num_scalar_prefetch=0,
            grid=grid,
            in_specs=[x_spec, x_spec, x_spec,
                      const((IN_DIM, HID)), const((1, HID)),
                      const((HID, HID)), const((1, HID))],
            out_specs=[o_spec, o_spec, o_spec],
        ),
        compiler_params=pltpu.CompilerParams(
            dimension_semantics=("parallel",)),
    )(x1, x2, x3, w1_eff, b1_eff, w2_eff, b2_eff)


def init_params(key):
    """Deterministic init mirroring a fresh PyTorch Generator (eval mode)."""
    k1, k2, k3, k4 = jax.random.split(key, 4)
    bound1 = 1.0 / (IN_DIM ** 0.5)
    bound2 = 1.0 / (HID ** 0.5)
    w1 = jax.random.uniform(k1, (HID, IN_DIM), jnp.float32, -bound1, bound1)  # (out, in)
    b1 = jax.random.uniform(k2, (HID,), jnp.float32, -bound1, bound1)
    w2 = jax.random.uniform(k3, (HID, HID), jnp.float32, -bound2, bound2)     # (out, in)
    b2 = jax.random.uniform(k4, (HID,), jnp.float32, -bound2, bound2)
    # BatchNorm1d default init: gamma=1, beta=0, running_mean=0, running_var=1
    g1 = jnp.ones((HID,), jnp.float32);  be1 = jnp.zeros((HID,), jnp.float32)
    m1 = jnp.zeros((HID,), jnp.float32); v1 = jnp.ones((HID,), jnp.float32)
    g2 = jnp.ones((HID,), jnp.float32);  be2 = jnp.zeros((HID,), jnp.float32)
    m2 = jnp.zeros((HID,), jnp.float32); v2 = jnp.ones((HID,), jnp.float32)
    return (w1, b1, g1, be1, m1, v1, w2, b2, g2, be2, m2, v2)


def _reference(x, params):
    """Pure-JAX f32 reference for correctness check."""
    (w1, b1, g1, be1, m1, v1, w2, b2, g2, be2, m2, v2) = params
    z = x.reshape(x.shape[0], -1) @ w1.T + b1
    z = (z - m1) * (g1 / jnp.sqrt(v1 + BN_EPS)) + be1
    z = jnp.where(z >= 0.0, z, 0.2 * z)
    z = z @ w2.T + b2
    z = (z - m2) * (g2 / jnp.sqrt(v2 + BN_EPS)) + be2
    return jnp.tanh(z)


if __name__ == "__main__":
    key = jax.random.PRNGKey(0)
    kp, ka, kb, kc = jax.random.split(key, 4)
    params = init_params(kp)

    B = 2
    # each input flattens to 3200 features (2 * 40 * 40)
    in1 = jax.random.normal(ka, (B, 2, 40, 40), jnp.float32)
    in2 = jax.random.normal(kb, (B, 2, 40, 40), jnp.float32)
    in3 = jax.random.normal(kc, (B, 2, 40, 40), jnp.float32)

    o1, o2, o3 = generator_forward(in1, in2, in3, params)
    jax.block_until_ready((o1, o2, o3))

    # Sanity check vs. pure-f32 reference.  Tolerance loosened because the
    # first (3200x128) matmul runs on the MXU in bf16 (f32 accumulation).
    for o, x in ((o1, in1), (o2, in2), (o3, in3)):
        ref = _reference(x, params)
        assert o.shape == (B, HID)
        assert jnp.max(jnp.abs(o - ref)) < 3e-2, "mismatch vs reference"

    print("KERNEL_OK")
</pallas_src>

<mosaic_0001>
module attributes {stable_mosaic.version = 11 : i64} {
  func.func @_generator_kernel(%arg0: i32, %arg1: memref<2x3200xf32, #tpu.memory_space<vmem>>, %arg2: memref<2x3200xf32, #tpu.memory_space<vmem>>, %arg3: memref<2x3200xf32, #tpu.memory_space<vmem>>, %arg4: memref<3200x128xbf16, #tpu.memory_space<vmem>>, %arg5: memref<1x128xf32, #tpu.memory_space<vmem>>, %arg6: memref<128x128xf32, #tpu.memory_space<vmem>>, %arg7: memref<1x128xf32, #tpu.memory_space<vmem>>, %arg8: memref<2x128xf32, #tpu.memory_space<vmem>>, %arg9: memref<2x128xf32, #tpu.memory_space<vmem>>, %arg10: memref<2x128xf32, #tpu.memory_space<vmem>>) attributes {dimension_semantics = [#tpu.dimension_semantics<parallel>], iteration_bounds = array<i64: 1>, scalar_prefetch = 0 : i64, scratch_operands = 0 : i64, tpu.core_type = #tpu.core_type<tc>, window_params = [{transform_indices = @transform_0, window_bounds = array<i64: 2, 3200>}, {transform_indices = @transform_1, window_bounds = array<i64: 2, 3200>}, {transform_indices = @transform_2, window_bounds = array<i64: 2, 3200>}, {pipeline_mode = #tpu.pipeline_mode<synchronous>, transform_indices = @transform_3, window_bounds = array<i64: 3200, 128>}, {pipeline_mode = #tpu.pipeline_mode<synchronous>, transform_indices = @transform_4, window_bounds = array<i64: 1, 128>}, {pipeline_mode = #tpu.pipeline_mode<synchronous>, transform_indices = @transform_5, window_bounds = array<i64: 128, 128>}, {pipeline_mode = #tpu.pipeline_mode<synchronous>, transform_indices = @transform_6, window_bounds = array<i64: 1, 128>}, {transform_indices = @transform_7, window_bounds = array<i64: 2, 128>}, {transform_indices = @transform_8, window_bounds = array<i64: 2, 128>}, {transform_indices = @transform_9, window_bounds = array<i64: 2, 128>}]} {
    %c0 = arith.constant 0 : index
    %c0_0 = arith.constant 0 : index
    %0 = vector.load %arg4[%c0, %c0_0] : memref<3200x128xbf16, #tpu.memory_space<vmem>>, vector<3200x128xbf16>
    %c0_1 = arith.constant 0 : index
    %c0_2 = arith.constant 0 : index
    %1 = vector.load %arg5[%c0_1, %c0_2] : memref<1x128xf32, #tpu.memory_space<vmem>>, vector<1x128xf32>
    %c0_3 = arith.constant 0 : index
    %c0_4 = arith.constant 0 : index
    %2 = vector.load %arg6[%c0_3, %c0_4] : memref<128x128xf32, #tpu.memory_space<vmem>>, vector<128x128xf32>
    %c0_5 = arith.constant 0 : index
    %c0_6 = arith.constant 0 : index
    %3 = vector.load %arg7[%c0_5, %c0_6] : memref<1x128xf32, #tpu.memory_space<vmem>>, vector<1x128xf32>
    %c0_7 = arith.constant 0 : index
    %c0_8 = arith.constant 0 : index
    %4 = vector.load %arg1[%c0_7, %c0_8] : memref<2x3200xf32, #tpu.memory_space<vmem>>, vector<2x3200xf32>
    %5 = arith.truncf %4 : vector<2x3200xf32> to vector<2x3200xbf16>
    %cst = arith.constant dense<0.000000e+00> : vector<2x128xf32>
    %6 = tpu.matmul %5, %0, %cst {dimension_numbers = #tpu.dot_dimension_numbers<[1], [0], [0], [1], [0, 0, 1, 1], [], []>} : vector<2x3200xbf16>, vector<3200x128xbf16>, vector<2x128xf32> -> vector<2x128xf32>
    %7 = vector.broadcast %1 : vector<1x128xf32> to vector<2x128xf32>
    %8 = arith.addf %6, %7 : vector<2x128xf32>
    %cst_9 = arith.constant 0.000000e+00 : f32
    %9 = vector.broadcast %cst_9 : f32 to vector<2x128xf32>
    %10 = arith.cmpf oge, %8, %9 : vector<2x128xf32>
    %cst_10 = arith.constant 2.000000e-01 : f32
    %11 = vector.broadcast %cst_10 : f32 to vector<2x128xf32>
    %12 = arith.mulf %11, %8 : vector<2x128xf32>
    %13 = arith.select %10, %8, %12 : vector<2x128xi1>, vector<2x128xf32>
    %cst_11 = arith.constant dense<0.000000e+00> : vector<2x128xf32>
    %14 = tpu.matmul %13, %2, %cst_11 {dimension_numbers = #tpu.dot_dimension_numbers<[1], [0], [0], [1], [0, 0, 1, 1], [], []>} : vector<2x128xf32>, vector<128x128xf32>, vector<2x128xf32> -> vector<2x128xf32>
    %15 = vector.broadcast %3 : vector<1x128xf32> to vector<2x128xf32>
    %16 = arith.addf %14, %15 : vector<2x128xf32>
    %17 = math.tanh %16 : vector<2x128xf32>
    %c0_12 = arith.constant 0 : index
    %c0_13 = arith.constant 0 : index
    %18 = vector.load %arg8[%c0_12, %c0_13] : memref<2x128xf32, #tpu.memory_space<vmem>>, vector<2x128xf32>
    tpu.vector_store %arg8[%c0_12, %c0_13], %17 {strides = array<i32>} : memref<2x128xf32, #tpu.memory_space<vmem>>, vector<2x128xf32>,
    %c0_14 = arith.constant 0 : index
    %c0_15 = arith.constant 0 : index
    %19 = vector.load %arg2[%c0_14, %c0_15] : memref<2x3200xf32, #tpu.memory_space<vmem>>, vector<2x3200xf32>
    %20 = arith.truncf %19 : vector<2x3200xf32> to vector<2x3200xbf16>
    %cst_16 = arith.constant dense<0.000000e+00> : vector<2x128xf32>
    %21 = tpu.matmul %20, %0, %cst_16 {dimension_numbers = #tpu.dot_dimension_numbers<[1], [0], [0], [1], [0, 0, 1, 1], [], []>} : vector<2x3200xbf16>, vector<3200x128xbf16>, vector<2x128xf32> -> vector<2x128xf32>
    %22 = vector.broadcast %1 : vector<1x128xf32> to vector<2x128xf32>
    %23 = arith.addf %21, %22 : vector<2x128xf32>
    %cst_17 = arith.constant 0.000000e+00 : f32
    %24 = vector.broadcast %cst_17 : f32 to vector<2x128xf32>
    %25 = arith.cmpf oge, %23, %24 : vector<2x128xf32>
    %cst_18 = arith.constant 2.000000e-01 : f32
    %26 = vector.broadcast %cst_18 : f32 to vector<2x128xf32>
    %27 = arith.mulf %26, %23 : vector<2x128xf32>
    %28 = arith.select %25, %23, %27 : vector<2x128xi1>, vector<2x128xf32>
    %cst_19 = arith.constant dense<0.000000e+00> : vector<2x128xf32>
    %29 = tpu.matmul %28, %2, %cst_19 {dimension_numbers = #tpu.dot_dimension_numbers<[1], [0], [0], [1], [0, 0, 1, 1], [], []>} : vector<2x128xf32>, vector<128x128xf32>, vector<2x128xf32> -> vector<2x128xf32>
    %30 = vector.broadcast %3 : vector<1x128xf32> to vector<2x128xf32>
    %31 = arith.addf %29, %30 : vector<2x128xf32>
    %32 = math.tanh %31 : vector<2x128xf32>
    %c0_20 = arith.constant 0 : index
    %c0_21 = arith.constant 0 : index
    %33 = vector.load %arg9[%c0_20, %c0_21] : memref<2x128xf32, #tpu.memory_space<vmem>>, vector<2x128xf32>
    tpu.vector_store %arg9[%c0_20, %c0_21], %32 {strides = array<i32>} : memref<2x128xf32, #tpu.memory_space<vmem>>, vector<2x128xf32>,
    %c0_22 = arith.constant 0 : index
    %c0_23 = arith.constant 0 : index
    %34 = vector.load %arg3[%c0_22, %c0_23] : memref<2x3200xf32, #tpu.memory_space<vmem>>, vector<2x3200xf32>
    %35 = arith.truncf %34 : vector<2x3200xf32> to vector<2x3200xbf16>
    %cst_24 = arith.constant dense<0.000000e+00> : vector<2x128xf32>
    %36 = tpu.matmul %35, %0, %cst_24 {dimension_numbers = #tpu.dot_dimension_numbers<[1], [0], [0], [1], [0, 0, 1, 1], [], []>} : vector<2x3200xbf16>, vector<3200x128xbf16>, vector<2x128xf32> -> vector<2x128xf32>
    %37 = vector.broadcast %1 : vector<1x128xf32> to vector<2x128xf32>
    %38 = arith.addf %36, %37 : vector<2x128xf32>
    %cst_25 = arith.constant 0.000000e+00 : f32
    %39 = vector.broadcast %cst_25 : f32 to vector<2x128xf32>
    %40 = arith.cmpf oge, %38, %39 : vector<2x128xf32>
    %cst_26 = arith.constant 2.000000e-01 : f32
    %41 = vector.broadcast %cst_26 : f32 to vector<2x128xf32>
    %42 = arith.mulf %41, %38 : vector<2x128xf32>
    %43 = arith.select %40, %38, %42 : vector<2x128xi1>, vector<2x128xf32>
    %cst_27 = arith.constant dense<0.000000e+00> : vector<2x128xf32>
    %44 = tpu.matmul %43, %2, %cst_27 {dimension_numbers = #tpu.dot_dimension_numbers<[1], [0], [0], [1], [0, 0, 1, 1], [], []>} : vector<2x128xf32>, vector<128x128xf32>, vector<2x128xf32> -> vector<2x128xf32>
    %45 = vector.broadcast %3 : vector<1x128xf32> to vector<2x128xf32>
    %46 = arith.addf %44, %45 : vector<2x128xf32>
    %47 = math.tanh %46 : vector<2x128xf32>
    %c0_28 = arith.constant 0 : index
    %c0_29 = arith.constant 0 : index
    %48 = vector.load %arg10[%c0_28, %c0_29] : memref<2x128xf32, #tpu.memory_space<vmem>>, vector<2x128xf32>
    tpu.vector_store %arg10[%c0_28, %c0_29], %47 {strides = array<i32>} : memref<2x128xf32, #tpu.memory_space<vmem>>, vector<2x128xf32>,
    return
  }
  func.func @transform_0(%arg0: i32) -> (i32, i32) {
    %c0_i32 = arith.constant 0 : i32
    %c0_i32_0 = arith.constant 0 : i32
    return %arg0, %c0_i32 : i32, i32
  }
  func.func @transform_1(%arg0: i32) -> (i32, i32) {
    %c0_i32 = arith.constant 0 : i32
    %c0_i32_0 = arith.constant 0 : i32
    return %arg0, %c0_i32 : i32, i32
  }
  func.func @transform_2(%arg0: i32) -> (i32, i32) {
    %c0_i32 = arith.constant 0 : i32
    %c0_i32_0 = arith.constant 0 : i32
    return %arg0, %c0_i32 : i32, i32
  }
  func.func @transform_3(%arg0: i32) -> (i32, i32) {
    %c0_i32 = arith.constant 0 : i32
    %c0_i32_0 = arith.constant 0 : i32
    %c0_i32_1 = arith.constant 0 : i32
    return %c0_i32, %c0_i32_0 : i32, i32
  }
  func.func @transform_4(%arg0: i32) -> (i32, i32) {
    %c0_i32 = arith.constant 0 : i32
    %c0_i32_0 = arith.constant 0 : i32
    %c0_i32_1 = arith.constant 0 : i32
    return %c0_i32, %c0_i32_0 : i32, i32
  }
  func.func @transform_5(%arg0: i32) -> (i32, i32) {
    %c0_i32 = arith.constant 0 : i32
    %c0_i32_0 = arith.constant 0 : i32
    %c0_i32_1 = arith.constant 0 : i32
    return %c0_i32, %c0_i32_0 : i32, i32
  }
  func.func @transform_6(%arg0: i32) -> (i32, i32) {
    %c0_i32 = arith.constant 0 : i32
    %c0_i32_0 = arith.constant 0 : i32
    %c0_i32_1 = arith.constant 0 : i32
    return %c0_i32, %c0_i32_0 : i32, i32
  }
  func.func @transform_7(%arg0: i32) -> (i32, i32) {
    %c0_i32 = arith.constant 0 : i32
    %c0_i32_0 = arith.constant 0 : i32
    return %arg0, %c0_i32 : i32, i32
  }
  func.func @transform_8(%arg0: i32) -> (i32, i32) {
    %c0_i32 = arith.constant 0 : i32
    %c0_i32_0 = arith.constant 0 : i32
    return %arg0, %c0_i32 : i32, i32
  }
  func.func @transform_9(%arg0: i32) -> (i32, i32) {
    %c0_i32 = arith.constant 0 : i32
    %c0_i32_0 = arith.constant 0 : i32
    return %arg0, %c0_i32 : i32, i32
  }
}

</mosaic_0001>

<llo_original>
// kernel: tpu_custom_call.1
$region0: #{tpu_custom_call.1}
  #allocation0 [shape = 'u32[]', space=smem, size = 0x4, offset = 0x4, fixed_abs, tag = 'smem constant byte address 0x4 - core index']
  #allocation1 [shape = 'u32[144,128]{1,0:T(1,128)}', space=vmem, size = 0x12000, scoped, tag = 'internal scratch']
  %s0 = inlined_call_operand.hbm [shape: f32[2,3200], index: 0, kind: input, shape index: {}]
  %s1 = inlined_call_operand.hbm [shape: f32[2,3200], index: 1, kind: input, shape index: {}]
  %s2 = inlined_call_operand.hbm [shape: f32[2,3200], index: 2, kind: input, shape index: {}]
  %s3 = inlined_call_operand.hbm [shape: bf16[3200,128], index: 3, kind: input, shape index: {}]
  %s4 = inlined_call_operand.vmem [shape: f32[1,128], index: 4, kind: input, shape index: {}]
  %s5 = inlined_call_operand.hbm [shape: f32[128,128], index: 5, kind: input, shape index: {}]
  %s6 = inlined_call_operand.vmem [shape: f32[1,128], index: 6, kind: input, shape index: {}]
  %s7 = inlined_call_operand.hbm [shape: f32[2,128], index: 7, kind: output, shape index: {0}]
  %s8 = inlined_call_operand.hbm [shape: f32[2,128], index: 8, kind: output, shape index: {1}]
  %s9 = inlined_call_operand.hbm [shape: f32[2,128], index: 9, kind: output, shape index: {2}]
  %10 = xla_tuple %s7, %s8, %s9
  %s11 = sld [smem:[#allocation0]]
  $region74: #{tpu_custom_call.1} parent=0
    _
  %s13 = ssub.s32 1, %s11
  %s14 = scalar_select 0, %s13, %s11
  $region1: #{tpu_custom_call.1} parent=0
    #allocation2 [shape = 'u8[25600]{0}', space=vmem, size = 0x6400, scoped, tag = 'input window, operand 0, single buffered']
    #allocation3 [shape = 's32[1]{0}', space=sflag, size = 0x4, scoped, tag = 'scoped memory for tpu_custom_call.1']
    #allocation4 [shape = 's32[1]{0}', space=sflag, size = 0x4, scoped, tag = 'scoped memory for tpu_custom_call.1']
    #allocation5 [shape = 'u8[25600]{0}', space=vmem, size = 0x6400, scoped, tag = 'input window, operand 1, single buffered']
    #allocation6 [shape = 's32[1]{0}', space=sflag, size = 0x4, scoped, tag = 'scoped memory for tpu_custom_call.1']
    #allocation7 [shape = 'u8[25600]{0}', space=vmem, size = 0x6400, scoped, tag = 'input window, operand 2, single buffered']
    #allocation8 [shape = 'u8[819200]{0}', space=vmem, size = 0xc8000, scoped, tag = 'input window, operand 3, single buffered']
    #allocation9 [shape = 's32[1]{0}', space=sflag, size = 0x4, scoped, tag = 'scoped memory for tpu_custom_call.1']
    #allocation10 [shape = 'u8[65536]{0}', space=vmem, size = 0x10000, scoped, tag = 'input window, operand 5, single buffered']
    #allocation11 [shape = 'u8[1024]{0}', space=vmem, size = 0x400, scoped, tag = 'output window, operand 0, single buffered']
    #allocation12 [shape = 'u8[1024]{0}', space=vmem, size = 0x400, scoped, tag = 'output window, operand 1, single buffered']
    #allocation13 [shape = 's32[1]{0}', space=sflag, size = 0x4, scoped, tag = 'scoped memory for tpu_custom_call.1']
    #allocation14 [shape = 'u8[1024]{0}', space=vmem, size = 0x400, scoped, tag = 'output window, operand 2, single buffered']
    %15 = vsyncpa [#allocation3], 0
    %16 = vsyncpa [#allocation6], 0
    %17 = vsyncpa [#allocation9], 0
    %18 = vsyncpa [#allocation4], 0
    %19 = vsyncpa [#allocation13], 0
    // Predicated region
    $region2: #{tpu_custom_call.1} parent=1 // pred_check
      _
    $region3: #{tpu_custom_call.1} parent=1 // pred_check_branch
      %21 = sbr.rel (0) target = $region5
    $region4: #{tpu_custom_call.1} parent=1 // pred_region
      %s23 = ssub.s32 800, 800
      %24 = vsyncadd [#allocation3], %s23
      %s26 = sshll.u32 [#allocation2], 4
      %s27 = int_to_ptr.vmem [resolvable:$true] %s26
      %29 = dma.hbm_to_vmem [thread:$0]  %s0, 800, %s27, [#allocation3]
    $region5: #{tpu_custom_call.1} parent=1 // pred_fallthru
      _
    // Predicated region
    $region6: #{tpu_custom_call.1} parent=1 // pred_check
      _
    $region7: #{tpu_custom_call.1} parent=1 // pred_check_branch
      %31 = sbr.rel (0) target = $region9
    $region8: #{tpu_custom_call.1} parent=1 // pred_region
      %s33 = ssub.s32 800, 800
      %34 = vsyncadd [#allocation6], %s33
      %s36 = sshll.u32 [#allocation5], 4
      %s37 = int_to_ptr.vmem [resolvable:$true] %s36
      %39 = dma.hbm_to_vmem [thread:$0]  %s1, 800, %s37, [#allocation6]
    $region9: #{tpu_custom_call.1} parent=1 // pred_fallthru
      _
    // Predicated region
    $region10: #{tpu_custom_call.1} parent=1 // pred_check
      _
    $region11: #{tpu_custom_call.1} parent=1 // pred_check_branch
      %41 = sbr.rel (0) target = $region13
    $region12: #{tpu_custom_call.1} parent=1 // pred_region
      %s43 = ssub.s32 800, 800
      %44 = vsyncadd [#allocation6], %s43
      %s46 = sshll.u32 [#allocation7], 4
      %s47 = int_to_ptr.vmem [resolvable:$true] %s46
      %49 = dma.hbm_to_vmem [thread:$0]  %s2, 800, %s47, [#allocation6]
    $region13: #{tpu_custom_call.1} parent=1 // pred_fallthru
      _
    // Predicated region
    $region14: #{tpu_custom_call.1} parent=1 // pred_check
      _
    $region15: #{tpu_custom_call.1} parent=1 // pred_check_branch
      %51 = sbr.rel (0) target = $region17
    $region16: #{tpu_custom_call.1} parent=1 // pred_region
      %s53 = ssub.s32 25600, 25600
      %54 = vsyncadd [#allocation9], %s53
      %s55 = sshll.u32 [#allocation8], 4
      %s56 = int_to_ptr.vmem [resolvable:$true] %s55
      %61 = dma.hbm_to_vmem [thread:$0]  %s3, 25600, %s56, [#allocation9], 64, 64, 4
    $region17: #{tpu_custom_call.1} parent=1 // pred_fallthru
      _
    // Predicated region
    $region18: #{tpu_custom_call.1} parent=1 // pred_check
      _
    $region19: #{tpu_custom_call.1} parent=1 // pred_check_branch
      %63 = sbr.rel (0) target = $region21
    $region20: #{tpu_custom_call.1} parent=1 // pred_region
      _
    $region21: #{tpu_custom_call.1} parent=1 // pred_fallthru
      _
    // Predicated region
    $region22: #{tpu_custom_call.1} parent=1 // pred_check
      _
    $region23: #{tpu_custom_call.1} parent=1 // pred_check_branch
      %65 = sbr.rel (0) target = $region25
    $region24: #{tpu_custom_call.1} parent=1 // pred_region
      %s67 = ssub.s32 2048, 2048
      %68 = vsyncadd [#allocation9], %s67
      %s69 = sshll.u32 [#allocation10], 4
      %s70 = int_to_ptr.vmem [resolvable:$true] %s69
      %75 = dma.hbm_to_vmem [thread:$0]  %s5, 2048, %s70, [#allocation9], 128, 128, 8
    $region25: #{tpu_custom_call.1} parent=1 // pred_fallthru
      _
    // Predicated region
    $region26: #{tpu_custom_call.1} parent=1 // pred_check
      _
    $region27: #{tpu_custom_call.1} parent=1 // pred_check_branch
      %77 = sbr.rel (0) target = $region29
    $region28: #{tpu_custom_call.1} parent=1 // pred_region
      _
    $region29: #{tpu_custom_call.1} parent=1 // pred_fallthru
      _
    // Predicated region
    $region30: #{tpu_custom_call.1} parent=1 // pred_check
      _
    $region31: #{tpu_custom_call.1} parent=1 // pred_check_branch
      %79 = sbr.rel (0) target = $region33
    $region32: #{tpu_custom_call.1} parent=1 // pred_region
      %80 = dma.done [#allocation3], 800
    $region33: #{tpu_custom_call.1} parent=1 // pred_fallthru
      _
    // Predicated region
    $region34: #{tpu_custom_call.1} parent=1 // pred_check
      _
    $region35: #{tpu_custom_call.1} parent=1 // pred_check_branch
      %82 = sbr.rel (0) target = $region37
    $region36: #{tpu_custom_call.1} parent=1 // pred_region
      %83 = dma.done [#allocation6], 800
    $region37: #{tpu_custom_call.1} parent=1 // pred_fallthru
      _
    // Predicated region
    $region38: #{tpu_custom_call.1} parent=1 // pred_check
      _
    $region39: #{tpu_custom_call.1} parent=1 // pred_check_branch
      %85 = sbr.rel (0) target = $region41
    $region40: #{tpu_custom_call.1} parent=1 // pred_region
      %86 = dma.done [#allocation6], 800
    $region41: #{tpu_custom_call.1} parent=1 // pred_fallthru
      _
    // Predicated region
    $region42: #{tpu_custom_call.1} parent=1 // pred_check
      _
    $region43: #{tpu_custom_call.1} parent=1 // pred_check_branch
      %88 = sbr.rel (0) target = $region45
    $region44: #{tpu_custom_call.1} parent=1 // pred_region
      %89 = dma.done [#allocation9], 25600
    $region45: #{tpu_custom_call.1} parent=1 // pred_fallthru
      _
    // Predicated region
    $region46: #{tpu_custom_call.1} parent=1 // pred_check
      _
    $region47: #{tpu_custom_call.1} parent=1 // pred_check_branch
      %91 = sbr.rel (0) target = $region49
    $region48: #{tpu_custom_call.1} parent=1 // pred_region
      %92 = dma.done [#allocation9], 2048
    $region49: #{tpu_custom_call.1} parent=1 // pred_fallthru
      _
    %v94 = vld [vmem:[#allocation8] sm:$0xf]
    %v95 = vld [vmem:[#allocation8 + $0x4] sm:$0xf]
    %v96 = vld [vmem:[#allocation8 + $0x8] sm:$0xf]
    %v97 = vld [vmem:[#allocation8 + $0xc] sm:$0xf]
    %v98 = vld [vmem:[#allocation8 + $0x10] sm:$0xf]
    %v99 = vld [vmem:[#allocation8 + $0x14] sm:$0xf]
    %v100 = vld [vmem:[#allocation8 + $0x18] sm:$0xf]
    %v101 = vld [vmem:[#allocation8 + $0x1c] sm:$0xf]
    %v102 = vld [vmem:[#allocation8 + $0x20] sm:$0xf]
    %v103 = vld [vmem:[#allocation8 + $0x24] sm:$0xf]
    %v104 = vld [vmem:[#allocation8 + $0x28] sm:$0xf]
    %v105 = vld [vmem:[#allocation8 + $0x2c] sm:$0xf]
    %v106 = vld [vmem:[#allocation8 + $0x30] sm:$0xf]
    %v107 = vld [vmem:[#allocation8 + $0x34] sm:$0xf]
    %v108 = vld [vmem:[#allocation8 + $0x38] sm:$0xf]
    %v109 = vld [vmem:[#allocation8 + $0x3c] sm:$0xf]
    %v110 = vld [vmem:[#allocation8 + $0x40] sm:$0xf]
    %v111 = vld [vmem:[#allocation8 + $0x44] sm:$0xf]
    %v112 = vld [vmem:[#allocation8 + $0x48] sm:$0xf]
    %v113 = vld [vmem:[#allocation8 + $0x4c] sm:$0xf]
    %v114 = vld [vmem:[#allocation8 + $0x50] sm:$0xf]
    %v115 = vld [vmem:[#allocation8 + $0x54] sm:$0xf]
    %v116 = vld [vmem:[#allocation8 + $0x58] sm:$0xf]
    %v117 = vld [vmem:[#allocation8 + $0x5c] sm:$0xf]
    %v118 = vld [vmem:[#allocation8 + $0x60] sm:$0xf]
    %v119 = vld [vmem:[#allocation8 + $0x64] sm:$0xf]
    %v120 = vld [vmem:[#allocation8 + $0x68] sm:$0xf]
    %v121 = vld [vmem:[#allocation8 + $0x6c] sm:$0xf]
    %v122 = vld [vmem:[#allocation8 + $0x70] sm:$0xf]
    %v123 = vld [vmem:[#allocation8 + $0x74] sm:$0xf]
    %v124 = vld [vmem:[#allocation8 + $0x78] sm:$0xf]
    %v125 = vld [vmem:[#allocation8 + $0x7c] sm:$0xf]
    %v126 = vld [vmem:[#allocation8 + $0x80] sm:$0xf]
    %v127 = vld [vmem:[#allocation8 + $0x84] sm:$0xf]
    %v128 = vld [vmem:[#allocation8 + $0x88] sm:$0xf]
    %v129 = vld [vmem:[#allocation8 + $0x8c] sm:$0xf]
    %v130 = vld [vmem:[#allocation8 + $0x90] sm:$0xf]
    %v131 = vld [vmem:[#allocation8 + $0x94] sm:$0xf]
    %v132 = vld [vmem:[#allocation8 + $0x98] sm:$0xf]
    %v133 = vld [vmem:[#allocation8 + $0x9c] sm:$0xf]
    %v134 = vld [vmem:[#allocation8 + $0xa0] sm:$0xf]
    %v135 = vld [vmem:[#allocation8 + $0xa4] sm:$0xf]
    %v136 = vld [vmem:[#allocation8 + $0xa8] sm:$0xf]
    %v137 = vld [vmem:[#allocation8 + $0xac] sm:$0xf]
    %v138 = vld [vmem:[#allocation8 + $0xb0] sm:$0xf]
    %v139 = vld [vmem:[#allocation8 + $0xb4] sm:$0xf]
    %v140 = vld [vmem:[#allocation8 + $0xb8] sm:$0xf]
    %v141 = vld [vmem:[#allocation8 + $0xbc] sm:$0xf]
    %v142 = vld [vmem:[#allocation8 + $0xc0] sm:$0xf]
    %v143 = vld [vmem:[#allocation8 + $0xc4] sm:$0xf]
    %v144 = vld [vmem:[#allocation8 + $0xc8] sm:$0xf]
    %v145 = vld [vmem:[#allocation8 + $0xcc] sm:$0xf]
    %v146 = vld [vmem:[#allocation8 + $0xd0] sm:$0xf]
    %v147 = vld [vmem:[#allocation8 + $0xd4] sm:$0xf]
    %v148 = vld [vmem:[#allocation8 + $0xd8] sm:$0xf]
    %v149 = vld [vmem:[#allocation8 + $0xdc] sm:$0xf]
    %v150 = vld [vmem:[#allocation8 + $0xe0] sm:$0xf]
    %v151 = vld [vmem:[#allocation8 + $0xe4] sm:$0xf]
    %v152 = vld [vmem:[#allocation8 + $0xe8] sm:$0xf]
    %v153 = vld [vmem:[#allocation8 + $0xec] sm:$0xf]
    %v154 = vld [vmem:[#allocation8 + $0xf0] sm:$0xf]
    %v155 = vld [vmem:[#allocation8 + $0xf4] sm:$0xf]
    %v156 = vld [vmem:[#allocation8 + $0xf8] sm:$0xf]
    %v157 = vld [vmem:[#allocation8 + $0xfc] sm:$0xf]
    %v158 = vld [vmem:[#allocation8 + $0x100] sm:$0xf]
    %v159 = vld [vmem:[#allocation8 + $0x104] sm:$0xf]
    %v160 = vld [vmem:[#allocation8 + $0x108] sm:$0xf]
    %v161 = vld [vmem:[#allocation8 + $0x10c] sm:$0xf]
    %v162 = vld [vmem:[#allocation8 + $0x110] sm:$0xf]
    %v163 = vld [vmem:[#allocation8 + $0x114] sm:$0xf]
    %v164 = vld [vmem:[#allocation8 + $0x118] sm:$0xf]
    %v165 = vld [vmem:[#allocation8 + $0x11c] sm:$0xf]
    %v166 = vld [vmem:[#allocation8 + $0x120] sm:$0xf]
    %v167 = vld [vmem:[#allocation8 + $0x124] sm:$0xf]
    %v168 = vld [vmem:[#allocation8 + $0x128] sm:$0xf]
    %v169 = vld [vmem:[#allocation8 + $0x12c] sm:$0xf]
    %v170 = vld [vmem:[#allocation8 + $0x130] sm:$0xf]
    %v171 = vld [vmem:[#allocation8 + $0x134] sm:$0xf]
    %v172 = vld [vmem:[#allocation8 + $0x138] sm:$0xf]
    %v173 = vld [vmem:[#allocation8 + $0x13c] sm:$0xf]
    %v174 = vld [vmem:[#allocation8 + $0x140] sm:$0xf]
    %v175 = vld [vmem:[#allocation8 + $0x144] sm:$0xf]
    %v176 = vld [vmem:[#allocation8 + $0x148] sm:$0xf]
    %v177 = vld [vmem:[#allocation8 + $0x14c] sm:$0xf]
    %v178 = vld [vmem:[#allocation8 + $0x150] sm:$0xf]
    %v179 = vld [vmem:[#allocation8 + $0x154] sm:$0xf]
    %v180 = vld [vmem:[#allocation8 + $0x158] sm:$0xf]
    %v181 = vld [vmem:[#allocation8 + $0x15c] sm:$0xf]
    %v182 = vld [vmem:[#allocation8 + $0x160] sm:$0xf]
    %v183 = vld [vmem:[#allocation8 + $0x164] sm:$0xf]
    %v184 = vld [vmem:[#allocation8 + $0x168] sm:$0xf]
    %v185 = vld [vmem:[#allocation8 + $0x16c] sm:$0xf]
    %v186 = vld [vmem:[#allocation8 + $0x170] sm:$0xf]
    %v187 = vld [vmem:[#allocation8 + $0x174] sm:$0xf]
    %v188 = vld [vmem:[#allocation8 + $0x178] sm:$0xf]
    %v189 = vld [vmem:[#allocation8 + $0x17c] sm:$0xf]
    %v190 = vld [vmem:[#allocation8 + $0x180] sm:$0xf]
    %v191 = vld [vmem:[#allocation8 + $0x184] sm:$0xf]
    %v192 = vld [vmem:[#allocation8 + $0x188] sm:$0xf]
    %v193 = vld [vmem:[#allocation8 + $0x18c] sm:$0xf]
    %v194 = vld [vmem:[#allocation8 + $0x190] sm:$0xf]
    %v195 = vld [vmem:[#allocation8 + $0x194] sm:$0xf]
    %v196 = vld [vmem:[#allocation8 + $0x198] sm:$0xf]
    %v197 = vld [vmem:[#allocation8 + $0x19c] sm:$0xf]
    %v198 = vld [vmem:[#allocation8 + $0x1a0] sm:$0xf]
    %v199 = vld [vmem:[#allocation8 + $0x1a4] sm:$0xf]
    %v200 = vld [vmem:[#allocation8 + $0x1a8] sm:$0xf]
    %v201 = vld [vmem:[#allocation8 + $0x1ac] sm:$0xf]
    %v202 = vld [vmem:[#allocation8 + $0x1b0] sm:$0xf]
    %v203 = vld [vmem:[#allocation8 + $0x1b4] sm:$0xf]
    %v204 = vld [vmem:[#allocation8 + $0x1b8] sm:$0xf]
    %v205 = vld [vmem:[#allocation8 + $0x1bc] sm:$0xf]
    %v206 = vld [vmem:[#allocation8 + $0x1c0] sm:$0xf]
    %v207 = vld [vmem:[#allocation8 + $0x1c4] sm:$0xf]
    %v208 = vld [vmem:[#allocation8 + $0x1c8] sm:$0xf]
    %v209 = vld [vmem:[#allocation8 + $0x1cc] sm:$0xf]
    %v210 = vld [vmem:[#allocation8 + $0x1d0] sm:$0xf]
    %v211 = vld [vmem:[#allocation8 + $0x1d4] sm:$0xf]
    %v212 = vld [vmem:[#allocation8 + $0x1d8] sm:$0xf]
    %v213 = vld [vmem:[#allocation8 + $0x1dc] sm:$0xf]
    %v214 = vld [vmem:[#allocation8 + $0x1e0] sm:$0xf]
    %v215 = vld [vmem:[#allocation8 + $0x1e4] sm:$0xf]
    %v216 = vld [vmem:[#allocation8 + $0x1e8] sm:$0xf]
    %v217 = vld [vmem:[#allocation8 + $0x1ec] sm:$0xf]
    %v218 = vld [vmem:[#allocation8 + $0x1f0] sm:$0xf]
    %v219 = vld [vmem:[#allocation8 + $0x1f4] sm:$0xf]
    %v220 = vld [vmem:[#allocation8 + $0x1f8] sm:$0xf]
    %v221 = vld [vmem:[#allocation8 + $0x1fc] sm:$0xf]
    %v222 = vld [vmem:[#allocation8 + $0x200] sm:$0xf]
    %v223 = vld [vmem:[#allocation8 + $0x204] sm:$0xf]
    %v224 = vld [vmem:[#allocation8 + $0x208] sm:$0xf]
    %v225 = vld [vmem:[#allocation8 + $0x20c] sm:$0xf]
    %v226 = vld [vmem:[#allocation8 + $0x210] sm:$0xf]
    %v227 = vld [vmem:[#allocation8 + $0x214] sm:$0xf]
    %v228 = vld [vmem:[#allocation8 + $0x218] sm:$0xf]
    %v229 = vld [vmem:[#allocation8 + $0x21c] sm:$0xf]
    %v230 = vld [vmem:[#allocation8 + $0x220] sm:$0xf]
    %v231 = vld [vmem:[#allocation8 + $0x224] sm:$0xf]
    %v232 = vld [vmem:[#allocation8 + $0x228] sm:$0xf]
    %v233 = vld [vmem:[#allocation8 + $0x22c] sm:$0xf]
    %v234 = vld [vmem:[#allocation8 + $0x230] sm:$0xf]
    %v235 = vld [vmem:[#allocation8 + $0x234] sm:$0xf]
    %v236 = vld [vmem:[#allocation8 + $0x238] sm:$0xf]
    %v237 = vld [vmem:[#allocation8 + $0x23c] sm:$0xf]
    %v238 = vld [vmem:[#allocation8 + $0x240] sm:$0xf]
    %v239 = vld [vmem:[#allocation8 + $0x244] sm:$0xf]
    %v240 = vld [vmem:[#allocation8 + $0x248] sm:$0xf]
    %v241 = vld [vmem:[#allocation8 + $0x24c] sm:$0xf]
    %v242 = vld [vmem:[#allocation8 + $0x250] sm:$0xf]
    %v243 = vld [vmem:[#allocation8 + $0x254] sm:$0xf]
    %v244 = vld [vmem:[#allocation8 + $0x258] sm:$0xf]
    %v245 = vld [vmem:[#allocation8 + $0x25c] sm:$0xf]
    %v246 = vld [vmem:[#allocation8 + $0x260] sm:$0xf]
    %v247 = vld [vmem:[#allocation8 + $0x264] sm:$0xf]
    %v248 = vld [vmem:[#allocation8 + $0x268] sm:$0xf]
    %v249 = vld [vmem:[#allocation8 + $0x26c] sm:$0xf]
    %v250 = vld [vmem:[#allocation8 + $0x270] sm:$0xf]
    %v251 = vld [vmem:[#allocation8 + $0x274] sm:$0xf]
    %v252 = vld [vmem:[#allocation8 + $0x278] sm:$0xf]
    %v253 = vld [vmem:[#allocation8 + $0x27c] sm:$0xf]
    %v254 = vld [vmem:[#allocation8 + $0x280] sm:$0xf]
    %v255 = vld [vmem:[#allocation8 + $0x284] sm:$0xf]
    %v256 = vld [vmem:[#allocation8 + $0x288] sm:$0xf]
    %v257 = vld [vmem:[#allocation8 + $0x28c] sm:$0xf]
    %v258 = vld [vmem:[#allocation8 + $0x290] sm:$0xf]
    %v259 = vld [vmem:[#allocation8 + $0x294] sm:$0xf]
    %v260 = vld [vmem:[#allocation8 + $0x298] sm:$0xf]
    %v261 = vld [vmem:[#allocation8 + $0x29c] sm:$0xf]
    %v262 = vld [vmem:[#allocation8 + $0x2a0] sm:$0xf]
    %v263 = vld [vmem:[#allocation8 + $0x2a4] sm:$0xf]
    %v264 = vld [vmem:[#allocation8 + $0x2a8] sm:$0xf]
    %v265 = vld [vmem:[#allocation8 + $0x2ac] sm:$0xf]
    %v266 = vld [vmem:[#allocation8 + $0x2b0] sm:$0xf]
    %v267 = vld [vmem:[#allocation8 + $0x2b4] sm:$0xf]
    %v268 = vld [vmem:[#allocation8 + $0x2b8] sm:$0xf]
    %v269 = vld [vmem:[#allocation8 + $0x2bc] sm:$0xf]
    %v270 = vld [vmem:[#allocation8 + $0x2c0] sm:$0xf]
    %v271 = vld [vmem:[#allocation8 + $0x2c4] sm:$0xf]
    %v272 = vld [vmem:[#allocation8 + $0x2c8] sm:$0xf]
    %v273 = vld [vmem:[#allocation8 + $0x2cc] sm:$0xf]
    %v274 = vld [vmem:[#allocation8 + $0x2d0] sm:$0xf]
    %v275 = vld [vmem:[#allocation8 + $0x2d4] sm:$0xf]
    %v276 = vld [vmem:[#allocation8 + $0x2d8] sm:$0xf]
    %v277 = vld [vmem:[#allocation8 + $0x2dc] sm:$0xf]
    %v278 = vld [vmem:[#allocation8 + $0x2e0] sm:$0xf]
    %v279 = vld [vmem:[#allocation8 + $0x2e4] sm:$0xf]
    %v280 = vld [vmem:[#allocation8 + $0x2e8] sm:$0xf]
    %v281 = vld [vmem:[#allocation8 + $0x2ec] sm:$0xf]
    %v282 = vld [vmem:[#allocation8 + $0x2f0] sm:$0xf]
    %v283 = vld [vmem:[#allocation8 + $0x2f4] sm:$0xf]
    %v284 = vld [vmem:[#allocation8 + $0x2f8] sm:$0xf]
    %v285 = vld [vmem:[#allocation8 + $0x2fc] sm:$0xf]
    %v286 = vld [vmem:[#allocation8 + $0x300] sm:$0xf]
    %v287 = vld [vmem:[#allocation8 + $0x304] sm:$0xf]
    %v288 = vld [vmem:[#allocation8 + $0x308] sm:$0xf]
    %v289 = vld [vmem:[#allocation8 + $0x30c] sm:$0xf]
    %v290 = vld [vmem:[#allocation8 + $0x310] sm:$0xf]
    %v291 = vld [vmem:[#allocation8 + $0x314] sm:$0xf]
    %v292 = vld [vmem:[#allocation8 + $0x318] sm:$0xf]
    %v293 = vld [vmem:[#allocation8 + $0x31c] sm:$0xf]
    %v294 = vld [vmem:[#allocation8 + $0x320] sm:$0xf]
    %v295 = vld [vmem:[#allocation8 + $0x324] sm:$0xf]
    %v296 = vld [vmem:[#allocation8 + $0x328] sm:$0xf]
    %v297 = vld [vmem:[#allocation8 + $0x32c] sm:$0xf]
    %v298 = vld [vmem:[#allocation8 + $0x330] sm:$0xf]
    %v299 = vld [vmem:[#allocation8 + $0x334] sm:$0xf]
    %v300 = vld [vmem:[#allocation8 + $0x338] sm:$0xf]
    %v301 = vld [vmem:[#allocation8 + $0x33c] sm:$0xf]
    %v302 = vld [vmem:[#allocation8 + $0x340] sm:$0xf]
    %v303 = vld [vmem:[#allocation8 + $0x344] sm:$0xf]
    %v304 = vld [vmem:[#allocation8 + $0x348] sm:$0xf]
    %v305 = vld [vmem:[#allocation8 + $0x34c] sm:$0xf]
    %v306 = vld [vmem:[#allocation8 + $0x350] sm:$0xf]
    %v307 = vld [vmem:[#allocation8 + $0x354] sm:$0xf]
    %v308 = vld [vmem:[#allocation8 + $0x358] sm:$0xf]
    %v309 = vld [vmem:[#allocation8 + $0x35c] sm:$0xf]
    %v310 = vld [vmem:[#allocation8 + $0x360] sm:$0xf]
    %v311 = vld [vmem:[#allocation8 + $0x364] sm:$0xf]
    %v312 = vld [vmem:[#allocation8 + $0x368] sm:$0xf]
    %v313 = vld [vmem:[#allocation8 + $0x36c] sm:$0xf]
    %v314 = vld [vmem:[#allocation8 + $0x370] sm:$0xf]
    %v315 = vld [vmem:[#allocation8 + $0x374] sm:$0xf]
    %v316 = vld [vmem:[#allocation8 + $0x378] sm:$0xf]
    %v317 = vld [vmem:[#allocation8 + $0x37c] sm:$0xf]
    %v318 = vld [vmem:[#allocation8 + $0x380] sm:$0xf]
    %v319 = vld [vmem:[#allocation8 + $0x384] sm:$0xf]
    %v320 = vld [vmem:[#allocation8 + $0x388] sm:$0xf]
    %v321 = vld [vmem:[#allocation8 + $0x38c] sm:$0xf]
    %v322 = vld [vmem:[#allocation8 + $0x390] sm:$0xf]
    %v323 = vld [vmem:[#allocation8 + $0x394] sm:$0xf]
    %v324 = vld [vmem:[#allocation8 + $0x398] sm:$0xf]
    %v325 = vld [vmem:[#allocation8 + $0x39c] sm:$0xf]
    %v326 = vld [vmem:[#allocation8 + $0x3a0] sm:$0xf]
    %v327 = vld [vmem:[#allocation8 + $0x3a4] sm:$0xf]
    %v328 = vld [vmem:[#allocation8 + $0x3a8] sm:$0xf]
    %v329 = vld [vmem:[#allocation8 + $0x3ac] sm:$0xf]
    %v330 = vld [vmem:[#allocation8 + $0x3b0] sm:$0xf]
    %v331 = vld [vmem:[#allocation8 + $0x3b4] sm:$0xf]
    %v332 = vld [vmem:[#allocation8 + $0x3b8] sm:$0xf]
    %v333 = vld [vmem:[#allocation8 + $0x3bc] sm:$0xf]
    %v334 = vld [vmem:[#allocation8 + $0x3c0] sm:$0xf]
    %v335 = vld [vmem:[#allocation8 + $0x3c4] sm:$0xf]
    %v336 = vld [vmem:[#allocation8 + $0x3c8] sm:$0xf]
    %v337 = vld [vmem:[#allocation8 + $0x3cc] sm:$0xf]
    %v338 = vld [vmem:[#allocation8 + $0x3d0] sm:$0xf]
    %v339 = vld [vmem:[#allocation8 + $0x3d4] sm:$0xf]
    %v340 = vld [vmem:[#allocation8 + $0x3d8] sm:$0xf]
    %v341 = vld [vmem:[#allocation8 + $0x3dc] sm:$0xf]
    %v342 = vld [vmem:[#allocation8 + $0x3e0] sm:$0xf]
    %v343 = vld [vmem:[#allocation8 + $0x3e4] sm:$0xf]
    %v344 = vld [vmem:[#allocation8 + $0x3e8] sm:$0xf]
    %v345 = vld [vmem:[#allocation8 + $0x3ec] sm:$0xf]
    %v346 = vld [vmem:[#allocation8 + $0x3f0] sm:$0xf]
    %v347 = vld [vmem:[#allocation8 + $0x3f4] sm:$0xf]
    %v348 = vld [vmem:[#allocation8 + $0x3f8] sm:$0xf]
    %v349 = vld [vmem:[#allocation8 + $0x3fc] sm:$0xf]
    %v350 = vld [vmem:[#allocation8 + $0x400] sm:$0xf]
    %v351 = vld [vmem:[#allocation8 + $0x404] sm:$0xf]
    %v352 = vld [vmem:[#allocation8 + $0x408] sm:$0xf]
    %v353 = vld [vmem:[#allocation8 + $0x40c] sm:$0xf]
    %v354 = vld [vmem:[#allocation8 + $0x410] sm:$0xf]
    %v355 = vld [vmem:[#allocation8 + $0x414] sm:$0xf]
    %v356 = vld [vmem:[#allocation8 + $0x418] sm:$0xf]
    %v357 = vld [vmem:[#allocation8 + $0x41c] sm:$0xf]
    %v358 = vld [vmem:[#allocation8 + $0x420] sm:$0xf]
    %v359 = vld [vmem:[#allocation8 + $0x424] sm:$0xf]
    %v360 = vld [vmem:[#allocation8 + $0x428] sm:$0xf]
    %v361 = vld [vmem:[#allocation8 + $0x42c] sm:$0xf]
    %v362 = vld [vmem:[#allocation8 + $0x430] sm:$0xf]
    %v363 = vld [vmem:[#allocation8 + $0x434] sm:$0xf]
    %v364 = vld [vmem:[#allocation8 + $0x438] sm:$0xf]
    %v365 = vld [vmem:[#allocation8 + $0x43c] sm:$0xf]
    %v366 = vld [vmem:[#allocation8 + $0x440] sm:$0xf]
    %v367 = vld [vmem:[#allocation8 + $0x444] sm:$0xf]
    %v368 = vld [vmem:[#allocation8 + $0x448] sm:$0xf]
    %v369 = vld [vmem:[#allocation8 + $0x44c] sm:$0xf]
    %v370 = vld [vmem:[#allocation8 + $0x450] sm:$0xf]
    %v371 = vld [vmem:[#allocation8 + $0x454] sm:$0xf]
    %v372 = vld [vmem:[#allocation8 + $0x458] sm:$0xf]
    %v373 = vld [vmem:[#allocation8 + $0x45c] sm:$0xf]
    %v374 = vld [vmem:[#allocation8 + $0x460] sm:$0xf]
    %v375 = vld [vmem:[#allocation8 + $0x464] sm:$0xf]
    %v376 = vld [vmem:[#allocation8 + $0x468] sm:$0xf]
    %v377 = vld [vmem:[#allocation8 + $0x46c] sm:$0xf]
    %v378 = vld [vmem:[#allocation8 + $0x470] sm:$0xf]
    %v379 = vld [vmem:[#allocation8 + $0x474] sm:$0xf]
    %v380 = vld [vmem:[#allocation8 + $0x478] sm:$0xf]
    %v381 = vld [vmem:[#allocation8 + $0x47c] sm:$0xf]
    %v382 = vld [vmem:[#allocation8 + $0x480] sm:$0xf]
    %v383 = vld [vmem:[#allocation8 + $0x484] sm:$0xf]
    %v384 = vld [vmem:[#allocation8 + $0x488] sm:$0xf]
    %v385 = vld [vmem:[#allocation8 + $0x48c] sm:$0xf]
    %v386 = vld [vmem:[#allocation8 + $0x490] sm:$0xf]
    %v387 = vld [vmem:[#allocation8 + $0x494] sm:$0xf]
    %v388 = vld [vmem:[#allocation8 + $0x498] sm:$0xf]
    %v389 = vld [vmem:[#allocation8 + $0x49c] sm:$0xf]
    %v390 = vld [vmem:[#allocation8 + $0x4a0] sm:$0xf]
    %v391 = vld [vmem:[#allocation8 + $0x4a4] sm:$0xf]
    %v392 = vld [vmem:[#allocation8 + $0x4a8] sm:$0xf]
    %v393 = vld [vmem:[#allocation8 + $0x4ac] sm:$0xf]
    %v394 = vld [vmem:[#allocation8 + $0x4b0] sm:$0xf]
    %v395 = vld [vmem:[#allocation8 + $0x4b4] sm:$0xf]
    %v396 = vld [vmem:[#allocation8 + $0x4b8] sm:$0xf]
    %v397 = vld [vmem:[#allocation8 + $0x4bc] sm:$0xf]
    %v398 = vld [vmem:[#allocation8 + $0x4c0] sm:$0xf]
    %v399 = vld [vmem:[#allocation8 + $0x4c4] sm:$0xf]
    %v400 = vld [vmem:[#allocation8 + $0x4c8] sm:$0xf]
    %v401 = vld [vmem:[#allocation8 + $0x4cc] sm:$0xf]
    %v402 = vld [vmem:[#allocation8 + $0x4d0] sm:$0xf]
    %v403 = vld [vmem:[#allocation8 + $0x4d4] sm:$0xf]
    %v404 = vld [vmem:[#allocation8 + $0x4d8] sm:$0xf]
    %v405 = vld [vmem:[#allocation8 + $0x4dc] sm:$0xf]
    %v406 = vld [vmem:[#allocation8 + $0x4e0] sm:$0xf]
    %v407 = vld [vmem:[#allocation8 + $0x4e4] sm:$0xf]
    %v408 = vld [vmem:[#allocation8 + $0x4e8] sm:$0xf]
    %v409 = vld [vmem:[#allocation8 + $0x4ec] sm:$0xf]
    %v410 = vld [vmem:[#allocation8 + $0x4f0] sm:$0xf]
    %v411 = vld [vmem:[#allocation8 + $0x4f4] sm:$0xf]
    %v412 = vld [vmem:[#allocation8 + $0x4f8] sm:$0xf]
    %v413 = vld [vmem:[#allocation8 + $0x4fc] sm:$0xf]
    %v414 = vld [vmem:[#allocation8 + $0x500] sm:$0xf]
    %v415 = vld [vmem:[#allocation8 + $0x504] sm:$0xf]
    %v416 = vld [vmem:[#allocation8 + $0x508] sm:$0xf]
    %v417 = vld [vmem:[#allocation8 + $0x50c] sm:$0xf]
    %v418 = vld [vmem:[#allocation8 + $0x510] sm:$0xf]
    %v419 = vld [vmem:[#allocation8 + $0x514] sm:$0xf]
    %v420 = vld [vmem:[#allocation8 + $0x518] sm:$0xf]
    %v421 = vld [vmem:[#allocation8 + $0x51c] sm:$0xf]
    %v422 = vld [vmem:[#allocation8 + $0x520] sm:$0xf]
    %v423 = vld [vmem:[#allocation8 + $0x524] sm:$0xf]
    %v424 = vld [vmem:[#allocation8 + $0x528] sm:$0xf]
    %v425 = vld [vmem:[#allocation8 + $0x52c] sm:$0xf]
    %v426 = vld [vmem:[#allocation8 + $0x530] sm:$0xf]
    %v427 = vld [vmem:[#allocation8 + $0x534] sm:$0xf]
    %v428 = vld [vmem:[#allocation8 + $0x538] sm:$0xf]
    %v429 = vld [vmem:[#allocation8 + $0x53c] sm:$0xf]
    %v430 = vld [vmem:[#allocation8 + $0x540] sm:$0xf]
    %v431 = vld [vmem:[#allocation8 + $0x544] sm:$0xf]
    %v432 = vld [vmem:[#allocation8 + $0x548] sm:$0xf]
    %v433 = vld [vmem:[#allocation8 + $0x54c] sm:$0xf]
    %v434 = vld [vmem:[#allocation8 + $0x550] sm:$0xf]
    %v435 = vld [vmem:[#allocation8 + $0x554] sm:$0xf]
    %v436 = vld [vmem:[#allocation8 + $0x558] sm:$0xf]
    %v437 = vld [vmem:[#allocation8 + $0x55c] sm:$0xf]
    %v438 = vld [vmem:[#allocation8 + $0x560] sm:$0xf]
    %v439 = vld [vmem:[#allocation8 + $0x564] sm:$0xf]
    %v440 = vld [vmem:[#allocation8 + $0x568] sm:$0xf]
    %v441 = vld [vmem:[#allocation8 + $0x56c] sm:$0xf]
    %v442 = vld [vmem:[#allocation8 + $0x570] sm:$0xf]
    %v443 = vld [vmem:[#allocation8 + $0x574] sm:$0xf]
    %v444 = vld [vmem:[#allocation8 + $0x578] sm:$0xf]
    %v445 = vld [vmem:[#allocation8 + $0x57c] sm:$0xf]
    %v446 = vld [vmem:[#allocation8 + $0x580] sm:$0xf]
    %v447 = vld [vmem:[#allocation8 + $0x584] sm:$0xf]
    %v448 = vld [vmem:[#allocation8 + $0x588] sm:$0xf]
    %v449 = vld [vmem:[#allocation8 + $0x58c] sm:$0xf]
    %v450 = vld [vmem:[#allocation8 + $0x590] sm:$0xf]
    %v451 = vld [vmem:[#allocation8 + $0x594] sm:$0xf]
    %v452 = vld [vmem:[#allocation8 + $0x598] sm:$0xf]
    %v453 = vld [vmem:[#allocation8 + $0x59c] sm:$0xf]
    %v454 = vld [vmem:[#allocation8 + $0x5a0] sm:$0xf]
    %v455 = vld [vmem:[#allocation8 + $0x5a4] sm:$0xf]
    %v456 = vld [vmem:[#allocation8 + $0x5a8] sm:$0xf]
    %v457 = vld [vmem:[#allocation8 + $0x5ac] sm:$0xf]
    %v458 = vld [vmem:[#allocation8 + $0x5b0] sm:$0xf]
    %v459 = vld [vmem:[#allocation8 + $0x5b4] sm:$0xf]
    %v460 = vld [vmem:[#allocation8 + $0x5b8] sm:$0xf]
    %v461 = vld [vmem:[#allocation8 + $0x5bc] sm:$0xf]
    %v462 = vld [vmem:[#allocation8 + $0x5c0] sm:$0xf]
    %v463 = vld [vmem:[#allocation8 + $0x5c4] sm:$0xf]
    %v464 = vld [vmem:[#allocation8 + $0x5c8] sm:$0xf]
    %v465 = vld [vmem:[#allocation8 + $0x5cc] sm:$0xf]
    %v466 = vld [vmem:[#allocation8 + $0x5d0] sm:$0xf]
    %v467 = vld [vmem:[#allocation8 + $0x5d4] sm:$0xf]
    %v468 = vld [vmem:[#allocation8 + $0x5d8] sm:$0xf]
    %v469 = vld [vmem:[#allocation8 + $0x5dc] sm:$0xf]
    %v470 = vld [vmem:[#allocation8 + $0x5e0] sm:$0xf]
    %v471 = vld [vmem:[#allocation8 + $0x5e4] sm:$0xf]
    %v472 = vld [vmem:[#allocation8 + $0x5e8] sm:$0xf]
    %v473 = vld [vmem:[#allocation8 + $0x5ec] sm:$0xf]
    %v474 = vld [vmem:[#allocation8 + $0x5f0] sm:$0xf]
    %v475 = vld [vmem:[#allocation8 + $0x5f4] sm:$0xf]
    %v476 = vld [vmem:[#allocation8 + $0x5f8] sm:$0xf]
    %v477 = vld [vmem:[#allocation8 + $0x5fc] sm:$0xf]
    %v478 = vld [vmem:[#allocation8 + $0x600] sm:$0xf]
    %v479 = vld [vmem:[#allocation8 + $0x604] sm:$0xf]
    %v480 = vld [vmem:[#allocation8 + $0x608] sm:$0xf]
    %v481 = vld [vmem:[#allocation8 + $0x60c] sm:$0xf]
    %v482 = vld [vmem:[#allocation8 + $0x610] sm:$0xf]
    %v483 = vld [vmem:[#allocation8 + $0x614] sm:$0xf]
    %v484 = vld [vmem:[#allocation8 + $0x618] sm:$0xf]
    %v485 = vld [vmem:[#allocation8 + $0x61c] sm:$0xf]
    %v486 = vld [vmem:[#allocation8 + $0x620] sm:$0xf]
    %v487 = vld [vmem:[#allocation8 + $0x624] sm:$0xf]
    %v488 = vld [vmem:[#allocation8 + $0x628] sm:$0xf]
    %v489 = vld [vmem:[#allocation8 + $0x62c] sm:$0xf]
    %v490 = vld [vmem:[#allocation8 + $0x630] sm:$0xf]
    %v491 = vld [vmem:[#allocation8 + $0x634] sm:$0xf]
    %v492 = vld [vmem:[#allocation8 + $0x638] sm:$0xf]
    %v493 = vld [vmem:[#allocation8 + $0x63c] sm:$0xf]
    %v494 = vld [vmem:[%s4] sm:$0x1]
    %v495 = vld [vmem:[#allocation10] sm:$0xff]
    %v496 = vld [vmem:[#allocation10 + $0x8] sm:$0xff]
    %v497 = vld [vmem:[#allocation10 + $0x10] sm:$0xff]
    %v498 = vld [vmem:[#allocation10 + $0x18] sm:$0xff]
    %v499 = vld [vmem:[#allocation10 + $0x20] sm:$0xff]
    %v500 = vld [vmem:[#allocation10 + $0x28] sm:$0xff]
    %v501 = vld [vmem:[#allocation10 + $0x30] sm:$0xff]
    %v502 = vld [vmem:[#allocation10 + $0x38] sm:$0xff]
    %v503 = vld [vmem:[#allocation10 + $0x40] sm:$0xff]
    %v504 = vld [vmem:[#allocation10 + $0x48] sm:$0xff]
    %v505 = vld [vmem:[#allocation10 + $0x50] sm:$0xff]
    %v506 = vld [vmem:[#allocation10 + $0x58] sm:$0xff]
    %v507 = vld [vmem:[#allocation10 + $0x60] sm:$0xff]
    %v508 = vld [vmem:[#allocation10 + $0x68] sm:$0xff]
    %v509 = vld [vmem:[#allocation10 + $0x70] sm:$0xff]
    %v510 = vld [vmem:[#allocation10 + $0x78] sm:$0xff]
    %v511 = vld [vmem:[%s6] sm:$0x1]
    %v512 = vld [vmem:[#allocation2] sm:$0xff]
    %v513 = vld [vmem:[#allocation2 + $0x8] sm:$0xff]
    %v514 = vld [vmem:[#allocation2 + $0x10] sm:$0xff]
    %v515 = vld [vmem:[#allocation2 + $0x18] sm:$0xff]
    %v516 = vld [vmem:[#allocation2 + $0x20] sm:$0xff]
    %v517 = vld [vmem:[#allocation2 + $0x28] sm:$0xff]
    %v518 = vld [vmem:[#allocation2 + $0x30] sm:$0x3]
    %v526 = vcombine.high %v512, %v512
    %v528 = vunpack.c.l.s4 1983009808
    %v529 = vunpack.c.0.s8 %v528
    %v530 = vlaneseq
    %v531 = vshrl.u32 %v530, 7
    %v532 = vsub.s32 %v529, %v531
    %v533 = vrot.slane %v512, %v532
    %v535 = vunpack.c.l.s4 1983009808
    %v536 = vunpack.c.0.s8 %v535
    %v537 = vlaneseq
    %v538 = vshrl.u32 %v537, 7
    %v539 = vsub.s32 %v536, %v538
    %v540 = vrot.slane %v526, %v539
    %v541 = vcombine.high %v533, %v533
    %v542 = vcombine.high %v540, %v540
    %v543 = vcombine.high %v513, %v513
    %v545 = vunpack.c.l.s4 1983009808
    %v546 = vunpack.c.0.s8 %v545
    %v547 = vlaneseq
    %v548 = vshrl.u32 %v547, 7
    %v549 = vsub.s32 %v546, %v548
    %v550 = vrot.slane %v513, %v549
    %v552 = vunpack.c.l.s4 1983009808
    %v553 = vunpack.c.0.s8 %v552
    %v554 = vlaneseq
    %v555 = vshrl.u32 %v554, 7
    %v556 = vsub.s32 %v553, %v555
    %v557 = vrot.slane %v543, %v556
    %v558 = vcombine.high %v550, %v550
    %v559 = vcombine.high %v557, %v557
    %v560 = vcombine.high %v514, %v514
    %v562 = vunpack.c.l.s4 1983009808
    %v563 = vunpack.c.0.s8 %v562
    %v564 = vlaneseq
    %v565 = vshrl.u32 %v564, 7
    %v566 = vsub.s32 %v563, %v565
    %v567 = vrot.slane %v514, %v566
    %v569 = vunpack.c.l.s4 1983009808
    %v570 = vunpack.c.0.s8 %v569
    %v571 = vlaneseq
    %v572 = vshrl.u32 %v571, 7
    %v573 = vsub.s32 %v570, %v572
    %v574 = vrot.slane %v560, %v573
    %v575 = vcombine.high %v567, %v567
    %v576 = vcombine.high %v574, %v574
    %v577 = vcombine.high %v515, %v515
    %v579 = vunpack.c.l.s4 1983009808
    %v580 = vunpack.c.0.s8 %v579
    %v581 = vlaneseq
    %v582 = vshrl.u32 %v581, 7
    %v583 = vsub.s32 %v580, %v582
    %v584 = vrot.slane %v515, %v583
    %v586 = vunpack.c.l.s4 1983009808
    %v587 = vunpack.c.0.s8 %v586
    %v588 = vlaneseq
    %v589 = vshrl.u32 %v588, 7
    %v590 = vsub.s32 %v587, %v589
    %v591 = vrot.slane %v577, %v590
    %v592 = vcombine.high %v584, %v584
    %v593 = vcombine.high %v591, %v591
    %v594 = vcombine.high %v516, %v516
    %v596 = vunpack.c.l.s4 1983009808
    %v597 = vunpack.c.0.s8 %v596
    %v598 = vlaneseq
    %v599 = vshrl.u32 %v598, 7
    %v600 = vsub.s32 %v597, %v599
    %v601 = vrot.slane %v516, %v600
    %v603 = vunpack.c.l.s4 1983009808
    %v604 = vunpack.c.0.s8 %v603
    %v605 = vlaneseq
    %v606 = vshrl.u32 %v605, 7
    %v607 = vsub.s32 %v604, %v606
    %v608 = vrot.slane %v594, %v607
    %v609 = vcombine.high %v601, %v601
    %v610 = vcombine.high %v608, %v608
    %v611 = vcombine.high %v517, %v517
    %v613 = vunpack.c.l.s4 1983009808
    %v614 = vunpack.c.0.s8 %v613
    %v615 = vlaneseq
    %v616 = vshrl.u32 %v615, 7
    %v617 = vsub.s32 %v614, %v616
    %v618 = vrot.slane %v517, %v617
    %v620 = vunpack.c.l.s4 1983009808
    %v621 = vunpack.c.0.s8 %v620
    %v622 = vlaneseq
    %v623 = vshrl.u32 %v622, 7
    %v624 = vsub.s32 %v621, %v623
    %v625 = vrot.slane %v611, %v624
    %v626 = vcombine.high %v618, %v618
    %v627 = vcombine.high %v625, %v625
    %v629 = vunpack.c.l.s4 1983009808
    %v630 = vunpack.c.0.s8 %v629
    %v631 = vlaneseq
    %v632 = vshrl.u32 %v631, 7
    %v633 = vsub.s32 %v630, %v632
    %v634 = vrot.slane %v518, %v633
    %v660 = vpack.c.bf16 %v533, %v533
    %v661 = vpack.c.bf16 %v541, %v541
    %v662 = vpack.c.bf16 %v540, %v540
    %v663 = vpack.c.bf16 %v542, %v542
    %v664 = vpack.c.bf16 %v550, %v550
    %v665 = vpack.c.bf16 %v558, %v558
    %v666 = vpack.c.bf16 %v557, %v557
    %v667 = vpack.c.bf16 %v559, %v559
    %v668 = vpack.c.bf16 %v567, %v567
    %v669 = vpack.c.bf16 %v575, %v575
    %v670 = vpack.c.bf16 %v574, %v574
    %v671 = vpack.c.bf16 %v576, %v576
    %v672 = vpack.c.bf16 %v584, %v584
    %v673 = vpack.c.bf16 %v592, %v592
    %v674 = vpack.c.bf16 %v591, %v591
    %v675 = vpack.c.bf16 %v593, %v593
    %v676 = vpack.c.bf16 %v601, %v601
    %v677 = vpack.c.bf16 %v609, %v609
    %v678 = vpack.c.bf16 %v608, %v608
    %v679 = vpack.c.bf16 %v610, %v610
    %v680 = vpack.c.bf16 %v618, %v618
    %v681 = vpack.c.bf16 %v626, %v626
    %v682 = vpack.c.bf16 %v625, %v625
    %v683 = vpack.c.bf16 %v627, %v627
    %v684 = vpack.c.bf16 %v634, %v634
    %v686 = vlaneseq
    %v687 = vshrl.u32 %v686, 7
    %v688 = vsub.s32 0, %v687
    %v689 = vrot.slane %v494, %v688
    %v1091 = vunpack.c.l.b16 %v94
    %v1092 = vunpack.c.l.b16 %v95
    %v1093 = vunpack.c.l.b16 %v96
    %v1094 = vunpack.c.l.b16 %v97
    %v1095 = vunpack.c.l.b16 %v98
    %v1096 = vunpack.c.l.b16 %v99
    %v1097 = vunpack.c.l.b16 %v100
    %v1098 = vunpack.c.l.b16 %v101
    %v1099 = vunpack.c.l.b16 %v102
    %v1100 = vunpack.c.l.b16 %v103
    %v1101 = vunpack.c.l.b16 %v104
    %v1102 = vunpack.c.l.b16 %v105
    %v1103 = vunpack.c.l.b16 %v106
    %v1104 = vunpack.c.l.b16 %v107
    %v1105 = vunpack.c.l.b16 %v108
    %v1106 = vunpack.c.l.b16 %v109
    %v1107 = vunpack.c.l.b16 %v110
    %v1108 = vunpack.c.l.b16 %v111
    %v1109 = vunpack.c.l.b16 %v112
    %v1110 = vunpack.c.l.b16 %v113
    %v1111 = vunpack.c.l.b16 %v114
    %v1112 = vunpack.c.l.b16 %v115
    %v1113 = vunpack.c.l.b16 %v116
    %v1114 = vunpack.c.l.b16 %v117
    %v1115 = vunpack.c.l.b16 %v118
    %v1116 = vunpack.c.l.b16 %v119
    %v1117 = vunpack.c.l.b16 %v120
    %v1118 = vunpack.c.l.b16 %v121
    %v1119 = vunpack.c.l.b16 %v122
    %v1120 = vunpack.c.l.b16 %v123
    %v1121 = vunpack.c.l.b16 %v124
    %v1122 = vunpack.c.l.b16 %v125
    %v1123 = vunpack.c.l.b16 %v126
    %v1124 = vunpack.c.l.b16 %v127
    %v1125 = vunpack.c.l.b16 %v128
    %v1126 = vunpack.c.l.b16 %v129
    %v1127 = vunpack.c.l.b16 %v130
    %v1128 = vunpack.c.l.b16 %v131
    %v1129 = vunpack.c.l.b16 %v132
    %v1130 = vunpack.c.l.b16 %v133
    %v1131 = vunpack.c.l.b16 %v134
    %v1132 = vunpack.c.l.b16 %v135
    %v1133 = vunpack.c.l.b16 %v136
    %v1134 = vunpack.c.l.b16 %v137
    %v1135 = vunpack.c.l.b16 %v138
    %v1136 = vunpack.c.l.b16 %v139
    %v1137 = vunpack.c.l.b16 %v140
    %v1138 = vunpack.c.l.b16 %v141
    %v1139 = vunpack.c.l.b16 %v142
    %v1140 = vunpack.c.l.b16 %v143
    %v1141 = vunpack.c.l.b16 %v144
    %v1142 = vunpack.c.l.b16 %v145
    %v1143 = vunpack.c.l.b16 %v146
    %v1144 = vunpack.c.l.b16 %v147
    %v1145 = vunpack.c.l.b16 %v148
    %v1146 = vunpack.c.l.b16 %v149
    %v1147 = vunpack.c.l.b16 %v150
    %v1148 = vunpack.c.l.b16 %v151
    %v1149 = vunpack.c.l.b16 %v152
    %v1150 = vunpack.c.l.b16 %v153
    %v1151 = vunpack.c.l.b16 %v154
    %v1152 = vunpack.c.l.b16 %v155
    %v1153 = vunpack.c.l.b16 %v156
    %v1154 = vunpack.c.l.b16 %v157
    %v1155 = vunpack.c.l.b16 %v158
    %v1156 = vunpack.c.l.b16 %v159
    %v1157 = vunpack.c.l.b16 %v160
    %v1158 = vunpack.c.l.b16 %v161
    %v1159 = vunpack.c.l.b16 %v162
    %v1160 = vunpack.c.l.b16 %v163
    %v1161 = vunpack.c.l.b16 %v164
    %v1162 = vunpack.c.l.b16 %v165
    %v1163 = vunpack.c.l.b16 %v166
    %v1164 = vunpack.c.l.b16 %v167
    %v1165 = vunpack.c.l.b16 %v168
    %v1166 = vunpack.c.l.b16 %v169
    %v1167 = vunpack.c.l.b16 %v170
    %v1168 = vunpack.c.l.b16 %v171
    %v1169 = vunpack.c.l.b16 %v172
    %v1170 = vunpack.c.l.b16 %v173
    %v1171 = vunpack.c.l.b16 %v174
    %v1172 = vunpack.c.l.b16 %v175
    %v1173 = vunpack.c.l.b16 %v176
    %v1174 = vunpack.c.l.b16 %v177
    %v1175 = vunpack.c.l.b16 %v178
    %v1176 = vunpack.c.l.b16 %v179
    %v1177 = vunpack.c.l.b16 %v180
    %v1178 = vunpack.c.l.b16 %v181
    %v1179 = vunpack.c.l.b16 %v182
    %v1180 = vunpack.c.l.b16 %v183
    %v1181 = vunpack.c.l.b16 %v184
    %v1182 = vunpack.c.l.b16 %v185
    %v1183 = vunpack.c.l.b16 %v186
    %v1184 = vunpack.c.l.b16 %v187
    %v1185 = vunpack.c.l.b16 %v188
    %v1186 = vunpack.c.l.b16 %v189
    %v1187 = vunpack.c.l.b16 %v190
    %v1188 = vunpack.c.l.b16 %v191
    %v1189 = vunpack.c.l.b16 %v192
    %v1190 = vunpack.c.l.b16 %v193
    %v1191 = vunpack.c.l.b16 %v194
    %v1192 = vunpack.c.l.b16 %v195
    %v1193 = vunpack.c.l.b16 %v196
    %v1194 = vunpack.c.l.b16 %v197
    %v1195 = vunpack.c.l.b16 %v198
    %v1196 = vunpack.c.l.b16 %v199
    %v1197 = vunpack.c.l.b16 %v200
    %v1198 = vunpack.c.l.b16 %v201
    %v1199 = vunpack.c.l.b16 %v202
    %v1200 = vunpack.c.l.b16 %v203
    %v1201 = vunpack.c.l.b16 %v204
    %v1202 = vunpack.c.l.b16 %v205
    %v1203 = vunpack.c.l.b16 %v206
    %v1204 = vunpack.c.l.b16 %v207
    %v1205 = vunpack.c.l.b16 %v208
    %v1206 = vunpack.c.l.b16 %v209
    %v1207 = vunpack.c.l.b16 %v210
    %v1208 = vunpack.c.l.b16 %v211
    %v1209 = vunpack.c.l.b16 %v212
    %v1210 = vunpack.c.l.b16 %v213
    %v1211 = vunpack.c.l.b16 %v214
    %v1212 = vunpack.c.l.b16 %v215
    %v1213 = vunpack.c.l.b16 %v216
    %v1214 = vunpack.c.l.b16 %v217
    %v1215 = vunpack.c.l.b16 %v218
    %v1216 = vunpack.c.l.b16 %v219
    %v1217 = vunpack.c.l.b16 %v220
    %v1218 = vunpack.c.l.b16 %v221
    %v1219 = vunpack.c.l.b16 %v222
    %v1220 = vunpack.c.l.b16 %v223
    %v1221 = vunpack.c.l.b16 %v224
    %v1222 = vunpack.c.l.b16 %v225
    %v1223 = vunpack.c.l.b16 %v226
    %v1224 = vunpack.c.l.b16 %v227
    %v1225 = vunpack.c.l.b16 %v228
    %v1226 = vunpack.c.l.b16 %v229
    %v1227 = vunpack.c.l.b16 %v230
    %v1228 = vunpack.c.l.b16 %v231
    %v1229 = vunpack.c.l.b16 %v232
    %v1230 = vunpack.c.l.b16 %v233
    %v1231 = vunpack.c.l.b16 %v234
    %v1232 = vunpack.c.l.b16 %v235
    %v1233 = vunpack.c.l.b16 %v236
    %v1234 = vunpack.c.l.b16 %v237
    %v1235 = vunpack.c.l.b16 %v238
    %v1236 = vunpack.c.l.b16 %v239
    %v1237 = vunpack.c.l.b16 %v240
    %v1238 = vunpack.c.l.b16 %v241
    %v1239 = vunpack.c.l.b16 %v242
    %v1240 = vunpack.c.l.b16 %v243
    %v1241 = vunpack.c.l.b16 %v244
    %v1242 = vunpack.c.l.b16 %v245
    %v1243 = vunpack.c.l.b16 %v246
    %v1244 = vunpack.c.l.b16 %v247
    %v1245 = vunpack.c.l.b16 %v248
    %v1246 = vunpack.c.l.b16 %v249
    %v1247 = vunpack.c.l.b16 %v250
    %v1248 = vunpack.c.l.b16 %v251
    %v1249 = vunpack.c.l.b16 %v252
    %v1250 = vunpack.c.l.b16 %v253
    %v1251 = vunpack.c.l.b16 %v254
    %v1252 = vunpack.c.l.b16 %v255
    %v1253 = vunpack.c.l.b16 %v256
    %v1254 = vunpack.c.l.b16 %v257
    %v1255 = vunpack.c.l.b16 %v258
    %v1256 = vunpack.c.l.b16 %v259
    %v1257 = vunpack.c.l.b16 %v260
    %v1258 = vunpack.c.l.b16 %v261
    %v1259 = vunpack.c.l.b16 %v262
    %v1260 = vunpack.c.l.b16 %v263
    %v1261 = vunpack.c.l.b16 %v264
    %v1262 = vunpack.c.l.b16 %v265
    %v1263 = vunpack.c.l.b16 %v266
    %v1264 = vunpack.c.l.b16 %v267
    %v1265 = vunpack.c.l.b16 %v268
    %v1266 = vunpack.c.l.b16 %v269
    %v1267 = vunpack.c.l.b16 %v270
    %v1268 = vunpack.c.l.b16 %v271
    %v1269 = vunpack.c.l.b16 %v272
    %v1270 = vunpack.c.l.b16 %v273
    %v1271 = vunpack.c.l.b16 %v274
    %v1272 = vunpack.c.l.b16 %v275
    %v1273 = vunpack.c.l.b16 %v276
    %v1274 = vunpack.c.l.b16 %v277
    %v1275 = vunpack.c.l.b16 %v278
    %v1276 = vunpack.c.l.b16 %v279
    %v1277 = vunpack.c.l.b16 %v280
    %v1278 = vunpack.c.l.b16 %v281
    %v1279 = vunpack.c.l.b16 %v282
    %v1280 = vunpack.c.l.b16 %v283
    %v1281 = vunpack.c.l.b16 %v284
    %v1282 = vunpack.c.l.b16 %v285
    %v1283 = vunpack.c.l.b16 %v286
    %v1284 = vunpack.c.l.b16 %v287
    %v1285 = vunpack.c.l.b16 %v288
    %v1286 = vunpack.c.l.b16 %v289
    %v1287 = vunpack.c.l.b16 %v290
    %v1288 = vunpack.c.l.b16 %v291
    %v1289 = vunpack.c.l.b16 %v292
    %v1290 = vunpack.c.l.b16 %v293
    %v1291 = vunpack.c.l.b16 %v294
    %v1292 = vunpack.c.l.b16 %v295
    %v1293 = vunpack.c.l.b16 %v296
    %v1294 = vunpack.c.l.b16 %v297
    %v1295 = vunpack.c.l.b16 %v298
    %v1296 = vunpack.c.l.b16 %v299
    %v1297 = vunpack.c.l.b16 %v300
    %v1298 = vunpack.c.l.b16 %v301
    %v1299 = vunpack.c.l.b16 %v302
    %v1300 = vunpack.c.l.b16 %v303
    %v1301 = vunpack.c.l.b16 %v304
    %v1302 = vunpack.c.l.b16 %v305
    %v1303 = vunpack.c.l.b16 %v306
    %v1304 = vunpack.c.l.b16 %v307
    %v1305 = vunpack.c.l.b16 %v308
    %v1306 = vunpack.c.l.b16 %v309
    %v1307 = vunpack.c.l.b16 %v310
    %v1308 = vunpack.c.l.b16 %v311
    %v1309 = vunpack.c.l.b16 %v312
    %v1310 = vunpack.c.l.b16 %v313
    %v1311 = vunpack.c.l.b16 %v314
    %v1312 = vunpack.c.l.b16 %v315
    %v1313 = vunpack.c.l.b16 %v316
    %v1314 = vunpack.c.l.b16 %v317
    %v1315 = vunpack.c.l.b16 %v318
    %v1316 = vunpack.c.l.b16 %v319
    %v1317 = vunpack.c.l.b16 %v320
    %v1318 = vunpack.c.l.b16 %v321
    %v1319 = vunpack.c.l.b16 %v322
    %v1320 = vunpack.c.l.b16 %v323
    %v1321 = vunpack.c.l.b16 %v324
    %v1322 = vunpack.c.l.b16 %v325
    %v1323 = vunpack.c.l.b16 %v326
    %v1324 = vunpack.c.l.b16 %v327
    %v1325 = vunpack.c.l.b16 %v328
    %v1326 = vunpack.c.l.b16 %v329
    %v1327 = vunpack.c.l.b16 %v330
    %v1328 = vunpack.c.l.b16 %v331
    %v1329 = vunpack.c.l.b16 %v332
    %v1330 = vunpack.c.l.b16 %v333
    %v1331 = vunpack.c.l.b16 %v334
    %v1332 = vunpack.c.l.b16 %v335
    %v1333 = vunpack.c.l.b16 %v336
    %v1334 = vunpack.c.l.b16 %v337
    %v1335 = vunpack.c.l.b16 %v338
    %v1336 = vunpack.c.l.b16 %v339
    %v1337 = vunpack.c.l.b16 %v340
    %v1338 = vunpack.c.l.b16 %v341
    %v1339 = vunpack.c.l.b16 %v342
    %v1340 = vunpack.c.l.b16 %v343
    %v1341 = vunpack.c.l.b16 %v344
    %v1342 = vunpack.c.l.b16 %v345
    %v1343 = vunpack.c.l.b16 %v346
    %v1344 = vunpack.c.l.b16 %v347
    %v1345 = vunpack.c.l.b16 %v348
    %v1346 = vunpack.c.l.b16 %v349
    %v1347 = vunpack.c.l.b16 %v350
    %v1348 = vunpack.c.l.b16 %v351
    %v1349 = vunpack.c.l.b16 %v352
    %v1350 = vunpack.c.l.b16 %v353
    %v1351 = vunpack.c.l.b16 %v354
    %v1352 = vunpack.c.l.b16 %v355
    %v1353 = vunpack.c.l.b16 %v356
    %v1354 = vunpack.c.l.b16 %v357
    %v1355 = vunpack.c.l.b16 %v358
    %v1356 = vunpack.c.l.b16 %v359
    %v1357 = vunpack.c.l.b16 %v360
    %v1358 = vunpack.c.l.b16 %v361
    %v1359 = vunpack.c.l.b16 %v362
    %v1360 = vunpack.c.l.b16 %v363
    %v1361 = vunpack.c.l.b16 %v364
    %v1362 = vunpack.c.l.b16 %v365
    %v1363 = vunpack.c.l.b16 %v366
    %v1364 = vunpack.c.l.b16 %v367
    %v1365 = vunpack.c.l.b16 %v368
    %v1366 = vunpack.c.l.b16 %v369
    %v1367 = vunpack.c.l.b16 %v370
    %v1368 = vunpack.c.l.b16 %v371
    %v1369 = vunpack.c.l.b16 %v372
    %v1370 = vunpack.c.l.b16 %v373
    %v1371 = vunpack.c.l.b16 %v374
    %v1372 = vunpack.c.l.b16 %v375
    %v1373 = vunpack.c.l.b16 %v376
    %v1374 = vunpack.c.l.b16 %v377
    %v1375 = vunpack.c.l.b16 %v378
    %v1376 = vunpack.c.l.b16 %v379
    %v1377 = vunpack.c.l.b16 %v380
    %v1378 = vunpack.c.l.b16 %v381
    %v1379 = vunpack.c.l.b16 %v382
    %v1380 = vunpack.c.l.b16 %v383
    %v1381 = vunpack.c.l.b16 %v384
    %v1382 = vunpack.c.l.b16 %v385
    %v1383 = vunpack.c.l.b16 %v386
    %v1384 = vunpack.c.l.b16 %v387
    %v1385 = vunpack.c.l.b16 %v388
    %v1386 = vunpack.c.l.b16 %v389
    %v1387 = vunpack.c.l.b16 %v390
    %v1388 = vunpack.c.l.b16 %v391
    %v1389 = vunpack.c.l.b16 %v392
    %v1390 = vunpack.c.l.b16 %v393
    %v1391 = vunpack.c.l.b16 %v394
    %v1392 = vunpack.c.l.b16 %v395
    %v1393 = vunpack.c.l.b16 %v396
    %v1394 = vunpack.c.l.b16 %v397
    %v1395 = vunpack.c.l.b16 %v398
    %v1396 = vunpack.c.l.b16 %v399
    %v1397 = vunpack.c.l.b16 %v400
    %v1398 = vunpack.c.l.b16 %v401
    %v1399 = vunpack.c.l.b16 %v402
    %v1400 = vunpack.c.l.b16 %v403
    %v1401 = vunpack.c.l.b16 %v404
    %v1402 = vunpack.c.l.b16 %v405
    %v1403 = vunpack.c.l.b16 %v406
    %v1404 = vunpack.c.l.b16 %v407
    %v1405 = vunpack.c.l.b16 %v408
    %v1406 = vunpack.c.l.b16 %v409
    %v1407 = vunpack.c.l.b16 %v410
    %v1408 = vunpack.c.l.b16 %v411
    %v1409 = vunpack.c.l.b16 %v412
    %v1410 = vunpack.c.l.b16 %v413
    %v1411 = vunpack.c.l.b16 %v414
    %v1412 = vunpack.c.l.b16 %v415
    %v1413 = vunpack.c.l.b16 %v416
    %v1414 = vunpack.c.l.b16 %v417
    %v1415 = vunpack.c.l.b16 %v418
    %v1416 = vunpack.c.l.b16 %v419
    %v1417 = vunpack.c.l.b16 %v420
    %v1418 = vunpack.c.l.b16 %v421
    %v1419 = vunpack.c.l.b16 %v422
    %v1420 = vunpack.c.l.b16 %v423
    %v1421 = vunpack.c.l.b16 %v424
    %v1422 = vunpack.c.l.b16 %v425
    %v1423 = vunpack.c.l.b16 %v426
    %v1424 = vunpack.c.l.b16 %v427
    %v1425 = vunpack.c.l.b16 %v428
    %v1426 = vunpack.c.l.b16 %v429
    %v1427 = vunpack.c.l.b16 %v430
    %v1428 = vunpack.c.l.b16 %v431
    %v1429 = vunpack.c.l.b16 %v432
    %v1430 = vunpack.c.l.b16 %v433
    %v1431 = vunpack.c.l.b16 %v434
    %v1432 = vunpack.c.l.b16 %v435
    %v1433 = vunpack.c.l.b16 %v436
    %v1434 = vunpack.c.l.b16 %v437
    %v1435 = vunpack.c.l.b16 %v438
    %v1436 = vunpack.c.l.b16 %v439
    %v1437 = vunpack.c.l.b16 %v440
    %v1438 = vunpack.c.l.b16 %v441
    %v1439 = vunpack.c.l.b16 %v442
    %v1440 = vunpack.c.l.b16 %v443
    %v1441 = vunpack.c.l.b16 %v444
    %v1442 = vunpack.c.l.b16 %v445
    %v1443 = vunpack.c.l.b16 %v446
    %v1444 = vunpack.c.l.b16 %v447
    %v1445 = vunpack.c.l.b16 %v448
    %v1446 = vunpack.c.l.b16 %v449
    %v1447 = vunpack.c.l.b16 %v450
    %v1448 = vunpack.c.l.b16 %v451
    %v1449 = vunpack.c.l.b16 %v452
    %v1450 = vunpack.c.l.b16 %v453
    %v1451 = vunpack.c.l.b16 %v454
    %v1452 = vunpack.c.l.b16 %v455
    %v1453 = vunpack.c.l.b16 %v456
    %v1454 = vunpack.c.l.b16 %v457
    %v1455 = vunpack.c.l.b16 %v458
    %v1456 = vunpack.c.l.b16 %v459
    %v1457 = vunpack.c.l.b16 %v460
    %v1458 = vunpack.c.l.b16 %v461
    %v1459 = vunpack.c.l.b16 %v462
    %v1460 = vunpack.c.l.b16 %v463
    %v1461 = vunpack.c.l.b16 %v464
    %v1462 = vunpack.c.l.b16 %v465
    %v1463 = vunpack.c.l.b16 %v466
    %v1464 = vunpack.c.l.b16 %v467
    %v1465 = vunpack.c.l.b16 %v468
    %v1466 = vunpack.c.l.b16 %v469
    %v1467 = vunpack.c.l.b16 %v470
    %v1468 = vunpack.c.l.b16 %v471
    %v1469 = vunpack.c.l.b16 %v472
    %v1470 = vunpack.c.l.b16 %v473
    %v1471 = vunpack.c.l.b16 %v474
    %v1472 = vunpack.c.l.b16 %v475
    %v1473 = vunpack.c.l.b16 %v476
    %v1474 = vunpack.c.l.b16 %v477
    %v1475 = vunpack.c.l.b16 %v478
    %v1476 = vunpack.c.l.b16 %v479
    %v1477 = vunpack.c.l.b16 %v480
    %v1478 = vunpack.c.l.b16 %v481
    %v1479 = vunpack.c.l.b16 %v482
    %v1480 = vunpack.c.l.b16 %v483
    %v1481 = vunpack.c.l.b16 %v484
    %v1482 = vunpack.c.l.b16 %v485
    %v1483 = vunpack.c.l.b16 %v486
    %v1484 = vunpack.c.l.b16 %v487
    %v1485 = vunpack.c.l.b16 %v488
    %v1486 = vunpack.c.l.b16 %v489
    %v1487 = vunpack.c.l.b16 %v490
    %v1488 = vunpack.c.l.b16 %v491
    %v1489 = vunpack.c.l.b16 %v492
    %v1490 = vunpack.c.l.b16 %v493
    %v1491 = vpack.c.b16 %v1092, %v1091
    %v1492 = vpack.c.b16 %v1094, %v1093
    %v1493 = vpack.c.b16 %v1096, %v1095
    %v1494 = vpack.c.b16 %v1098, %v1097
    %v1495 = vpack.c.b16 %v1100, %v1099
    %v1496 = vpack.c.b16 %v1102, %v1101
    %v1497 = vpack.c.b16 %v1104, %v1103
    %v1498 = vpack.c.b16 %v1106, %v1105
    %v1499 = vpack.c.b16 %v1108, %v1107
    %v1500 = vpack.c.b16 %v1110, %v1109
    %v1501 = vpack.c.b16 %v1112, %v1111
    %v1502 = vpack.c.b16 %v1114, %v1113
    %v1503 = vpack.c.b16 %v1116, %v1115
    %v1504 = vpack.c.b16 %v1118, %v1117
    %v1505 = vpack.c.b16 %v1120, %v1119
    %v1506 = vpack.c.b16 %v1122, %v1121
    %v1507 = vpack.c.b16 %v1124, %v1123
    %v1508 = vpack.c.b16 %v1126, %v1125
    %v1509 = vpack.c.b16 %v1128, %v1127
    %v1510 = vpack.c.b16 %v1130, %v1129
    %v1511 = vpack.c.b16 %v1132, %v1131
    %v1512 = vpack.c.b16 %v1134, %v1133
    %v1513 = vpack.c.b16 %v1136, %v1135
    %v1514 = vpack.c.b16 %v1138, %v1137
    %v1515 = vpack.c.b16 %v1140, %v1139
    %v1516 = vpack.c.b16 %v1142, %v1141
    %v1517 = vpack.c.b16 %v1144, %v1143
    %v1518 = vpack.c.b16 %v1146, %v1145
    %v1519 = vpack.c.b16 %v1148, %v1147
    %v1520 = vpack.c.b16 %v1150, %v1149
    %v1521 = vpack.c.b16 %v1152, %v1151
    %v1522 = vpack.c.b16 %v1154, %v1153
    %v1523 = vpack.c.b16 %v1156, %v1155
    %v1524 = vpack.c.b16 %v1158, %v1157
    %v1525 = vpack.c.b16 %v1160, %v1159
    %v1526 = vpack.c.b16 %v1162, %v1161
    %v1527 = vpack.c.b16 %v1164, %v1163
    %v1528 = vpack.c.b16 %v1166, %v1165
    %v1529 = vpack.c.b16 %v1168, %v1167
    %v1530 = vpack.c.b16 %v1170, %v1169
    %v1531 = vpack.c.b16 %v1172, %v1171
    %v1532 = vpack.c.b16 %v1174, %v1173
    %v1533 = vpack.c.b16 %v1176, %v1175
    %v1534 = vpack.c.b16 %v1178, %v1177
    %v1535 = vpack.c.b16 %v1180, %v1179
    %v1536 = vpack.c.b16 %v1182, %v1181
    %v1537 = vpack.c.b16 %v1184, %v1183
    %v1538 = vpack.c.b16 %v1186, %v1185
    %v1539 = vpack.c.b16 %v1188, %v1187
    %v1540 = vpack.c.b16 %v1190, %v1189
    %v1541 = vpack.c.b16 %v1192, %v1191
    %v1542 = vpack.c.b16 %v1194, %v1193
    %v1543 = vpack.c.b16 %v1196, %v1195
    %v1544 = vpack.c.b16 %v1198, %v1197
    %v1545 = vpack.c.b16 %v1200, %v1199
    %v1546 = vpack.c.b16 %v1202, %v1201
    %v1547 = vpack.c.b16 %v1204, %v1203
    %v1548 = vpack.c.b16 %v1206, %v1205
    %v1549 = vpack.c.b16 %v1208, %v1207
    %v1550 = vpack.c.b16 %v1210, %v1209
    %v1551 = vpack.c.b16 %v1212, %v1211
    %v1552 = vpack.c.b16 %v1214, %v1213
    %v1553 = vpack.c.b16 %v1216, %v1215
    %v1554 = vpack.c.b16 %v1218, %v1217
    %v1555 = vpack.c.b16 %v1220, %v1219
    %v1556 = vpack.c.b16 %v1222, %v1221
    %v1557 = vpack.c.b16 %v1224, %v1223
    %v1558 = vpack.c.b16 %v1226, %v1225
    %v1559 = vpack.c.b16 %v1228, %v1227
    %v1560 = vpack.c.b16 %v1230, %v1229
    %v1561 = vpack.c.b16 %v1232, %v1231
    %v1562 = vpack.c.b16 %v1234, %v1233
    %v1563 = vpack.c.b16 %v1236, %v1235
    %v1564 = vpack.c.b16 %v1238, %v1237
    %v1565 = vpack.c.b16 %v1240, %v1239
    %v1566 = vpack.c.b16 %v1242, %v1241
    %v1567 = vpack.c.b16 %v1244, %v1243
    %v1568 = vpack.c.b16 %v1246, %v1245
    %v1569 = vpack.c.b16 %v1248, %v1247
    %v1570 = vpack.c.b16 %v1250, %v1249
    %v1571 = vpack.c.b16 %v1252, %v1251
    %v1572 = vpack.c.b16 %v1254, %v1253
    %v1573 = vpack.c.b16 %v1256, %v1255
    %v1574 = vpack.c.b16 %v1258, %v1257
    %v1575 = vpack.c.b16 %v1260, %v1259
    %v1576 = vpack.c.b16 %v1262, %v1261
    %v1577 = vpack.c.b16 %v1264, %v1263
    %v1578 = vpack.c.b16 %v1266, %v1265
    %v1579 = vpack.c.b16 %v1268, %v1267
    %v1580 = vpack.c.b16 %v1270, %v1269
    %v1581 = vpack.c.b16 %v1272, %v1271
    %v1582 = vpack.c.b16 %v1274, %v1273
    %v1583 = vpack.c.b16 %v1276, %v1275
    %v1584 = vpack.c.b16 %v1278, %v1277
    %v1585 = vpack.c.b16 %v1280, %v1279
    %v1586 = vpack.c.b16 %v1282, %v1281
    %v1587 = vpack.c.b16 %v1284, %v1283
    %v1588 = vpack.c.b16 %v1286, %v1285
    %v1589 = vpack.c.b16 %v1288, %v1287
    %v1590 = vpack.c.b16 %v1290, %v1289
    %v1591 = vpack.c.b16 %v1292, %v1291
    %v1592 = vpack.c.b16 %v1294, %v1293
    %v1593 = vpack.c.b16 %v1296, %v1295
    %v1594 = vpack.c.b16 %v1298, %v1297
    %v1595 = vpack.c.b16 %v1300, %v1299
    %v1596 = vpack.c.b16 %v1302, %v1301
    %v1597 = vpack.c.b16 %v1304, %v1303
    %v1598 = vpack.c.b16 %v1306, %v1305
    %v1599 = vpack.c.b16 %v1308, %v1307
    %v1600 = vpack.c.b16 %v1310, %v1309
    %v1601 = vpack.c.b16 %v1312, %v1311
    %v1602 = vpack.c.b16 %v1314, %v1313
    %v1603 = vpack.c.b16 %v1316, %v1315
    %v1604 = vpack.c.b16 %v1318, %v1317
    %v1605 = vpack.c.b16 %v1320, %v1319
    %v1606 = vpack.c.b16 %v1322, %v1321
    %v1607 = vpack.c.b16 %v1324, %v1323
    %v1608 = vpack.c.b16 %v1326, %v1325
    %v1609 = vpack.c.b16 %v1328, %v1327
    %v1610 = vpack.c.b16 %v1330, %v1329
    %v1611 = vpack.c.b16 %v1332, %v1331
    %v1612 = vpack.c.b16 %v1334, %v1333
    %v1613 = vpack.c.b16 %v1336, %v1335
    %v1614 = vpack.c.b16 %v1338, %v1337
    %v1615 = vpack.c.b16 %v1340, %v1339
    %v1616 = vpack.c.b16 %v1342, %v1341
    %v1617 = vpack.c.b16 %v1344, %v1343
    %v1618 = vpack.c.b16 %v1346, %v1345
    %v1619 = vpack.c.b16 %v1348, %v1347
    %v1620 = vpack.c.b16 %v1350, %v1349
    %v1621 = vpack.c.b16 %v1352, %v1351
    %v1622 = vpack.c.b16 %v1354, %v1353
    %v1623 = vpack.c.b16 %v1356, %v1355
    %v1624 = vpack.c.b16 %v1358, %v1357
    %v1625 = vpack.c.b16 %v1360, %v1359
    %v1626 = vpack.c.b16 %v1362, %v1361
    %v1627 = vpack.c.b16 %v1364, %v1363
    %v1628 = vpack.c.b16 %v1366, %v1365
    %v1629 = vpack.c.b16 %v1368, %v1367
    %v1630 = vpack.c.b16 %v1370, %v1369
    %v1631 = vpack.c.b16 %v1372, %v1371
    %v1632 = vpack.c.b16 %v1374, %v1373
    %v1633 = vpack.c.b16 %v1376, %v1375
    %v1634 = vpack.c.b16 %v1378, %v1377
    %v1635 = vpack.c.b16 %v1380, %v1379
    %v1636 = vpack.c.b16 %v1382, %v1381
    %v1637 = vpack.c.b16 %v1384, %v1383
    %v1638 = vpack.c.b16 %v1386, %v1385
    %v1639 = vpack.c.b16 %v1388, %v1387
    %v1640 = vpack.c.b16 %v1390, %v1389
    %v1641 = vpack.c.b16 %v1392, %v1391
    %v1642 = vpack.c.b16 %v1394, %v1393
    %v1643 = vpack.c.b16 %v1396, %v1395
    %v1644 = vpack.c.b16 %v1398, %v1397
    %v1645 = vpack.c.b16 %v1400, %v1399
    %v1646 = vpack.c.b16 %v1402, %v1401
    %v1647 = vpack.c.b16 %v1404, %v1403
    %v1648 = vpack.c.b16 %v1406, %v1405
    %v1649 = vpack.c.b16 %v1408, %v1407
    %v1650 = vpack.c.b16 %v1410, %v1409
    %v1651 = vpack.c.b16 %v1412, %v1411
    %v1652 = vpack.c.b16 %v1414, %v1413
    %v1653 = vpack.c.b16 %v1416, %v1415
    %v1654 = vpack.c.b16 %v1418, %v1417
    %v1655 = vpack.c.b16 %v1420, %v1419
    %v1656 = vpack.c.b16 %v1422, %v1421
    %v1657 = vpack.c.b16 %v1424, %v1423
    %v1658 = vpack.c.b16 %v1426, %v1425
    %v1659 = vpack.c.b16 %v1428, %v1427
    %v1660 = vpack.c.b16 %v1430, %v1429
    %v1661 = vpack.c.b16 %v1432, %v1431
    %v1662 = vpack.c.b16 %v1434, %v1433
    %v1663 = vpack.c.b16 %v1436, %v1435
    %v1664 = vpack.c.b16 %v1438, %v1437
    %v1665 = vpack.c.b16 %v1440, %v1439
    %v1666 = vpack.c.b16 %v1442, %v1441
    %v1667 = vpack.c.b16 %v1444, %v1443
    %v1668 = vpack.c.b16 %v1446, %v1445
    %v1669 = vpack.c.b16 %v1448, %v1447
    %v1670 = vpack.c.b16 %v1450, %v1449
    %v1671 = vpack.c.b16 %v1452, %v1451
    %v1672 = vpack.c.b16 %v1454, %v1453
    %v1673 = vpack.c.b16 %v1456, %v1455
    %v1674 = vpack.c.b16 %v1458, %v1457
    %v1675 = vpack.c.b16 %v1460, %v1459
    %v1676 = vpack.c.b16 %v1462, %v1461
    %v1677 = vpack.c.b16 %v1464, %v1463
    %v1678 = vpack.c.b16 %v1466, %v1465
    %v1679 = vpack.c.b16 %v1468, %v1467
    %v1680 = vpack.c.b16 %v1470, %v1469
    %v1681 = vpack.c.b16 %v1472, %v1471
    %v1682 = vpack.c.b16 %v1474, %v1473
    %v1683 = vpack.c.b16 %v1476, %v1475
    %v1684 = vpack.c.b16 %v1478, %v1477
    %v1685 = vpack.c.b16 %v1480, %v1479
    %v1686 = vpack.c.b16 %v1482, %v1481
    %v1687 = vpack.c.b16 %v1484, %v1483
    %v1688 = vpack.c.b16 %v1486, %v1485
    %v1689 = vpack.c.b16 %v1488, %v1487
    %v1690 = vpack.c.b16 %v1490, %v1489
    %1891 = vmatprep.subr.bf16.mxu0 0
    %1892 = vmatpush1.bf16.msra.mxu0 %v1491
    %1893 = vmatprep.subr.bf16.mxu0 0
    %1894 = vmatpush1.bf16.msra.mxu0 %v1492
    %1895 = vmatprep.subr.bf16.mxu0 0
    %1896 = vmatpush1.bf16.msra.mxu0 %v1493
    %1897 = vmatprep.subr.bf16.mxu0 0
    %1898 = vmatpush1.bf16.msra.mxu0 %v1494
    %1899 = vmatprep.subr.bf16.mxu0 0
    %1900 = vmatpush1.bf16.msra.mxu0 %v1495
    %1901 = vmatprep.subr.bf16.mxu0 0
    %1902 = vmatpush1.bf16.msra.mxu0 %v1496
    %1903 = vmatprep.subr.bf16.mxu0 0
    %1904 = vmatpush1.bf16.msra.mxu0 %v1497
    %1905 = vmatprep.subr.bf16.mxu0 0
    %1906 = vmatpush1.bf16.msra.mxu0 %v1498
    %1907 = vmatprep.subr.bf16.mxu0 0
    %1908 = vmatpush1.bf16.msra.mxu0 %v1499
    %1909 = vmatprep.subr.bf16.mxu0 0
    %1910 = vmatpush1.bf16.msra.mxu0 %v1500
    %1911 = vmatprep.subr.bf16.mxu0 0
    %1912 = vmatpush1.bf16.msra.mxu0 %v1501
    %1913 = vmatprep.subr.bf16.mxu0 0
    %1914 = vmatpush1.bf16.msra.mxu0 %v1502
    %1915 = vmatprep.subr.bf16.mxu0 0
    %1916 = vmatpush1.bf16.msra.mxu0 %v1503
    %1917 = vmatprep.subr.bf16.mxu0 0
    %1918 = vmatpush1.bf16.msra.mxu0 %v1504
    %1919 = vmatprep.subr.bf16.mxu0 0
    %1920 = vmatpush1.bf16.msra.mxu0 %v1505
    %1921 = vmatprep.subr.bf16.mxu0 0
    %1922 = vmatpush1.bf16.msra.mxu0 %v1506
    %1923 = vmatprep.mubr.bf16.mxu0 %v661
    %1924 = vmatmul.mubr.bf16.gmra.mrb[0].mxu0 %v660
    %v1925 = vpop.f32.mrb[0].mxu0
    %v1926 = vadd.f32 %v689, %v1925
    %v1927 = vpop.f32.mrb[0].mxu0
    %v1928 = vpop.f32.mrb[0].mxu0
    %v1929 = vpop.f32.mrb[0].mxu0
    %1930 = vdwg.mxu0
    %1931 = vmatprep.subr.bf16.mxu0 0
    %1932 = vmatpush1.bf16.msra.mxu0 %v1507
    %1933 = vmatprep.subr.bf16.mxu0 0
    %1934 = vmatpush1.bf16.msra.mxu0 %v1508
    %1935 = vmatprep.subr.bf16.mxu0 0
    %1936 = vmatpush1.bf16.msra.mxu0 %v1509
    %1937 = vmatprep.subr.bf16.mxu0 0
    %1938 = vmatpush1.bf16.msra.mxu0 %v1510
    %1939 = vmatprep.subr.bf16.mxu0 0
    %1940 = vmatpush1.bf16.msra.mxu0 %v1511
    %1941 = vmatprep.subr.bf16.mxu0 0
    %1942 = vmatpush1.bf16.msra.mxu0 %v1512
    %1943 = vmatprep.subr.bf16.mxu0 0
    %1944 = vmatpush1.bf16.msra.mxu0 %v1513
    %1945 = vmatprep.subr.bf16.mxu0 0
    %1946 = vmatpush1.bf16.msra.mxu0 %v1514
    %1947 = vmatprep.subr.bf16.mxu0 0
    %1948 = vmatpush1.bf16.msra.mxu0 %v1515
    %1949 = vmatprep.subr.bf16.mxu0 0
    %1950 = vmatpush1.bf16.msra.mxu0 %v1516
    %1951 = vmatprep.subr.bf16.mxu0 0
    %1952 = vmatpush1.bf16.msra.mxu0 %v1517
    %1953 = vmatprep.subr.bf16.mxu0 0
    %1954 = vmatpush1.bf16.msra.mxu0 %v1518
    %1955 = vmatprep.subr.bf16.mxu0 0
    %1956 = vmatpush1.bf16.msra.mxu0 %v1519
    %1957 = vmatprep.subr.bf16.mxu0 0
    %1958 = vmatpush1.bf16.msra.mxu0 %v1520
    %1959 = vmatprep.subr.bf16.mxu0 0
    %1960 = vmatpush1.bf16.msra.mxu0 %v1521
    %1961 = vmatprep.subr.bf16.mxu0 0
    %1962 = vmatpush1.bf16.msra.mxu0 %v1522
    %1963 = vmatprep.mubr.bf16.mxu0 %v663
    %1964 = vmatmul.mubr.bf16.gmra.mrb[0].mxu0 %v662
    %v1965 = vpop.f32.mrb[0].mxu0
    %v1966 = vadd.f32 %v1926, %v1965
    %v1967 = vpop.f32.mrb[0].mxu0
    %v1968 = vpop.f32.mrb[0].mxu0
    %v1969 = vpop.f32.mrb[0].mxu0
    %1970 = vdwg.mxu0
    %1971 = vmatprep.subr.bf16.mxu0 0
    %1972 = vmatpush1.bf16.msra.mxu0 %v1523
    %1973 = vmatprep.subr.bf16.mxu0 0
    %1974 = vmatpush1.bf16.msra.mxu0 %v1524
    %1975 = vmatprep.subr.bf16.mxu0 0
    %1976 = vmatpush1.bf16.msra.mxu0 %v1525
    %1977 = vmatprep.subr.bf16.mxu0 0
    %1978 = vmatpush1.bf16.msra.mxu0 %v1526
    %1979 = vmatprep.subr.bf16.mxu0 0
    %1980 = vmatpush1.bf16.msra.mxu0 %v1527
    %1981 = vmatprep.subr.bf16.mxu0 0
    %1982 = vmatpush1.bf16.msra.mxu0 %v1528
    %1983 = vmatprep.subr.bf16.mxu0 0
    %1984 = vmatpush1.bf16.msra.mxu0 %v1529
    %1985 = vmatprep.subr.bf16.mxu0 0
    %1986 = vmatpush1.bf16.msra.mxu0 %v1530
    %1987 = vmatprep.subr.bf16.mxu0 0
    %1988 = vmatpush1.bf16.msra.mxu0 %v1531
    %1989 = vmatprep.subr.bf16.mxu0 0
    %1990 = vmatpush1.bf16.msra.mxu0 %v1532
    %1991 = vmatprep.subr.bf16.mxu0 0
    %1992 = vmatpush1.bf16.msra.mxu0 %v1533
    %1993 = vmatprep.subr.bf16.mxu0 0
    %1994 = vmatpush1.bf16.msra.mxu0 %v1534
    %1995 = vmatprep.subr.bf16.mxu0 0
    %1996 = vmatpush1.bf16.msra.mxu0 %v1535
    %1997 = vmatprep.subr.bf16.mxu0 0
    %1998 = vmatpush1.bf16.msra.mxu0 %v1536
    %1999 = vmatprep.subr.bf16.mxu0 0
    %2000 = vmatpush1.bf16.msra.mxu0 %v1537
    %2001 = vmatprep.subr.bf16.mxu0 0
    %2002 = vmatpush1.bf16.msra.mxu0 %v1538
    %2003 = vmatprep.mubr.bf16.mxu0 %v665
    %2004 = vmatmul.mubr.bf16.gmra.mrb[0].mxu0 %v664
    %v2005 = vpop.f32.mrb[0].mxu0
    %v2006 = vadd.f32 %v1966, %v2005
    %v2007 = vpop.f32.mrb[0].mxu0
    %v2008 = vpop.f32.mrb[0].mxu0
    %v2009 = vpop.f32.mrb[0].mxu0
    %2010 = vdwg.mxu0
    %2011 = vmatprep.subr.bf16.mxu0 0
    %2012 = vmatpush1.bf16.msra.mxu0 %v1539
    %2013 = vmatprep.subr.bf16.mxu0 0
    %2014 = vmatpush1.bf16.msra.mxu0 %v1540
    %2015 = vmatprep.subr.bf16.mxu0 0
    %2016 = vmatpush1.bf16.msra.mxu0 %v1541
    %2017 = vmatprep.subr.bf16.mxu0 0
    %2018 = vmatpush1.bf16.msra.mxu0 %v1542
    %2019 = vmatprep.subr.bf16.mxu0 0
    %2020 = vmatpush1.bf16.msra.mxu0 %v1543
    %2021 = vmatprep.subr.bf16.mxu0 0
    %2022 = vmatpush1.bf16.msra.mxu0 %v1544
    %2023 = vmatprep.subr.bf16.mxu0 0
    %2024 = vmatpush1.bf16.msra.mxu0 %v1545
    %2025 = vmatprep.subr.bf16.mxu0 0
    %2026 = vmatpush1.bf16.msra.mxu0 %v1546
    %2027 = vmatprep.subr.bf16.mxu0 0
    %2028 = vmatpush1.bf16.msra.mxu0 %v1547
    %2029 = vmatprep.subr.bf16.mxu0 0
    %2030 = vmatpush1.bf16.msra.mxu0 %v1548
    %2031 = vmatprep.subr.bf16.mxu0 0
    %2032 = vmatpush1.bf16.msra.mxu0 %v1549
    %2033 = vmatprep.subr.bf16.mxu0 0
    %2034 = vmatpush1.bf16.msra.mxu0 %v1550
    %2035 = vmatprep.subr.bf16.mxu0 0
    %2036 = vmatpush1.bf16.msra.mxu0 %v1551
    %2037 = vmatprep.subr.bf16.mxu0 0
    %2038 = vmatpush1.bf16.msra.mxu0 %v1552
    %2039 = vmatprep.subr.bf16.mxu0 0
    %2040 = vmatpush1.bf16.msra.mxu0 %v1553
    %2041 = vmatprep.subr.bf16.mxu0 0
    %2042 = vmatpush1.bf16.msra.mxu0 %v1554
    %2043 = vmatprep.mubr.bf16.mxu0 %v667
    %2044 = vmatmul.mubr.bf16.gmra.mrb[0].mxu0 %v666
    %v2045 = vpop.f32.mrb[0].mxu0
    %v2046 = vadd.f32 %v2006, %v2045
    %v2047 = vpop.f32.mrb[0].mxu0
    %v2048 = vpop.f32.mrb[0].mxu0
    %v2049 = vpop.f32.mrb[0].mxu0
    %2050 = vdwg.mxu0
    %2051 = vmatprep.subr.bf16.mxu0 0
    %2052 = vmatpush1.bf16.msra.mxu0 %v1555
    %2053 = vmatprep.subr.bf16.mxu0 0
    %2054 = vmatpush1.bf16.msra.mxu0 %v1556
    %2055 = vmatprep.subr.bf16.mxu0 0
    %2056 = vmatpush1.bf16.msra.mxu0 %v1557
    %2057 = vmatprep.subr.bf16.mxu0 0
    %2058 = vmatpush1.bf16.msra.mxu0 %v1558
    %2059 = vmatprep.subr.bf16.mxu0 0
    %2060 = vmatpush1.bf16.msra.mxu0 %v1559
    %2061 = vmatprep.subr.bf16.mxu0 0
    %2062 = vmatpush1.bf16.msra.mxu0 %v1560
    %2063 = vmatprep.subr.bf16.mxu0 0
    %2064 = vmatpush1.bf16.msra.mxu0 %v1561
    %2065 = vmatprep.subr.bf16.mxu0 0
    %2066 = vmatpush1.bf16.msra.mxu0 %v1562
    %2067 = vmatprep.subr.bf16.mxu0 0
    %2068 = vmatpush1.bf16.msra.mxu0 %v1563
    %2069 = vmatprep.subr.bf16.mxu0 0
    %2070 = vmatpush1.bf16.msra.mxu0 %v1564
    %2071 = vmatprep.subr.bf16.mxu0 0
    %2072 = vmatpush1.bf16.msra.mxu0 %v1565
    %2073 = vmatprep.subr.bf16.mxu0 0
    %2074 = vmatpush1.bf16.msra.mxu0 %v1566
    %2075 = vmatprep.subr.bf16.mxu0 0
    %2076 = vmatpush1.bf16.msra.mxu0 %v1567
    %2077 = vmatprep.subr.bf16.mxu0 0
    %2078 = vmatpush1.bf16.msra.mxu0 %v1568
    %2079 = vmatprep.subr.bf16.mxu0 0
    %2080 = vmatpush1.bf16.msra.mxu0 %v1569
    %2081 = vmatprep.subr.bf16.mxu0 0
    %2082 = vmatpush1.bf16.msra.mxu0 %v1570
    %2083 = vmatprep.mubr.bf16.mxu0 %v669
    %2084 = vmatmul.mubr.bf16.gmra.mrb[0].mxu0 %v668
    %v2085 = vpop.f32.mrb[0].mxu0
    %v2086 = vadd.f32 %v2046, %v2085
    %v2087 = vpop.f32.mrb[0].mxu0
    %v2088 = vpop.f32.mrb[0].mxu0
    %v2089 = vpop.f32.mrb[0].mxu0
    %2090 = vdwg.mxu0
    %2091 = vmatprep.subr.bf16.mxu0 0
    %2092 = vmatpush1.bf16.msra.mxu0 %v1571
    %2093 = vmatprep.subr.bf16.mxu0 0
    %2094 = vmatpush1.bf16.msra.mxu0 %v1572
    %2095 = vmatprep.subr.bf16.mxu0 0
    %2096 = vmatpush1.bf16.msra.mxu0 %v1573
    %2097 = vmatprep.subr.bf16.mxu0 0
    %2098 = vmatpush1.bf16.msra.mxu0 %v1574
    %2099 = vmatprep.subr.bf16.mxu0 0
    %2100 = vmatpush1.bf16.msra.mxu0 %v1575
    %2101 = vmatprep.subr.bf16.mxu0 0
    %2102 = vmatpush1.bf16.msra.mxu0 %v1576
    %2103 = vmatprep.subr.bf16.mxu0 0
    %2104 = vmatpush1.bf16.msra.mxu0 %v1577
    %2105 = vmatprep.subr.bf16.mxu0 0
    %2106 = vmatpush1.bf16.msra.mxu0 %v1578
    %2107 = vmatprep.subr.bf16.mxu0 0
    %2108 = vmatpush1.bf16.msra.mxu0 %v1579
    %2109 = vmatprep.subr.bf16.mxu0 0
    %2110 = vmatpush1.bf16.msra.mxu0 %v1580
    %2111 = vmatprep.subr.bf16.mxu0 0
    %2112 = vmatpush1.bf16.msra.mxu0 %v1581
    %2113 = vmatprep.subr.bf16.mxu0 0
    %2114 = vmatpush1.bf16.msra.mxu0 %v1582
    %2115 = vmatprep.subr.bf16.mxu0 0
    %2116 = vmatpush1.bf16.msra.mxu0 %v1583
    %2117 = vmatprep.subr.bf16.mxu0 0
    %2118 = vmatpush1.bf16.msra.mxu0 %v1584
    %2119 = vmatprep.subr.bf16.mxu0 0
    %2120 = vmatpush1.bf16.msra.mxu0 %v1585
    %2121 = vmatprep.subr.bf16.mxu0 0
    %2122 = vmatpush1.bf16.msra.mxu0 %v1586
    %2123 = vmatprep.mubr.bf16.mxu0 %v671
    %2124 = vmatmul.mubr.bf16.gmra.mrb[0].mxu0 %v670
    %v2125 = vpop.f32.mrb[0].mxu0
    %v2126 = vadd.f32 %v2086, %v2125
    %v2127 = vpop.f32.mrb[0].mxu0
    %v2128 = vpop.f32.mrb[0].mxu0
    %v2129 = vpop.f32.mrb[0].mxu0
    %2130 = vdwg.mxu0
    %2131 = vmatprep.subr.bf16.mxu0 0
    %2132 = vmatpush1.bf16.msra.mxu0 %v1587
    %2133 = vmatprep.subr.bf16.mxu0 0
    %2134 = vmatpush1.bf16.msra.mxu0 %v1588
    %2135 = vmatprep.subr.bf16.mxu0 0
    %2136 = vmatpush1.bf16.msra.mxu0 %v1589
    %2137 = vmatprep.subr.bf16.mxu0 0
    %2138 = vmatpush1.bf16.msra.mxu0 %v1590
    %2139 = vmatprep.subr.bf16.mxu0 0
    %2140 = vmatpush1.bf16.msra.mxu0 %v1591
    %2141 = vmatprep.subr.bf16.mxu0 0
    %2142 = vmatpush1.bf16.msra.mxu0 %v1592
    %2143 = vmatprep.subr.bf16.mxu0 0
    %2144 = vmatpush1.bf16.msra.mxu0 %v1593
    %2145 = vmatprep.subr.bf16.mxu0 0
    %2146 = vmatpush1.bf16.msra.mxu0 %v1594
    %2147 = vmatprep.subr.bf16.mxu0 0
    %2148 = vmatpush1.bf16.msra.mxu0 %v1595
    %2149 = vmatprep.subr.bf16.mxu0 0
    %2150 = vmatpush1.bf16.msra.mxu0 %v1596
    %2151 = vmatprep.subr.bf16.mxu0 0
    %2152 = vmatpush1.bf16.msra.mxu0 %v1597
    %2153 = vmatprep.subr.bf16.mxu0 0
    %2154 = vmatpush1.bf16.msra.mxu0 %v1598
    %2155 = vmatprep.subr.bf16.mxu0 0
    %2156 = vmatpush1.bf16.msra.mxu0 %v1599
    %2157 = vmatprep.subr.bf16.mxu0 0
    %2158 = vmatpush1.bf16.msra.mxu0 %v1600
    %2159 = vmatprep.subr.bf16.mxu0 0
    %2160 = vmatpush1.bf16.msra.mxu0 %v1601
    %2161 = vmatprep.subr.bf16.mxu0 0
    %2162 = vmatpush1.bf16.msra.mxu0 %v1602
    %2163 = vmatprep.mubr.bf16.mxu0 %v673
    %2164 = vmatmul.mubr.bf16.gmra.mrb[0].mxu0 %v672
    %v2165 = vpop.f32.mrb[0].mxu0
    %v2166 = vadd.f32 %v2126, %v2165
    %v2167 = vpop.f32.mrb[0].mxu0
    %v2168 = vpop.f32.mrb[0].mxu0
    %v2169 = vpop.f32.mrb[0].mxu0
    %2170 = vdwg.mxu0
    %2171 = vmatprep.subr.bf16.mxu0 0
    %2172 = vmatpush1.bf16.msra.mxu0 %v1603
    %2173 = vmatprep.subr.bf16.mxu0 0
    %2174 = vmatpush1.bf16.msra.mxu0 %v1604
    %2175 = vmatprep.subr.bf16.mxu0 0
    %2176 = vmatpush1.bf16.msra.mxu0 %v1605
    %2177 = vmatprep.subr.bf16.mxu0 0
    %2178 = vmatpush1.bf16.msra.mxu0 %v1606
    %2179 = vmatprep.subr.bf16.mxu0 0
    %2180 = vmatpush1.bf16.msra.mxu0 %v1607
    %2181 = vmatprep.subr.bf16.mxu0 0
    %2182 = vmatpush1.bf16.msra.mxu0 %v1608
    %2183 = vmatprep.subr.bf16.mxu0 0
    %2184 = vmatpush1.bf16.msra.mxu0 %v1609
    %2185 = vmatprep.subr.bf16.mxu0 0
    %2186 = vmatpush1.bf16.msra.mxu0 %v1610
    %2187 = vmatprep.subr.bf16.mxu0 0
    %2188 = vmatpush1.bf16.msra.mxu0 %v1611
    %2189 = vmatprep.subr.bf16.mxu0 0
    %2190 = vmatpush1.bf16.msra.mxu0 %v1612
    %2191 = vmatprep.subr.bf16.mxu0 0
    %2192 = vmatpush1.bf16.msra.mxu0 %v1613
    %2193 = vmatprep.subr.bf16.mxu0 0
    %2194 = vmatpush1.bf16.msra.mxu0 %v1614
    %2195 = vmatprep.subr.bf16.mxu0 0
    %2196 = vmatpush1.bf16.msra.mxu0 %v1615
    %2197 = vmatprep.subr.bf16.mxu0 0
    %2198 = vmatpush1.bf16.msra.mxu0 %v1616
    %2199 = vmatprep.subr.bf16.mxu0 0
    %2200 = vmatpush1.bf16.msra.mxu0 %v1617
    %2201 = vmatprep.subr.bf16.mxu0 0
    %2202 = vmatpush1.bf16.msra.mxu0 %v1618
    %2203 = vmatprep.mubr.bf16.mxu0 %v675
    %2204 = vmatmul.mubr.bf16.gmra.mrb[0].mxu0 %v674
    %v2205 = vpop.f32.mrb[0].mxu0
    %v2206 = vadd.f32 %v2166, %v2205
    %v2207 = vpop.f32.mrb[0].mxu0
    %v2208 = vpop.f32.mrb[0].mxu0
    %v2209 = vpop.f32.mrb[0].mxu0
    %2210 = vdwg.mxu0
    %2211 = vmatprep.subr.bf16.mxu0 0
    %2212 = vmatpush1.bf16.msra.mxu0 %v1619
    %2213 = vmatprep.subr.bf16.mxu0 0
    %2214 = vmatpush1.bf16.msra.mxu0 %v1620
    %2215 = vmatprep.subr.bf16.mxu0 0
    %2216 = vmatpush1.bf16.msra.mxu0 %v1621
    %2217 = vmatprep.subr.bf16.mxu0 0
    %2218 = vmatpush1.bf16.msra.mxu0 %v1622
    %2219 = vmatprep.subr.bf16.mxu0 0
    %2220 = vmatpush1.bf16.msra.mxu0 %v1623
    %2221 = vmatprep.subr.bf16.mxu0 0
    %2222 = vmatpush1.bf16.msra.mxu0 %v1624
    %2223 = vmatprep.subr.bf16.mxu0 0
    %2224 = vmatpush1.bf16.msra.mxu0 %v1625
    %2225 = vmatprep.subr.bf16.mxu0 0
    %2226 = vmatpush1.bf16.msra.mxu0 %v1626
    %2227 = vmatprep.subr.bf16.mxu0 0
    %2228 = vmatpush1.bf16.msra.mxu0 %v1627
    %2229 = vmatprep.subr.bf16.mxu0 0
    %2230 = vmatpush1.bf16.msra.mxu0 %v1628
    %2231 = vmatprep.subr.bf16.mxu0 0
    %2232 = vmatpush1.bf16.msra.mxu0 %v1629
    %2233 = vmatprep.subr.bf16.mxu0 0
    %2234 = vmatpush1.bf16.msra.mxu0 %v1630
    %2235 = vmatprep.subr.bf16.mxu0 0
    %2236 = vmatpush1.bf16.msra.mxu0 %v1631
    %2237 = vmatprep.subr.bf16.mxu0 0
    %2238 = vmatpush1.bf16.msra.mxu0 %v1632
    %2239 = vmatprep.subr.bf16.mxu0 0
    %2240 = vmatpush1.bf16.msra.mxu0 %v1633
    %2241 = vmatprep.subr.bf16.mxu0 0
    %2242 = vmatpush1.bf16.msra.mxu0 %v1634
    %2243 = vmatprep.mubr.bf16.mxu0 %v677
    %2244 = vmatmul.mubr.bf16.gmra.mrb[0].mxu0 %v676
    %v2245 = vpop.f32.mrb[0].mxu0
    %v2246 = vadd.f32 %v2206, %v2245
    %v2247 = vpop.f32.mrb[0].mxu0
    %v2248 = vpop.f32.mrb[0].mxu0
    %v2249 = vpop.f32.mrb[0].mxu0
    %2250 = vdwg.mxu0
    %2251 = vmatprep.subr.bf16.mxu0 0
    %2252 = vmatpush1.bf16.msra.mxu0 %v1635
    %2253 = vmatprep.subr.bf16.mxu0 0
    %2254 = vmatpush1.bf16.msra.mxu0 %v1636
    %2255 = vmatprep.subr.bf16.mxu0 0
    %2256 = vmatpush1.bf16.msra.mxu0 %v1637
    %2257 = vmatprep.subr.bf16.mxu0 0
    %2258 = vmatpush1.bf16.msra.mxu0 %v1638
    %2259 = vmatprep.subr.bf16.mxu0 0
    %2260 = vmatpush1.bf16.msra.mxu0 %v1639
    %2261 = vmatprep.subr.bf16.mxu0 0
    %2262 = vmatpush1.bf16.msra.mxu0 %v1640
    %2263 = vmatprep.subr.bf16.mxu0 0
    %2264 = vmatpush1.bf16.msra.mxu0 %v1641
    %2265 = vmatprep.subr.bf16.mxu0 0
    %2266 = vmatpush1.bf16.msra.mxu0 %v1642
    %2267 = vmatprep.subr.bf16.mxu0 0
    %2268 = vmatpush1.bf16.msra.mxu0 %v1643
    %2269 = vmatprep.subr.bf16.mxu0 0
    %2270 = vmatpush1.bf16.msra.mxu0 %v1644
    %2271 = vmatprep.subr.bf16.mxu0 0
    %2272 = vmatpush1.bf16.msra.mxu0 %v1645
    %2273 = vmatprep.subr.bf16.mxu0 0
    %2274 = vmatpush1.bf16.msra.mxu0 %v1646
    %2275 = vmatprep.subr.bf16.mxu0 0
    %2276 = vmatpush1.bf16.msra.mxu0 %v1647
    %2277 = vmatprep.subr.bf16.mxu0 0
    %2278 = vmatpush1.bf16.msra.mxu0 %v1648
    %2279 = vmatprep.subr.bf16.mxu0 0
    %2280 = vmatpush1.bf16.msra.mxu0 %v1649
    %2281 = vmatprep.subr.bf16.mxu0 0
    %2282 = vmatpush1.bf16.msra.mxu0 %v1650
    %2283 = vmatprep.mubr.bf16.mxu0 %v679
    %2284 = vmatmul.mubr.bf16.gmra.mrb[0].mxu0 %v678
    %v2285 = vpop.f32.mrb[0].mxu0
    %v2286 = vadd.f32 %v2246, %v2285
    %v2287 = vpop.f32.mrb[0].mxu0
    %v2288 = vpop.f32.mrb[0].mxu0
    %v2289 = vpop.f32.mrb[0].mxu0
    %2290 = vdwg.mxu0
    %2291 = vmatprep.subr.bf16.mxu0 0
    %2292 = vmatpush1.bf16.msra.mxu0 %v1651
    %2293 = vmatprep.subr.bf16.mxu0 0
    %2294 = vmatpush1.bf16.msra.mxu0 %v1652
    %2295 = vmatprep.subr.bf16.mxu0 0
    %2296 = vmatpush1.bf16.msra.mxu0 %v1653
    %2297 = vmatprep.subr.bf16.mxu0 0
    %2298 = vmatpush1.bf16.msra.mxu0 %v1654
    %2299 = vmatprep.subr.bf16.mxu0 0
    %2300 = vmatpush1.bf16.msra.mxu0 %v1655
    %2301 = vmatprep.subr.bf16.mxu0 0
    %2302 = vmatpush1.bf16.msra.mxu0 %v1656
    %2303 = vmatprep.subr.bf16.mxu0 0
    %2304 = vmatpush1.bf16.msra.mxu0 %v1657
    %2305 = vmatprep.subr.bf16.mxu0 0
    %2306 = vmatpush1.bf16.msra.mxu0 %v1658
    %2307 = vmatprep.subr.bf16.mxu0 0
    %2308 = vmatpush1.bf16.msra.mxu0 %v1659
    %2309 = vmatprep.subr.bf16.mxu0 0
    %2310 = vmatpush1.bf16.msra.mxu0 %v1660
    %2311 = vmatprep.subr.bf16.mxu0 0
    %2312 = vmatpush1.bf16.msra.mxu0 %v1661
    %2313 = vmatprep.subr.bf16.mxu0 0
    %2314 = vmatpush1.bf16.msra.mxu0 %v1662
    %2315 = vmatprep.subr.bf16.mxu0 0
    %2316 = vmatpush1.bf16.msra.mxu0 %v1663
    %2317 = vmatprep.subr.bf16.mxu0 0
    %2318 = vmatpush1.bf16.msra.mxu0 %v1664
    %2319 = vmatprep.subr.bf16.mxu0 0
    %2320 = vmatpush1.bf16.msra.mxu0 %v1665
    %2321 = vmatprep.subr.bf16.mxu0 0
    %2322 = vmatpush1.bf16.msra.mxu0 %v1666
    %2323 = vmatprep.mubr.bf16.mxu0 %v681
    %2324 = vmatmul.mubr.bf16.gmra.mrb[0].mxu0 %v680
    %v2325 = vpop.f32.mrb[0].mxu0
    %v2326 = vadd.f32 %v2286, %v2325
    %v2327 = vpop.f32.mrb[0].mxu0
    %v2328 = vpop.f32.mrb[0].mxu0
    %v2329 = vpop.f32.mrb[0].mxu0
    %2330 = vdwg.mxu0
    %2331 = vmatprep.subr.bf16.mxu0 0
    %2332 = vmatpush1.bf16.msra.mxu0 %v1667
    %2333 = vmatprep.subr.bf16.mxu0 0
    %2334 = vmatpush1.bf16.msra.mxu0 %v1668
    %2335 = vmatprep.subr.bf16.mxu0 0
    %2336 = vmatpush1.bf16.msra.mxu0 %v1669
    %2337 = vmatprep.subr.bf16.mxu0 0
    %2338 = vmatpush1.bf16.msra.mxu0 %v1670
    %2339 = vmatprep.subr.bf16.mxu0 0
    %2340 = vmatpush1.bf16.msra.mxu0 %v1671
    %2341 = vmatprep.subr.bf16.mxu0 0
    %2342 = vmatpush1.bf16.msra.mxu0 %v1672
    %2343 = vmatprep.subr.bf16.mxu0 0
    %2344 = vmatpush1.bf16.msra.mxu0 %v1673
    %2345 = vmatprep.subr.bf16.mxu0 0
    %2346 = vmatpush1.bf16.msra.mxu0 %v1674
    %2347 = vmatprep.subr.bf16.mxu0 0
    %2348 = vmatpush1.bf16.msra.mxu0 %v1675
    %2349 = vmatprep.subr.bf16.mxu0 0
    %2350 = vmatpush1.bf16.msra.mxu0 %v1676
    %2351 = vmatprep.subr.bf16.mxu0 0
    %2352 = vmatpush1.bf16.msra.mxu0 %v1677
    %2353 = vmatprep.subr.bf16.mxu0 0
    %2354 = vmatpush1.bf16.msra.mxu0 %v1678
    %2355 = vmatprep.subr.bf16.mxu0 0
    %2356 = vmatpush1.bf16.msra.mxu0 %v1679
    %2357 = vmatprep.subr.bf16.mxu0 0
    %2358 = vmatpush1.bf16.msra.mxu0 %v1680
    %2359 = vmatprep.subr.bf16.mxu0 0
    %2360 = vmatpush1.bf16.msra.mxu0 %v1681
    %2361 = vmatprep.subr.bf16.mxu0 0
    %2362 = vmatpush1.bf16.msra.mxu0 %v1682
    %2363 = vmatprep.mubr.bf16.mxu0 %v683
    %2364 = vmatmul.mubr.bf16.gmra.mrb[0].mxu0 %v682
    %v2365 = vpop.f32.mrb[0].mxu0
    %v2366 = vadd.f32 %v2326, %v2365
    %v2367 = vpop.f32.mrb[0].mxu0
    %v2368 = vpop.f32.mrb[0].mxu0
    %v2369 = vpop.f32.mrb[0].mxu0
    %2370 = vdwg.mxu0
    %2371 = vmatprep.subr.bf16.mxu0 0
    %2372 = vmatpush1.bf16.msra.mxu0 %v1683
    %2373 = vmatprep.subr.bf16.mxu0 0
    %2374 = vmatpush1.bf16.msra.mxu0 %v1684
    %2375 = vmatprep.subr.bf16.mxu0 0
    %2376 = vmatpush1.bf16.msra.mxu0 %v1685
    %2377 = vmatprep.subr.bf16.mxu0 0
    %2378 = vmatpush1.bf16.msra.mxu0 %v1686
    %2379 = vmatprep.subr.bf16.mxu0 0
    %2380 = vmatpush1.bf16.msra.mxu0 %v1687
    %2381 = vmatprep.subr.bf16.mxu0 0
    %2382 = vmatpush1.bf16.msra.mxu0 %v1688
    %2383 = vmatprep.subr.bf16.mxu0 0
    %2384 = vmatpush1.bf16.msra.mxu0 %v1689
    %2385 = vmatprep.subr.bf16.mxu0 0
    %2386 = vmatpush1.bf16.msra.mxu0 %v1690
    %2387 = vmatprep.subr.bf16.mxu0 0
    %2388 = vmatpush1.bf16.msra.mxu0 0
    %2389 = vmatprep.subr.bf16.mxu0 0
    %2390 = vmatpush1.bf16.msra.mxu0 0
    %2391 = vmatprep.subr.bf16.mxu0 0
    %2392 = vmatpush1.bf16.msra.mxu0 0
    %2393 = vmatprep.subr.bf16.mxu0 0
    %2394 = vmatpush1.bf16.msra.mxu0 0
    %2395 = vmatprep.subr.bf16.mxu0 0
    %2396 = vmatpush1.bf16.msra.mxu0 0
    %2397 = vmatprep.subr.bf16.mxu0 0
    %2398 = vmatpush1.bf16.msra.mxu0 0
    %2399 = vmatprep.subr.bf16.mxu0 0
    %2400 = vmatpush1.bf16.msra.mxu0 0
    %2401 = vmatprep.subr.bf16.mxu0 0
    %2402 = vmatpush1.bf16.msra.mxu0 0
    %2403 = vmatprep.mubr.bf16.mxu0 0
    %2404 = vmatmul.mubr.bf16.gmra.mrb[0].mxu0 %v684
    %v2405 = vpop.f32.mrb[0].mxu0
    %v2406 = vadd.f32 %v2366, %v2405
    %v2407 = vpop.f32.mrb[0].mxu0
    %v2408 = vpop.f32.mrb[0].mxu0
    %v2409 = vpop.f32.mrb[0].mxu0
    %2410 = vdwg.mxu0
    %vm2411 = vcmp.ge.f32.partialorder %v2406, 0.0
    %v2412 = vmul.f32 %v2406, 0.2
    %v2413 = vsel %vm2411, %v2406, %v2412
    %v2415 = vlaneseq
    %v2416 = vshrl.u32 %v2415, 7
    %v2417 = vsub.s32 0, %v2416
    %v2418 = vrot.slane %v511, %v2417
    %2420 = vmatprep.subr.mxu0 0.0
    %2421 = vmatpush1.msra.mxu0 %v495
    %2422 = vmatprep.subr.mxu0 0.0
    %2423 = vmatpush1.msra.mxu0 %v496
    %2424 = vmatprep.subr.mxu0 0.0
    %2425 = vmatpush1.msra.mxu0 %v497
    %2426 = vmatprep.subr.mxu0 0.0
    %2427 = vmatpush1.msra.mxu0 %v498
    %2428 = vmatprep.subr.mxu0 0.0
    %2429 = vmatpush1.msra.mxu0 %v499
    %2430 = vmatprep.subr.mxu0 0.0
    %2431 = vmatpush1.msra.mxu0 %v500
    %2432 = vmatprep.subr.mxu0 0.0
    %2433 = vmatpush1.msra.mxu0 %v501
    %2434 = vmatprep.subr.mxu0 0.0
    %2435 = vmatpush1.msra.mxu0 %v502
    %2436 = vmatprep.subr.mxu0 0.0
    %2437 = vmatpush1.msra.mxu0 %v503
    %2438 = vmatprep.subr.mxu0 0.0
    %2439 = vmatpush1.msra.mxu0 %v504
    %2440 = vmatprep.subr.mxu0 0.0
    %2441 = vmatpush1.msra.mxu0 %v505
    %2442 = vmatprep.subr.mxu0 0.0
    %2443 = vmatpush1.msra.mxu0 %v506
    %2444 = vmatprep.subr.mxu0 0.0
    %2445 = vmatpush1.msra.mxu0 %v507
    %2446 = vmatprep.subr.mxu0 0.0
    %2447 = vmatpush1.msra.mxu0 %v508
    %2448 = vmatprep.subr.mxu0 0.0
    %2449 = vmatpush1.msra.mxu0 %v509
    %2450 = vmatprep.subr.mxu0 0.0
    %2451 = vmatpush1.msra.mxu0 %v510
    %2452 = vmatprep.subr.mxu0 0.0
    %2453 = vmatpush1.msra.mxu0 0.0
    %2454 = vmatprep.subr.mxu0 0.0
    %2455 = vmatpush1.msra.mxu0 0.0
    %2456 = vmatprep.subr.mxu0 0.0
    %2457 = vmatpush1.msra.mxu0 0.0
    %2458 = vmatprep.subr.mxu0 0.0
    %2459 = vmatpush1.msra.mxu0 0.0
    %2460 = vmatprep.subr.mxu0 0.0
    %2461 = vmatpush1.msra.mxu0 0.0
    %2462 = vmatprep.subr.mxu0 0.0
    %2463 = vmatpush1.msra.mxu0 0.0
    %2464 = vmatprep.subr.mxu0 0.0
    %2465 = vmatpush1.msra.mxu0 0.0
    %2466 = vmatprep.subr.mxu0 0.0
    %2467 = vmatpush1.msra.mxu0 0.0
    %2468 = vmatprep.subr.mxu0 0.0
    %2469 = vmatpush1.msra.mxu0 0.0
    %2470 = vmatprep.subr.mxu0 0.0
    %2471 = vmatpush1.msra.mxu0 0.0
    %2472 = vmatprep.subr.mxu0 0.0
    %2473 = vmatpush1.msra.mxu0 0.0
    %2474 = vmatprep.subr.mxu0 0.0
    %2475 = vmatpush1.msra.mxu0 0.0
    %2476 = vmatprep.subr.mxu0 0.0
    %2477 = vmatpush1.msra.mxu0 0.0
    %2478 = vmatprep.subr.mxu0 0.0
    %2479 = vmatpush1.msra.mxu0 0.0
    %2480 = vmatprep.subr.mxu0 0.0
    %2481 = vmatpush1.msra.mxu0 0.0
    %2482 = vmatprep.subr.mxu0 0.0
    %2483 = vmatpush1.msra.mxu0 0.0
    %2484 = vmatprep.mubr.f32.mxu0 0.0
    %2485 = vmatmul.mubr.f32.gmra.mrb[0].mxu0 %v2413
    %v2486 = vpop.f32.mrb[0].mxu0
    %v2487 = vadd.f32 %v2418, %v2486
    %v2488 = vpop.f32.mrb[0].mxu0
    %2489 = vdwg.mxu0
    %v2490 = vtanh.pop %v2487
    %2491 = vst [vmem:[#allocation11] sm:$0x3] %v2490
    %v2492 = vld [vmem:[#allocation5] sm:$0xff]
    %v2493 = vld [vmem:[#allocation5 + $0x8] sm:$0xff]
    %v2494 = vld [vmem:[#allocation5 + $0x10] sm:$0xff]
    %v2495 = vld [vmem:[#allocation5 + $0x18] sm:$0xff]
    %v2496 = vld [vmem:[#allocation5 + $0x20] sm:$0xff]
    %v2497 = vld [vmem:[#allocation5 + $0x28] sm:$0xff]
    %v2498 = vld [vmem:[#allocation5 + $0x30] sm:$0x3]
    %v2506 = vcombine.high %v2492, %v2492
    %v2508 = vunpack.c.l.s4 1983009808
    %v2509 = vunpack.c.0.s8 %v2508
    %v2510 = vlaneseq
    %v2511 = vshrl.u32 %v2510, 7
    %v2512 = vsub.s32 %v2509, %v2511
    %v2513 = vrot.slane %v2492, %v2512
    %v2515 = vunpack.c.l.s4 1983009808
    %v2516 = vunpack.c.0.s8 %v2515
    %v2517 = vlaneseq
    %v2518 = vshrl.u32 %v2517, 7
    %v2519 = vsub.s32 %v2516, %v2518
    %v2520 = vrot.slane %v2506, %v2519
    %v2521 = vcombine.high %v2513, %v2513
    %v2522 = vcombine.high %v2520, %v2520
    %v2523 = vcombine.high %v2493, %v2493
    %v2525 = vunpack.c.l.s4 1983009808
    %v2526 = vunpack.c.0.s8 %v2525
    %v2527 = vlaneseq
    %v2528 = vshrl.u32 %v2527, 7
    %v2529 = vsub.s32 %v2526, %v2528
    %v2530 = vrot.slane %v2493, %v2529
    %v2532 = vunpack.c.l.s4 1983009808
    %v2533 = vunpack.c.0.s8 %v2532
    %v2534 = vlaneseq
    %v2535 = vshrl.u32 %v2534, 7
    %v2536 = vsub.s32 %v2533, %v2535
    %v2537 = vrot.slane %v2523, %v2536
    %v2538 = vcombine.high %v2530, %v2530
    %v2539 = vcombine.high %v2537, %v2537
    %v2540 = vcombine.high %v2494, %v2494
    %v2542 = vunpack.c.l.s4 1983009808
    %v2543 = vunpack.c.0.s8 %v2542
    %v2544 = vlaneseq
    %v2545 = vshrl.u32 %v2544, 7
    %v2546 = vsub.s32 %v2543, %v2545
    %v2547 = vrot.slane %v2494, %v2546
    %v2549 = vunpack.c.l.s4 1983009808
    %v2550 = vunpack.c.0.s8 %v2549
    %v2551 = vlaneseq
    %v2552 = vshrl.u32 %v2551, 7
    %v2553 = vsub.s32 %v2550, %v2552
    %v2554 = vrot.slane %v2540, %v2553
    %v2555 = vcombine.high %v2547, %v2547
    %v2556 = vcombine.high %v2554, %v2554
    %v2557 = vcombine.high %v2495, %v2495
    %v2559 = vunpack.c.l.s4 1983009808
    %v2560 = vunpack.c.0.s8 %v2559
    %v2561 = vlaneseq
    %v2562 = vshrl.u32 %v2561, 7
    %v2563 = vsub.s32 %v2560, %v2562
    %v2564 = vrot.slane %v2495, %v2563
    %v2566 = vunpack.c.l.s4 1983009808
    %v2567 = vunpack.c.0.s8 %v2566
    %v2568 = vlaneseq
    %v2569 = vshrl.u32 %v2568, 7
    %v2570 = vsub.s32 %v2567, %v2569
    %v2571 = vrot.slane %v2557, %v2570
    %v2572 = vcombine.high %v2564, %v2564
    %v2573 = vcombine.high %v2571, %v2571
    %v2574 = vcombine.high %v2496, %v2496
    %v2576 = vunpack.c.l.s4 1983009808
    %v2577 = vunpack.c.0.s8 %v2576
    %v2578 = vlaneseq
    %v2579 = vshrl.u32 %v2578, 7
    %v2580 = vsub.s32 %v2577, %v2579
    %v2581 = vrot.slane %v2496, %v2580
    %v2583 = vunpack.c.l.s4 1983009808
    %v2584 = vunpack.c.0.s8 %v2583
    %v2585 = vlaneseq
    %v2586 = vshrl.u32 %v2585, 7
    %v2587 = vsub.s32 %v2584, %v2586
    %v2588 = vrot.slane %v2574, %v2587
    %v2589 = vcombine.high %v2581, %v2581
    %v2590 = vcombine.high %v2588, %v2588
    %v2591 = vcombine.high %v2497, %v2497
    %v2593 = vunpack.c.l.s4 1983009808
    %v2594 = vunpack.c.0.s8 %v2593
    %v2595 = vlaneseq
    %v2596 = vshrl.u32 %v2595, 7
    %v2597 = vsub.s32 %v2594, %v2596
    %v2598 = vrot.slane %v2497, %v2597
    %v2600 = vunpack.c.l.s4 1983009808
    %v2601 = vunpack.c.0.s8 %v2600
    %v2602 = vlaneseq
    %v2603 = vshrl.u32 %v2602, 7
    %v2604 = vsub.s32 %v2601, %v2603
    %v2605 = vrot.slane %v2591, %v2604
    %v2606 = vcombine.high %v2598, %v2598
    %v2607 = vcombine.high %v2605, %v2605
    %v2609 = vunpack.c.l.s4 1983009808
    %v2610 = vunpack.c.0.s8 %v2609
    %v2611 = vlaneseq
    %v2612 = vshrl.u32 %v2611, 7
    %v2613 = vsub.s32 %v2610, %v2612
    %v2614 = vrot.slane %v2498, %v2613
    %v2640 = vpack.c.bf16 %v2513, %v2513
    %v2641 = vpack.c.bf16 %v2521, %v2521
    %v2642 = vpack.c.bf16 %v2520, %v2520
    %v2643 = vpack.c.bf16 %v2522, %v2522
    %v2644 = vpack.c.bf16 %v2530, %v2530
    %v2645 = vpack.c.bf16 %v2538, %v2538
    %v2646 = vpack.c.bf16 %v2537, %v2537
    %v2647 = vpack.c.bf16 %v2539, %v2539
    %v2648 = vpack.c.bf16 %v2547, %v2547
    %v2649 = vpack.c.bf16 %v2555, %v2555
    %v2650 = vpack.c.bf16 %v2554, %v2554
    %v2651 = vpack.c.bf16 %v2556, %v2556
    %v2652 = vpack.c.bf16 %v2564, %v2564
    %v2653 = vpack.c.bf16 %v2572, %v2572
    %v2654 = vpack.c.bf16 %v2571, %v2571
    %v2655 = vpack.c.bf16 %v2573, %v2573
    %v2656 = vpack.c.bf16 %v2581, %v2581
    %v2657 = vpack.c.bf16 %v2589, %v2589
    %v2658 = vpack.c.bf16 %v2588, %v2588
    %v2659 = vpack.c.bf16 %v2590, %v2590
    %v2660 = vpack.c.bf16 %v2598, %v2598
    %v2661 = vpack.c.bf16 %v2606, %v2606
    %v2662 = vpack.c.bf16 %v2605, %v2605
    %v2663 = vpack.c.bf16 %v2607, %v2607
    %v2664 = vpack.c.bf16 %v2614, %v2614
    %2665 = vmatprep.subr.bf16.mxu0 0
    %2666 = vmatpush1.bf16.msra.mxu0 %v1491
    %2667 = vmatprep.subr.bf16.mxu0 0
    %2668 = vmatpush1.bf16.msra.mxu0 %v1492
    %2669 = vmatprep.subr.bf16.mxu0 0
    %2670 = vmatpush1.bf16.msra.mxu0 %v1493
    %2671 = vmatprep.subr.bf16.mxu0 0
    %2672 = vmatpush1.bf16.msra.mxu0 %v1494
    %2673 = vmatprep.subr.bf16.mxu0 0
    %2674 = vmatpush1.bf16.msra.mxu0 %v1495
    %2675 = vmatprep.subr.bf16.mxu0 0
    %2676 = vmatpush1.bf16.msra.mxu0 %v1496
    %2677 = vmatprep.subr.bf16.mxu0 0
    %2678 = vmatpush1.bf16.msra.mxu0 %v1497
    %2679 = vmatprep.subr.bf16.mxu0 0
    %2680 = vmatpush1.bf16.msra.mxu0 %v1498
    %2681 = vmatprep.subr.bf16.mxu0 0
    %2682 = vmatpush1.bf16.msra.mxu0 %v1499
    %2683 = vmatprep.subr.bf16.mxu0 0
    %2684 = vmatpush1.bf16.msra.mxu0 %v1500
    %2685 = vmatprep.subr.bf16.mxu0 0
    %2686 = vmatpush1.bf16.msra.mxu0 %v1501
    %2687 = vmatprep.subr.bf16.mxu0 0
    %2688 = vmatpush1.bf16.msra.mxu0 %v1502
    %2689 = vmatprep.subr.bf16.mxu0 0
    %2690 = vmatpush1.bf16.msra.mxu0 %v1503
    %2691 = vmatprep.subr.bf16.mxu0 0
    %2692 = vmatpush1.bf16.msra.mxu0 %v1504
    %2693 = vmatprep.subr.bf16.mxu0 0
    %2694 = vmatpush1.bf16.msra.mxu0 %v1505
    %2695 = vmatprep.subr.bf16.mxu0 0
    %2696 = vmatpush1.bf16.msra.mxu0 %v1506
    %2697 = vmatprep.mubr.bf16.mxu0 %v2641
    %2698 = vmatmul.mubr.bf16.gmra.mrb[0].mxu0 %v2640
    %v2699 = vpop.f32.mrb[0].mxu0
    %v2700 = vadd.f32 %v689, %v2699
    %v2701 = vpop.f32.mrb[0].mxu0
    %v2702 = vpop.f32.mrb[0].mxu0
    %v2703 = vpop.f32.mrb[0].mxu0
    %2704 = vdwg.mxu0
    %2705 = vmatprep.subr.bf16.mxu0 0
    %2706 = vmatpush1.bf16.msra.mxu0 %v1507
    %2707 = vmatprep.subr.bf16.mxu0 0
    %2708 = vmatpush1.bf16.msra.mxu0 %v1508
    %2709 = vmatprep.subr.bf16.mxu0 0
    %2710 = vmatpush1.bf16.msra.mxu0 %v1509
    %2711 = vmatprep.subr.bf16.mxu0 0
    %2712 = vmatpush1.bf16.msra.mxu0 %v1510
    %2713 = vmatprep.subr.bf16.mxu0 0
    %2714 = vmatpush1.bf16.msra.mxu0 %v1511
    %2715 = vmatprep.subr.bf16.mxu0 0
    %2716 = vmatpush1.bf16.msra.mxu0 %v1512
    %2717 = vmatprep.subr.bf16.mxu0 0
    %2718 = vmatpush1.bf16.msra.mxu0 %v1513
    %2719 = vmatprep.subr.bf16.mxu0 0
    %2720 = vmatpush1.bf16.msra.mxu0 %v1514
    %2721 = vmatprep.subr.bf16.mxu0 0
    %2722 = vmatpush1.bf16.msra.mxu0 %v1515
    %2723 = vmatprep.subr.bf16.mxu0 0
    %2724 = vmatpush1.bf16.msra.mxu0 %v1516
    %2725 = vmatprep.subr.bf16.mxu0 0
    %2726 = vmatpush1.bf16.msra.mxu0 %v1517
    %2727 = vmatprep.subr.bf16.mxu0 0
    %2728 = vmatpush1.bf16.msra.mxu0 %v1518
    %2729 = vmatprep.subr.bf16.mxu0 0
    %2730 = vmatpush1.bf16.msra.mxu0 %v1519
    %2731 = vmatprep.subr.bf16.mxu0 0
    %2732 = vmatpush1.bf16.msra.mxu0 %v1520
    %2733 = vmatprep.subr.bf16.mxu0 0
    %2734 = vmatpush1.bf16.msra.mxu0 %v1521
    %2735 = vmatprep.subr.bf16.mxu0 0
    %2736 = vmatpush1.bf16.msra.mxu0 %v1522
    %2737 = vmatprep.mubr.bf16.mxu0 %v2643
    %2738 = vmatmul.mubr.bf16.gmra.mrb[0].mxu0 %v2642
    %v2739 = vpop.f32.mrb[0].mxu0
    %v2740 = vadd.f32 %v2700, %v2739
    %v2741 = vpop.f32.mrb[0].mxu0
    %v2742 = vpop.f32.mrb[0].mxu0
    %v2743 = vpop.f32.mrb[0].mxu0
    %2744 = vdwg.mxu0
    %2745 = vmatprep.subr.bf16.mxu0 0
    %2746 = vmatpush1.bf16.msra.mxu0 %v1523
    %2747 = vmatprep.subr.bf16.mxu0 0
    %2748 = vmatpush1.bf16.msra.mxu0 %v1524
    %2749 = vmatprep.subr.bf16.mxu0 0
    %2750 = vmatpush1.bf16.msra.mxu0 %v1525
    %2751 = vmatprep.subr.bf16.mxu0 0
    %2752 = vmatpush1.bf16.msra.mxu0 %v1526
    %2753 = vmatprep.subr.bf16.mxu0 0
    %2754 = vmatpush1.bf16.msra.mxu0 %v1527
    %2755 = vmatprep.subr.bf16.mxu0 0
    %2756 = vmatpush1.bf16.msra.mxu0 %v1528
    %2757 = vmatprep.subr.bf16.mxu0 0
    %2758 = vmatpush1.bf16.msra.mxu0 %v1529
    %2759 = vmatprep.subr.bf16.mxu0 0
    %2760 = vmatpush1.bf16.msra.mxu0 %v1530
    %2761 = vmatprep.subr.bf16.mxu0 0
    %2762 = vmatpush1.bf16.msra.mxu0 %v1531
    %2763 = vmatprep.subr.bf16.mxu0 0
    %2764 = vmatpush1.bf16.msra.mxu0 %v1532
    %2765 = vmatprep.subr.bf16.mxu0 0
    %2766 = vmatpush1.bf16.msra.mxu0 %v1533
    %2767 = vmatprep.subr.bf16.mxu0 0
    %2768 = vmatpush1.bf16.msra.mxu0 %v1534
    %2769 = vmatprep.subr.bf16.mxu0 0
    %2770 = vmatpush1.bf16.msra.mxu0 %v1535
    %2771 = vmatprep.subr.bf16.mxu0 0
    %2772 = vmatpush1.bf16.msra.mxu0 %v1536
    %2773 = vmatprep.subr.bf16.mxu0 0
    %2774 = vmatpush1.bf16.msra.mxu0 %v1537
    %2775 = vmatprep.subr.bf16.mxu0 0
    %2776 = vmatpush1.bf16.msra.mxu0 %v1538
    %2777 = vmatprep.mubr.bf16.mxu0 %v2645
    %2778 = vmatmul.mubr.bf16.gmra.mrb[0].mxu0 %v2644
    %v2779 = vpop.f32.mrb[0].mxu0
    %v2780 = vadd.f32 %v2740, %v2779
    %v2781 = vpop.f32.mrb[0].mxu0
    %v2782 = vpop.f32.mrb[0].mxu0
    %v2783 = vpop.f32.mrb[0].mxu0
    %2784 = vdwg.mxu0
    %2785 = vmatprep.subr.bf16.mxu0 0
    %2786 = vmatpush1.bf16.msra.mxu0 %v1539
    %2787 = vmatprep.subr.bf16.mxu0 0
    %2788 = vmatpush1.bf16.msra.mxu0 %v1540
    %2789 = vmatprep.subr.bf16.mxu0 0
    %2790 = vmatpush1.bf16.msra.mxu0 %v1541
    %2791 = vmatprep.subr.bf16.mxu0 0
    %2792 = vmatpush1.bf16.msra.mxu0 %v1542
    %2793 = vmatprep.subr.bf16.mxu0 0
    %2794 = vmatpush1.bf16.msra.mxu0 %v1543
    %2795 = vmatprep.subr.bf16.mxu0 0
    %2796 = vmatpush1.bf16.msra.mxu0 %v1544
    %2797 = vmatprep.subr.bf16.mxu0 0
    %2798 = vmatpush1.bf16.msra.mxu0 %v1545
    %2799 = vmatprep.subr.bf16.mxu0 0
    %2800 = vmatpush1.bf16.msra.mxu0 %v1546
    %2801 = vmatprep.subr.bf16.mxu0 0
    %2802 = vmatpush1.bf16.msra.mxu0 %v1547
    %2803 = vmatprep.subr.bf16.mxu0 0
    %2804 = vmatpush1.bf16.msra.mxu0 %v1548
    %2805 = vmatprep.subr.bf16.mxu0 0
    %2806 = vmatpush1.bf16.msra.mxu0 %v1549
    %2807 = vmatprep.subr.bf16.mxu0 0
    %2808 = vmatpush1.bf16.msra.mxu0 %v1550
    %2809 = vmatprep.subr.bf16.mxu0 0
    %2810 = vmatpush1.bf16.msra.mxu0 %v1551
    %2811 = vmatprep.subr.bf16.mxu0 0
    %2812 = vmatpush1.bf16.msra.mxu0 %v1552
    %2813 = vmatprep.subr.bf16.mxu0 0
    %2814 = vmatpush1.bf16.msra.mxu0 %v1553
    %2815 = vmatprep.subr.bf16.mxu0 0
    %2816 = vmatpush1.bf16.msra.mxu0 %v1554
    %2817 = vmatprep.mubr.bf16.mxu0 %v2647
    %2818 = vmatmul.mubr.bf16.gmra.mrb[0].mxu0 %v2646
    %v2819 = vpop.f32.mrb[0].mxu0
    %v2820 = vadd.f32 %v2780, %v2819
    %v2821 = vpop.f32.mrb[0].mxu0
    %v2822 = vpop.f32.mrb[0].mxu0
    %v2823 = vpop.f32.mrb[0].mxu0
    %2824 = vdwg.mxu0
    %2825 = vmatprep.subr.bf16.mxu0 0
    %2826 = vmatpush1.bf16.msra.mxu0 %v1555
    %2827 = vmatprep.subr.bf16.mxu0 0
    %2828 = vmatpush1.bf16.msra.mxu0 %v1556
    %2829 = vmatprep.subr.bf16.mxu0 0
    %2830 = vmatpush1.bf16.msra.mxu0 %v1557
    %2831 = vmatprep.subr.bf16.mxu0 0
    %2832 = vmatpush1.bf16.msra.mxu0 %v1558
    %2833 = vmatprep.subr.bf16.mxu0 0
    %2834 = vmatpush1.bf16.msra.mxu0 %v1559
    %2835 = vmatprep.subr.bf16.mxu0 0
    %2836 = vmatpush1.bf16.msra.mxu0 %v1560
    %2837 = vmatprep.subr.bf16.mxu0 0
    %2838 = vmatpush1.bf16.msra.mxu0 %v1561
    %2839 = vmatprep.subr.bf16.mxu0 0
    %2840 = vmatpush1.bf16.msra.mxu0 %v1562
    %2841 = vmatprep.subr.bf16.mxu0 0
    %2842 = vmatpush1.bf16.msra.mxu0 %v1563
    %2843 = vmatprep.subr.bf16.mxu0 0
    %2844 = vmatpush1.bf16.msra.mxu0 %v1564
    %2845 = vmatprep.subr.bf16.mxu0 0
    %2846 = vmatpush1.bf16.msra.mxu0 %v1565
    %2847 = vmatprep.subr.bf16.mxu0 0
    %2848 = vmatpush1.bf16.msra.mxu0 %v1566
    %2849 = vmatprep.subr.bf16.mxu0 0
    %2850 = vmatpush1.bf16.msra.mxu0 %v1567
    %2851 = vmatprep.subr.bf16.mxu0 0
    %2852 = vmatpush1.bf16.msra.mxu0 %v1568
    %2853 = vmatprep.subr.bf16.mxu0 0
    %2854 = vmatpush1.bf16.msra.mxu0 %v1569
    %2855 = vmatprep.subr.bf16.mxu0 0
    %2856 = vmatpush1.bf16.msra.mxu0 %v1570
    %2857 = vmatprep.mubr.bf16.mxu0 %v2649
    %2858 = vmatmul.mubr.bf16.gmra.mrb[0].mxu0 %v2648
    %v2859 = vpop.f32.mrb[0].mxu0
    %v2860 = vadd.f32 %v2820, %v2859
    %v2861 = vpop.f32.mrb[0].mxu0
    %v2862 = vpop.f32.mrb[0].mxu0
    %v2863 = vpop.f32.mrb[0].mxu0
    %2864 = vdwg.mxu0
    %2865 = vmatprep.subr.bf16.mxu0 0
    %2866 = vmatpush1.bf16.msra.mxu0 %v1571
    %2867 = vmatprep.subr.bf16.mxu0 0
    %2868 = vmatpush1.bf16.msra.mxu0 %v1572
    %2869 = vmatprep.subr.bf16.mxu0 0
    %2870 = vmatpush1.bf16.msra.mxu0 %v1573
    %2871 = vmatprep.subr.bf16.mxu0 0
    %2872 = vmatpush1.bf16.msra.mxu0 %v1574
    %2873 = vmatprep.subr.bf16.mxu0 0
    %2874 = vmatpush1.bf16.msra.mxu0 %v1575
    %2875 = vmatprep.subr.bf16.mxu0 0
    %2876 = vmatpush1.bf16.msra.mxu0 %v1576
    %2877 = vmatprep.subr.bf16.mxu0 0
    %2878 = vmatpush1.bf16.msra.mxu0 %v1577
    %2879 = vmatprep.subr.bf16.mxu0 0
    %2880 = vmatpush1.bf16.msra.mxu0 %v1578
    %2881 = vmatprep.subr.bf16.mxu0 0
    %2882 = vmatpush1.bf16.msra.mxu0 %v1579
    %2883 = vmatprep.subr.bf16.mxu0 0
    %2884 = vmatpush1.bf16.msra.mxu0 %v1580
    %2885 = vmatprep.subr.bf16.mxu0 0
    %2886 = vmatpush1.bf16.msra.mxu0 %v1581
    %2887 = vmatprep.subr.bf16.mxu0 0
    %2888 = vmatpush1.bf16.msra.mxu0 %v1582
    %2889 = vmatprep.subr.bf16.mxu0 0
    %2890 = vmatpush1.bf16.msra.mxu0 %v1583
    %2891 = vmatprep.subr.bf16.mxu0 0
    %2892 = vmatpush1.bf16.msra.mxu0 %v1584
    %2893 = vmatprep.subr.bf16.mxu0 0
    %2894 = vmatpush1.bf16.msra.mxu0 %v1585
    %2895 = vmatprep.subr.bf16.mxu0 0
    %2896 = vmatpush1.bf16.msra.mxu0 %v1586
    %2897 = vmatprep.mubr.bf16.mxu0 %v2651
    %2898 = vmatmul.mubr.bf16.gmra.mrb[0].mxu0 %v2650
    %v2899 = vpop.f32.mrb[0].mxu0
    %v2900 = vadd.f32 %v2860, %v2899
    %v2901 = vpop.f32.mrb[0].mxu0
    %v2902 = vpop.f32.mrb[0].mxu0
    %v2903 = vpop.f32.mrb[0].mxu0
    %2904 = vdwg.mxu0
    %2905 = vmatprep.subr.bf16.mxu0 0
    %2906 = vmatpush1.bf16.msra.mxu0 %v1587
    %2907 = vmatprep.subr.bf16.mxu0 0
    %2908 = vmatpush1.bf16.msra.mxu0 %v1588
    %2909 = vmatprep.subr.bf16.mxu0 0
    %2910 = vmatpush1.bf16.msra.mxu0 %v1589
    %2911 = vmatprep.subr.bf16.mxu0 0
    %2912 = vmatpush1.bf16.msra.mxu0 %v1590
    %2913 = vmatprep.subr.bf16.mxu0 0
    %2914 = vmatpush1.bf16.msra.mxu0 %v1591
    %2915 = vmatprep.subr.bf16.mxu0 0
    %2916 = vmatpush1.bf16.msra.mxu0 %v1592
    %2917 = vmatprep.subr.bf16.mxu0 0
    %2918 = vmatpush1.bf16.msra.mxu0 %v1593
    %2919 = vmatprep.subr.bf16.mxu0 0
    %2920 = vmatpush1.bf16.msra.mxu0 %v1594
    %2921 = vmatprep.subr.bf16.mxu0 0
    %2922 = vmatpush1.bf16.msra.mxu0 %v1595
    %2923 = vmatprep.subr.bf16.mxu0 0
    %2924 = vmatpush1.bf16.msra.mxu0 %v1596
    %2925 = vmatprep.subr.bf16.mxu0 0
    %2926 = vmatpush1.bf16.msra.mxu0 %v1597
    %2927 = vmatprep.subr.bf16.mxu0 0
    %2928 = vmatpush1.bf16.msra.mxu0 %v1598
    %2929 = vmatprep.subr.bf16.mxu0 0
    %2930 = vmatpush1.bf16.msra.mxu0 %v1599
    %2931 = vmatprep.subr.bf16.mxu0 0
    %2932 = vmatpush1.bf16.msra.mxu0 %v1600
    %2933 = vmatprep.subr.bf16.mxu0 0
    %2934 = vmatpush1.bf16.msra.mxu0 %v1601
    %2935 = vmatprep.subr.bf16.mxu0 0
    %2936 = vmatpush1.bf16.msra.mxu0 %v1602
    %2937 = vmatprep.mubr.bf16.mxu0 %v2653
    %2938 = vmatmul.mubr.bf16.gmra.mrb[0].mxu0 %v2652
    %v2939 = vpop.f32.mrb[0].mxu0
    %v2940 = vadd.f32 %v2900, %v2939
    %v2941 = vpop.f32.mrb[0].mxu0
    %v2942 = vpop.f32.mrb[0].mxu0
    %v2943 = vpop.f32.mrb[0].mxu0
    %2944 = vdwg.mxu0
    %2945 = vmatprep.subr.bf16.mxu0 0
    %2946 = vmatpush1.bf16.msra.mxu0 %v1603
    %2947 = vmatprep.subr.bf16.mxu0 0
    %2948 = vmatpush1.bf16.msra.mxu0 %v1604
    %2949 = vmatprep.subr.bf16.mxu0 0
    %2950 = vmatpush1.bf16.msra.mxu0 %v1605
    %2951 = vmatprep.subr.bf16.mxu0 0
    %2952 = vmatpush1.bf16.msra.mxu0 %v1606
    %2953 = vmatprep.subr.bf16.mxu0 0
    %2954 = vmatpush1.bf16.msra.mxu0 %v1607
    %2955 = vmatprep.subr.bf16.mxu0 0
    %2956 = vmatpush1.bf16.msra.mxu0 %v1608
    %2957 = vmatprep.subr.bf16.mxu0 0
    %2958 = vmatpush1.bf16.msra.mxu0 %v1609
    %2959 = vmatprep.subr.bf16.mxu0 0
    %2960 = vmatpush1.bf16.msra.mxu0 %v1610
    %2961 = vmatprep.subr.bf16.mxu0 0
    %2962 = vmatpush1.bf16.msra.mxu0 %v1611
    %2963 = vmatprep.subr.bf16.mxu0 0
    %2964 = vmatpush1.bf16.msra.mxu0 %v1612
    %2965 = vmatprep.subr.bf16.mxu0 0
    %2966 = vmatpush1.bf16.msra.mxu0 %v1613
    %2967 = vmatprep.subr.bf16.mxu0 0
    %2968 = vmatpush1.bf16.msra.mxu0 %v1614
    %2969 = vmatprep.subr.bf16.mxu0 0
    %2970 = vmatpush1.bf16.msra.mxu0 %v1615
    %2971 = vmatprep.subr.bf16.mxu0 0
    %2972 = vmatpush1.bf16.msra.mxu0 %v1616
    %2973 = vmatprep.subr.bf16.mxu0 0
    %2974 = vmatpush1.bf16.msra.mxu0 %v1617
    %2975 = vmatprep.subr.bf16.mxu0 0
    %2976 = vmatpush1.bf16.msra.mxu0 %v1618
    %2977 = vmatprep.mubr.bf16.mxu0 %v2655
    %2978 = vmatmul.mubr.bf16.gmra.mrb[0].mxu0 %v2654
    %v2979 = vpop.f32.mrb[0].mxu0
    %v2980 = vadd.f32 %v2940, %v2979
    %v2981 = vpop.f32.mrb[0].mxu0
    %v2982 = vpop.f32.mrb[0].mxu0
    %v2983 = vpop.f32.mrb[0].mxu0
    %2984 = vdwg.mxu0
    %2985 = vmatprep.subr.bf16.mxu0 0
    %2986 = vmatpush1.bf16.msra.mxu0 %v1619
    %2987 = vmatprep.subr.bf16.mxu0 0
    %2988 = vmatpush1.bf16.msra.mxu0 %v1620
    %2989 = vmatprep.subr.bf16.mxu0 0
    %2990 = vmatpush1.bf16.msra.mxu0 %v1621
    %2991 = vmatprep.subr.bf16.mxu0 0
    %2992 = vmatpush1.bf16.msra.mxu0 %v1622
    %2993 = vmatprep.subr.bf16.mxu0 0
    %2994 = vmatpush1.bf16.msra.mxu0 %v1623
    %2995 = vmatprep.subr.bf16.mxu0 0
    %2996 = vmatpush1.bf16.msra.mxu0 %v1624
    %2997 = vmatprep.subr.bf16.mxu0 0
    %2998 = vmatpush1.bf16.msra.mxu0 %v1625
    %2999 = vmatprep.subr.bf16.mxu0 0
    %3000 = vmatpush1.bf16.msra.mxu0 %v1626
    %3001 = vmatprep.subr.bf16.mxu0 0
    %3002 = vmatpush1.bf16.msra.mxu0 %v1627
    %3003 = vmatprep.subr.bf16.mxu0 0
    %3004 = vmatpush1.bf16.msra.mxu0 %v1628
    %3005 = vmatprep.subr.bf16.mxu0 0
    %3006 = vmatpush1.bf16.msra.mxu0 %v1629
    %3007 = vmatprep.subr.bf16.mxu0 0
    %3008 = vmatpush1.bf16.msra.mxu0 %v1630
    %3009 = vmatprep.subr.bf16.mxu0 0
    %3010 = vmatpush1.bf16.msra.mxu0 %v1631
    %3011 = vmatprep.subr.bf16.mxu0 0
    %3012 = vmatpush1.bf16.msra.mxu0 %v1632
    %3013 = vmatprep.subr.bf16.mxu0 0
    %3014 = vmatpush1.bf16.msra.mxu0 %v1633
    %3015 = vmatprep.subr.bf16.mxu0 0
    %3016 = vmatpush1.bf16.msra.mxu0 %v1634
    %3017 = vmatprep.mubr.bf16.mxu0 %v2657
    %3018 = vmatmul.mubr.bf16.gmra.mrb[0].mxu0 %v2656
    %v3019 = vpop.f32.mrb[0].mxu0
    %v3020 = vadd.f32 %v2980, %v3019
    %v3021 = vpop.f32.mrb[0].mxu0
    %v3022 = vpop.f32.mrb[0].mxu0
    %v3023 = vpop.f32.mrb[0].mxu0
    %3024 = vdwg.mxu0
    %3025 = vmatprep.subr.bf16.mxu0 0
    %3026 = vmatpush1.bf16.msra.mxu0 %v1635
    %3027 = vmatprep.subr.bf16.mxu0 0
    %3028 = vmatpush1.bf16.msra.mxu0 %v1636
    %3029 = vmatprep.subr.bf16.mxu0 0
    %3030 = vmatpush1.bf16.msra.mxu0 %v1637
    %3031 = vmatprep.subr.bf16.mxu0 0
    %3032 = vmatpush1.bf16.msra.mxu0 %v1638
    %3033 = vmatprep.subr.bf16.mxu0 0
    %3034 = vmatpush1.bf16.msra.mxu0 %v1639
    %3035 = vmatprep.subr.bf16.mxu0 0
    %3036 = vmatpush1.bf16.msra.mxu0 %v1640
    %3037 = vmatprep.subr.bf16.mxu0 0
    %3038 = vmatpush1.bf16.msra.mxu0 %v1641
    %3039 = vmatprep.subr.bf16.mxu0 0
    %3040 = vmatpush1.bf16.msra.mxu0 %v1642
    %3041 = vmatprep.subr.bf16.mxu0 0
    %3042 = vmatpush1.bf16.msra.mxu0 %v1643
    %3043 = vmatprep.subr.bf16.mxu0 0
    %3044 = vmatpush1.bf16.msra.mxu0 %v1644
    %3045 = vmatprep.subr.bf16.mxu0 0
    %3046 = vmatpush1.bf16.msra.mxu0 %v1645
    %3047 = vmatprep.subr.bf16.mxu0 0
    %3048 = vmatpush1.bf16.msra.mxu0 %v1646
    %3049 = vmatprep.subr.bf16.mxu0 0
    %3050 = vmatpush1.bf16.msra.mxu0 %v1647
    %3051 = vmatprep.subr.bf16.mxu0 0
    %3052 = vmatpush1.bf16.msra.mxu0 %v1648
    %3053 = vmatprep.subr.bf16.mxu0 0
    %3054 = vmatpush1.bf16.msra.mxu0 %v1649
    %3055 = vmatprep.subr.bf16.mxu0 0
    %3056 = vmatpush1.bf16.msra.mxu0 %v1650
    %3057 = vmatprep.mubr.bf16.mxu0 %v2659
    %3058 = vmatmul.mubr.bf16.gmra.mrb[0].mxu0 %v2658
    %v3059 = vpop.f32.mrb[0].mxu0
    %v3060 = vadd.f32 %v3020, %v3059
    %v3061 = vpop.f32.mrb[0].mxu0
    %v3062 = vpop.f32.mrb[0].mxu0
    %v3063 = vpop.f32.mrb[0].mxu0
    %3064 = vdwg.mxu0
    %3065 = vmatprep.subr.bf16.mxu0 0
    %3066 = vmatpush1.bf16.msra.mxu0 %v1651
    %3067 = vmatprep.subr.bf16.mxu0 0
    %3068 = vmatpush1.bf16.msra.mxu0 %v1652
    %3069 = vmatprep.subr.bf16.mxu0 0
    %3070 = vmatpush1.bf16.msra.mxu0 %v1653
    %3071 = vmatprep.subr.bf16.mxu0 0
    %3072 = vmatpush1.bf16.msra.mxu0 %v1654
    %3073 = vmatprep.subr.bf16.mxu0 0
    %3074 = vmatpush1.bf16.msra.mxu0 %v1655
    %3075 = vmatprep.subr.bf16.mxu0 0
    %3076 = vmatpush1.bf16.msra.mxu0 %v1656
    %3077 = vmatprep.subr.bf16.mxu0 0
    %3078 = vmatpush1.bf16.msra.mxu0 %v1657
    %3079 = vmatprep.subr.bf16.mxu0 0
    %3080 = vmatpush1.bf16.msra.mxu0 %v1658
    %3081 = vmatprep.subr.bf16.mxu0 0
    %3082 = vmatpush1.bf16.msra.mxu0 %v1659
    %3083 = vmatprep.subr.bf16.mxu0 0
    %3084 = vmatpush1.bf16.msra.mxu0 %v1660
    %3085 = vmatprep.subr.bf16.mxu0 0
    %3086 = vmatpush1.bf16.msra.mxu0 %v1661
    %3087 = vmatprep.subr.bf16.mxu0 0
    %3088 = vmatpush1.bf16.msra.mxu0 %v1662
    %3089 = vmatprep.subr.bf16.mxu0 0
    %3090 = vmatpush1.bf16.msra.mxu0 %v1663
    %3091 = vmatprep.subr.bf16.mxu0 0
    %3092 = vmatpush1.bf16.msra.mxu0 %v1664
    %3093 = vmatprep.subr.bf16.mxu0 0
    %3094 = vmatpush1.bf16.msra.mxu0 %v1665
    %3095 = vmatprep.subr.bf16.mxu0 0
    %3096 = vmatpush1.bf16.msra.mxu0 %v1666
    %3097 = vmatprep.mubr.bf16.mxu0 %v2661
    %3098 = vmatmul.mubr.bf16.gmra.mrb[0].mxu0 %v2660
    %v3099 = vpop.f32.mrb[0].mxu0
    %v3100 = vadd.f32 %v3060, %v3099
    %v3101 = vpop.f32.mrb[0].mxu0
    %v3102 = vpop.f32.mrb[0].mxu0
    %v3103 = vpop.f32.mrb[0].mxu0
    %3104 = vdwg.mxu0
    %3105 = vmatprep.subr.bf16.mxu0 0
    %3106 = vmatpush1.bf16.msra.mxu0 %v1667
    %3107 = vmatprep.subr.bf16.mxu0 0
    %3108 = vmatpush1.bf16.msra.mxu0 %v1668
    %3109 = vmatprep.subr.bf16.mxu0 0
    %3110 = vmatpush1.bf16.msra.mxu0 %v1669
    %3111 = vmatprep.subr.bf16.mxu0 0
    %3112 = vmatpush1.bf16.msra.mxu0 %v1670
    %3113 = vmatprep.subr.bf16.mxu0 0
    %3114 = vmatpush1.bf16.msra.mxu0 %v1671
    %3115 = vmatprep.subr.bf16.mxu0 0
    %3116 = vmatpush1.bf16.msra.mxu0 %v1672
    %3117 = vmatprep.subr.bf16.mxu0 0
    %3118 = vmatpush1.bf16.msra.mxu0 %v1673
    %3119 = vmatprep.subr.bf16.mxu0 0
    %3120 = vmatpush1.bf16.msra.mxu0 %v1674
    %3121 = vmatprep.subr.bf16.mxu0 0
    %3122 = vmatpush1.bf16.msra.mxu0 %v1675
    %3123 = vmatprep.subr.bf16.mxu0 0
    %3124 = vmatpush1.bf16.msra.mxu0 %v1676
    %3125 = vmatprep.subr.bf16.mxu0 0
    %3126 = vmatpush1.bf16.msra.mxu0 %v1677
    %3127 = vmatprep.subr.bf16.mxu0 0
    %3128 = vmatpush1.bf16.msra.mxu0 %v1678
    %3129 = vmatprep.subr.bf16.mxu0 0
    %3130 = vmatpush1.bf16.msra.mxu0 %v1679
    %3131 = vmatprep.subr.bf16.mxu0 0
    %3132 = vmatpush1.bf16.msra.mxu0 %v1680
    %3133 = vmatprep.subr.bf16.mxu0 0
    %3134 = vmatpush1.bf16.msra.mxu0 %v1681
    %3135 = vmatprep.subr.bf16.mxu0 0
    %3136 = vmatpush1.bf16.msra.mxu0 %v1682
    %3137 = vmatprep.mubr.bf16.mxu0 %v2663
    %3138 = vmatmul.mubr.bf16.gmra.mrb[0].mxu0 %v2662
    %v3139 = vpop.f32.mrb[0].mxu0
    %v3140 = vadd.f32 %v3100, %v3139
    %v3141 = vpop.f32.mrb[0].mxu0
    %v3142 = vpop.f32.mrb[0].mxu0
    %v3143 = vpop.f32.mrb[0].mxu0
    %3144 = vdwg.mxu0
    %3145 = vmatprep.subr.bf16.mxu0 0
    %3146 = vmatpush1.bf16.msra.mxu0 %v1683
    %3147 = vmatprep.subr.bf16.mxu0 0
    %3148 = vmatpush1.bf16.msra.mxu0 %v1684
    %3149 = vmatprep.subr.bf16.mxu0 0
    %3150 = vmatpush1.bf16.msra.mxu0 %v1685
    %3151 = vmatprep.subr.bf16.mxu0 0
    %3152 = vmatpush1.bf16.msra.mxu0 %v1686
    %3153 = vmatprep.subr.bf16.mxu0 0
    %3154 = vmatpush1.bf16.msra.mxu0 %v1687
    %3155 = vmatprep.subr.bf16.mxu0 0
    %3156 = vmatpush1.bf16.msra.mxu0 %v1688
    %3157 = vmatprep.subr.bf16.mxu0 0
    %3158 = vmatpush1.bf16.msra.mxu0 %v1689
    %3159 = vmatprep.subr.bf16.mxu0 0
    %3160 = vmatpush1.bf16.msra.mxu0 %v1690
    %3161 = vmatprep.subr.bf16.mxu0 0
    %3162 = vmatpush1.bf16.msra.mxu0 0
    %3163 = vmatprep.subr.bf16.mxu0 0
    %3164 = vmatpush1.bf16.msra.mxu0 0
    %3165 = vmatprep.subr.bf16.mxu0 0
    %3166 = vmatpush1.bf16.msra.mxu0 0
    %3167 = vmatprep.subr.bf16.mxu0 0
    %3168 = vmatpush1.bf16.msra.mxu0 0
    %3169 = vmatprep.subr.bf16.mxu0 0
    %3170 = vmatpush1.bf16.msra.mxu0 0
    %3171 = vmatprep.subr.bf16.mxu0 0
    %3172 = vmatpush1.bf16.msra.mxu0 0
    %3173 = vmatprep.subr.bf16.mxu0 0
    %3174 = vmatpush1.bf16.msra.mxu0 0
    %3175 = vmatprep.subr.bf16.mxu0 0
    %3176 = vmatpush1.bf16.msra.mxu0 0
    %3177 = vmatprep.mubr.bf16.mxu0 0
    %3178 = vmatmul.mubr.bf16.gmra.mrb[0].mxu0 %v2664
    %v3179 = vpop.f32.mrb[0].mxu0
    %v3180 = vadd.f32 %v3140, %v3179
    %v3181 = vpop.f32.mrb[0].mxu0
    %v3182 = vpop.f32.mrb[0].mxu0
    %v3183 = vpop.f32.mrb[0].mxu0
    %3184 = vdwg.mxu0
    %vm3185 = vcmp.ge.f32.partialorder %v3180, 0.0
    %v3186 = vmul.f32 %v3180, 0.2
    %v3187 = vsel %vm3185, %v3180, %v3186
    %3188 = vmatprep.subr.mxu0 0.0
    %3189 = vmatpush1.msra.mxu0 %v495
    %3190 = vmatprep.subr.mxu0 0.0
    %3191 = vmatpush1.msra.mxu0 %v496
    %3192 = vmatprep.subr.mxu0 0.0
    %3193 = vmatpush1.msra.mxu0 %v497
    %3194 = vmatprep.subr.mxu0 0.0
    %3195 = vmatpush1.msra.mxu0 %v498
    %3196 = vmatprep.subr.mxu0 0.0
    %3197 = vmatpush1.msra.mxu0 %v499
    %3198 = vmatprep.subr.mxu0 0.0
    %3199 = vmatpush1.msra.mxu0 %v500
    %3200 = vmatprep.subr.mxu0 0.0
    %3201 = vmatpush1.msra.mxu0 %v501
    %3202 = vmatprep.subr.mxu0 0.0
    %3203 = vmatpush1.msra.mxu0 %v502
    %3204 = vmatprep.subr.mxu0 0.0
    %3205 = vmatpush1.msra.mxu0 %v503
    %3206 = vmatprep.subr.mxu0 0.0
    %3207 = vmatpush1.msra.mxu0 %v504
    %3208 = vmatprep.subr.mxu0 0.0
    %3209 = vmatpush1.msra.mxu0 %v505
    %3210 = vmatprep.subr.mxu0 0.0
    %3211 = vmatpush1.msra.mxu0 %v506
    %3212 = vmatprep.subr.mxu0 0.0
    %3213 = vmatpush1.msra.mxu0 %v507
    %3214 = vmatprep.subr.mxu0 0.0
    %3215 = vmatpush1.msra.mxu0 %v508
    %3216 = vmatprep.subr.mxu0 0.0
    %3217 = vmatpush1.msra.mxu0 %v509
    %3218 = vmatprep.subr.mxu0 0.0
    %3219 = vmatpush1.msra.mxu0 %v510
    %3220 = vmatprep.subr.mxu0 0.0
    %3221 = vmatpush1.msra.mxu0 0.0
    %3222 = vmatprep.subr.mxu0 0.0
    %3223 = vmatpush1.msra.mxu0 0.0
    %3224 = vmatprep.subr.mxu0 0.0
    %3225 = vmatpush1.msra.mxu0 0.0
    %3226 = vmatprep.subr.mxu0 0.0
    %3227 = vmatpush1.msra.mxu0 0.0
    %3228 = vmatprep.subr.mxu0 0.0
    %3229 = vmatpush1.msra.mxu0 0.0
    %3230 = vmatprep.subr.mxu0 0.0
    %3231 = vmatpush1.msra.mxu0 0.0
    %3232 = vmatprep.subr.mxu0 0.0
    %3233 = vmatpush1.msra.mxu0 0.0
    %3234 = vmatprep.subr.mxu0 0.0
    %3235 = vmatpush1.msra.mxu0 0.0
    %3236 = vmatprep.subr.mxu0 0.0
    %3237 = vmatpush1.msra.mxu0 0.0
    %3238 = vmatprep.subr.mxu0 0.0
    %3239 = vmatpush1.msra.mxu0 0.0
    %3240 = vmatprep.subr.mxu0 0.0
    %3241 = vmatpush1.msra.mxu0 0.0
    %3242 = vmatprep.subr.mxu0 0.0
    %3243 = vmatpush1.msra.mxu0 0.0
    %3244 = vmatprep.subr.mxu0 0.0
    %3245 = vmatpush1.msra.mxu0 0.0
    %3246 = vmatprep.subr.mxu0 0.0
    %3247 = vmatpush1.msra.mxu0 0.0
    %3248 = vmatprep.subr.mxu0 0.0
    %3249 = vmatpush1.msra.mxu0 0.0
    %3250 = vmatprep.subr.mxu0 0.0
    %3251 = vmatpush1.msra.mxu0 0.0
    %3252 = vmatprep.mubr.f32.mxu0 0.0
    %3253 = vmatmul.mubr.f32.gmra.mrb[0].mxu0 %v3187
    %v3254 = vpop.f32.mrb[0].mxu0
    %v3255 = vadd.f32 %v2418, %v3254
    %v3256 = vpop.f32.mrb[0].mxu0
    %3257 = vdwg.mxu0
    %v3258 = vtanh.pop %v3255
    %3259 = vst [vmem:[#allocation12] sm:$0x3] %v3258
    %v3260 = vld [vmem:[#allocation7] sm:$0xff]
    %v3261 = vld [vmem:[#allocation7 + $0x8] sm:$0xff]
    %v3262 = vld [vmem:[#allocation7 + $0x10] sm:$0xff]
    %v3263 = vld [vmem:[#allocation7 + $0x18] sm:$0xff]
    %v3264 = vld [vmem:[#allocation7 + $0x20] sm:$0xff]
    %v3265 = vld [vmem:[#allocation7 + $0x28] sm:$0xff]
    %v3266 = vld [vmem:[#allocation7 + $0x30] sm:$0x3]
    %v3274 = vcombine.high %v3260, %v3260
    %v3276 = vunpack.c.l.s4 1983009808
    %v3277 = vunpack.c.0.s8 %v3276
    %v3278 = vlaneseq
    %v3279 = vshrl.u32 %v3278, 7
    %v3280 = vsub.s32 %v3277, %v3279
    %v3281 = vrot.slane %v3260, %v3280
    %v3283 = vunpack.c.l.s4 1983009808
    %v3284 = vunpack.c.0.s8 %v3283
    %v3285 = vlaneseq
    %v3286 = vshrl.u32 %v3285, 7
    %v3287 = vsub.s32 %v3284, %v3286
    %v3288 = vrot.slane %v3274, %v3287
    %v3289 = vcombine.high %v3281, %v3281
    %v3290 = vcombine.high %v3288, %v3288
    %v3291 = vcombine.high %v3261, %v3261
    %v3293 = vunpack.c.l.s4 1983009808
    %v3294 = vunpack.c.0.s8 %v3293
    %v3295 = vlaneseq
    %v3296 = vshrl.u32 %v3295, 7
    %v3297 = vsub.s32 %v3294, %v3296
    %v3298 = vrot.slane %v3261, %v3297
    %v3300 = vunpack.c.l.s4 1983009808
    %v3301 = vunpack.c.0.s8 %v3300
    %v3302 = vlaneseq
    %v3303 = vshrl.u32 %v3302, 7
    %v3304 = vsub.s32 %v3301, %v3303
    %v3305 = vrot.slane %v3291, %v3304
    %v3306 = vcombine.high %v3298, %v3298
    %v3307 = vcombine.high %v3305, %v3305
    %v3308 = vcombine.high %v3262, %v3262
    %v3310 = vunpack.c.l.s4 1983009808
    %v3311 = vunpack.c.0.s8 %v3310
    %v3312 = vlaneseq
    %v3313 = vshrl.u32 %v3312, 7
    %v3314 = vsub.s32 %v3311, %v3313
    %v3315 = vrot.slane %v3262, %v3314
    %v3317 = vunpack.c.l.s4 1983009808
    %v3318 = vunpack.c.0.s8 %v3317
    %v3319 = vlaneseq
    %v3320 = vshrl.u32 %v3319, 7
    %v3321 = vsub.s32 %v3318, %v3320
    %v3322 = vrot.slane %v3308, %v3321
    %v3323 = vcombine.high %v3315, %v3315
    %v3324 = vcombine.high %v3322, %v3322
    %v3325 = vcombine.high %v3263, %v3263
    %v3327 = vunpack.c.l.s4 1983009808
    %v3328 = vunpack.c.0.s8 %v3327
    %v3329 = vlaneseq
    %v3330 = vshrl.u32 %v3329, 7
    %v3331 = vsub.s32 %v3328, %v3330
    %v3332 = vrot.slane %v3263, %v3331
    %v3334 = vunpack.c.l.s4 1983009808
    %v3335 = vunpack.c.0.s8 %v3334
    %v3336 = vlaneseq
    %v3337 = vshrl.u32 %v3336, 7
    %v3338 = vsub.s32 %v3335, %v3337
    %v3339 = vrot.slane %v3325, %v3338
    %v3340 = vcombine.high %v3332, %v3332
    %v3341 = vcombine.high %v3339, %v3339
    %v3342 = vcombine.high %v3264, %v3264
    %v3344 = vunpack.c.l.s4 1983009808
    %v3345 = vunpack.c.0.s8 %v3344
    %v3346 = vlaneseq
    %v3347 = vshrl.u32 %v3346, 7
    %v3348 = vsub.s32 %v3345, %v3347
    %v3349 = vrot.slane %v3264, %v3348
    %v3351 = vunpack.c.l.s4 1983009808
    %v3352 = vunpack.c.0.s8 %v3351
    %v3353 = vlaneseq
    %v3354 = vshrl.u32 %v3353, 7
    %v3355 = vsub.s32 %v3352, %v3354
    %v3356 = vrot.slane %v3342, %v3355
    %v3357 = vcombine.high %v3349, %v3349
    %v3358 = vcombine.high %v3356, %v3356
    %v3359 = vcombine.high %v3265, %v3265
    %v3361 = vunpack.c.l.s4 1983009808
    %v3362 = vunpack.c.0.s8 %v3361
    %v3363 = vlaneseq
    %v3364 = vshrl.u32 %v3363, 7
    %v3365 = vsub.s32 %v3362, %v3364
    %v3366 = vrot.slane %v3265, %v3365
    %v3368 = vunpack.c.l.s4 1983009808
    %v3369 = vunpack.c.0.s8 %v3368
    %v3370 = vlaneseq
    %v3371 = vshrl.u32 %v3370, 7
    %v3372 = vsub.s32 %v3369, %v3371
    %v3373 = vrot.slane %v3359, %v3372
    %v3374 = vcombine.high %v3366, %v3366
    %v3375 = vcombine.high %v3373, %v3373
    %v3377 = vunpack.c.l.s4 1983009808
    %v3378 = vunpack.c.0.s8 %v3377
    %v3379 = vlaneseq
    %v3380 = vshrl.u32 %v3379, 7
    %v3381 = vsub.s32 %v3378, %v3380
    %v3382 = vrot.slane %v3266, %v3381
    %v3408 = vpack.c.bf16 %v3281, %v3281
    %v3409 = vpack.c.bf16 %v3289, %v3289
    %v3410 = vpack.c.bf16 %v3288, %v3288
    %v3411 = vpack.c.bf16 %v3290, %v3290
    %v3412 = vpack.c.bf16 %v3298, %v3298
    %v3413 = vpack.c.bf16 %v3306, %v3306
    %v3414 = vpack.c.bf16 %v3305, %v3305
    %v3415 = vpack.c.bf16 %v3307, %v3307
    %v3416 = vpack.c.bf16 %v3315, %v3315
    %v3417 = vpack.c.bf16 %v3323, %v3323
    %v3418 = vpack.c.bf16 %v3322, %v3322
    %v3419 = vpack.c.bf16 %v3324, %v3324
    %v3420 = vpack.c.bf16 %v3332, %v3332
    %v3421 = vpack.c.bf16 %v3340, %v3340
    %v3422 = vpack.c.bf16 %v3339, %v3339
    %v3423 = vpack.c.bf16 %v3341, %v3341
    %v3424 = vpack.c.bf16 %v3349, %v3349
    %v3425 = vpack.c.bf16 %v3357, %v3357
    %v3426 = vpack.c.bf16 %v3356, %v3356
    %v3427 = vpack.c.bf16 %v3358, %v3358
    %v3428 = vpack.c.bf16 %v3366, %v3366
    %v3429 = vpack.c.bf16 %v3374, %v3374
    %v3430 = vpack.c.bf16 %v3373, %v3373
    %v3431 = vpack.c.bf16 %v3375, %v3375
    %v3432 = vpack.c.bf16 %v3382, %v3382
    %3433 = vmatprep.subr.bf16.mxu0 0
    %3434 = vmatpush1.bf16.msra.mxu0 %v1491
    %3435 = vmatprep.subr.bf16.mxu0 0
    %3436 = vmatpush1.bf16.msra.mxu0 %v1492
    %3437 = vmatprep.subr.bf16.mxu0 0
    %3438 = vmatpush1.bf16.msra.mxu0 %v1493
    %3439 = vmatprep.subr.bf16.mxu0 0
    %3440 = vmatpush1.bf16.msra.mxu0 %v1494
    %3441 = vmatprep.subr.bf16.mxu0 0
    %3442 = vmatpush1.bf16.msra.mxu0 %v1495
    %3443 = vmatprep.subr.bf16.mxu0 0
    %3444 = vmatpush1.bf16.msra.mxu0 %v1496
    %3445 = vmatprep.subr.bf16.mxu0 0
    %3446 = vmatpush1.bf16.msra.mxu0 %v1497
    %3447 = vmatprep.subr.bf16.mxu0 0
    %3448 = vmatpush1.bf16.msra.mxu0 %v1498
    %3449 = vmatprep.subr.bf16.mxu0 0
    %3450 = vmatpush1.bf16.msra.mxu0 %v1499
    %3451 = vmatprep.subr.bf16.mxu0 0
    %3452 = vmatpush1.bf16.msra.mxu0 %v1500
    %3453 = vmatprep.subr.bf16.mxu0 0
    %3454 = vmatpush1.bf16.msra.mxu0 %v1501
    %3455 = vmatprep.subr.bf16.mxu0 0
    %3456 = vmatpush1.bf16.msra.mxu0 %v1502
    %3457 = vmatprep.subr.bf16.mxu0 0
    %3458 = vmatpush1.bf16.msra.mxu0 %v1503
    %3459 = vmatprep.subr.bf16.mxu0 0
    %3460 = vmatpush1.bf16.msra.mxu0 %v1504
    %3461 = vmatprep.subr.bf16.mxu0 0
    %3462 = vmatpush1.bf16.msra.mxu0 %v1505
    %3463 = vmatprep.subr.bf16.mxu0 0
    %3464 = vmatpush1.bf16.msra.mxu0 %v1506
    %3465 = vmatprep.mubr.bf16.mxu0 %v3409
    %3466 = vmatmul.mubr.bf16.gmra.mrb[0].mxu0 %v3408
    %v3467 = vpop.f32.mrb[0].mxu0
    %v3468 = vadd.f32 %v689, %v3467
    %v3469 = vpop.f32.mrb[0].mxu0
    %v3470 = vpop.f32.mrb[0].mxu0
    %v3471 = vpop.f32.mrb[0].mxu0
    %3472 = vdwg.mxu0
    %3473 = vmatprep.subr.bf16.mxu0 0
    %3474 = vmatpush1.bf16.msra.mxu0 %v1507
    %3475 = vmatprep.subr.bf16.mxu0 0
    %3476 = vmatpush1.bf16.msra.mxu0 %v1508
    %3477 = vmatprep.subr.bf16.mxu0 0
    %3478 = vmatpush1.bf16.msra.mxu0 %v1509
    %3479 = vmatprep.subr.bf16.mxu0 0
    %3480 = vmatpush1.bf16.msra.mxu0 %v1510
    %3481 = vmatprep.subr.bf16.mxu0 0
    %3482 = vmatpush1.bf16.msra.mxu0 %v1511
    %3483 = vmatprep.subr.bf16.mxu0 0
    %3484 = vmatpush1.bf16.msra.mxu0 %v1512
    %3485 = vmatprep.subr.bf16.mxu0 0
    %3486 = vmatpush1.bf16.msra.mxu0 %v1513
    %3487 = vmatprep.subr.bf16.mxu0 0
    %3488 = vmatpush1.bf16.msra.mxu0 %v1514
    %3489 = vmatprep.subr.bf16.mxu0 0
    %3490 = vmatpush1.bf16.msra.mxu0 %v1515
    %3491 = vmatprep.subr.bf16.mxu0 0
    %3492 = vmatpush1.bf16.msra.mxu0 %v1516
    %3493 = vmatprep.subr.bf16.mxu0 0
    %3494 = vmatpush1.bf16.msra.mxu0 %v1517
    %3495 = vmatprep.subr.bf16.mxu0 0
    %3496 = vmatpush1.bf16.msra.mxu0 %v1518
    %3497 = vmatprep.subr.bf16.mxu0 0
    %3498 = vmatpush1.bf16.msra.mxu0 %v1519
    %3499 = vmatprep.subr.bf16.mxu0 0
    %3500 = vmatpush1.bf16.msra.mxu0 %v1520
    %3501 = vmatprep.subr.bf16.mxu0 0
    %3502 = vmatpush1.bf16.msra.mxu0 %v1521
    %3503 = vmatprep.subr.bf16.mxu0 0
    %3504 = vmatpush1.bf16.msra.mxu0 %v1522
    %3505 = vmatprep.mubr.bf16.mxu0 %v3411
    %3506 = vmatmul.mubr.bf16.gmra.mrb[0].mxu0 %v3410
    %v3507 = vpop.f32.mrb[0].mxu0
    %v3508 = vadd.f32 %v3468, %v3507
    %v3509 = vpop.f32.mrb[0].mxu0
    %v3510 = vpop.f32.mrb[0].mxu0
    %v3511 = vpop.f32.mrb[0].mxu0
    %3512 = vdwg.mxu0
    %3513 = vmatprep.subr.bf16.mxu0 0
    %3514 = vmatpush1.bf16.msra.mxu0 %v1523
    %3515 = vmatprep.subr.bf16.mxu0 0
    %3516 = vmatpush1.bf16.msra.mxu0 %v1524
    %3517 = vmatprep.subr.bf16.mxu0 0
    %3518 = vmatpush1.bf16.msra.mxu0 %v1525
    %3519 = vmatprep.subr.bf16.mxu0 0
    %3520 = vmatpush1.bf16.msra.mxu0 %v1526
    %3521 = vmatprep.subr.bf16.mxu0 0
    %3522 = vmatpush1.bf16.msra.mxu0 %v1527
    %3523 = vmatprep.subr.bf16.mxu0 0
    %3524 = vmatpush1.bf16.msra.mxu0 %v1528
    %3525 = vmatprep.subr.bf16.mxu0 0
    %3526 = vmatpush1.bf16.msra.mxu0 %v1529
    %3527 = vmatprep.subr.bf16.mxu0 0
    %3528 = vmatpush1.bf16.msra.mxu0 %v1530
    %3529 = vmatprep.subr.bf16.mxu0 0
    %3530 = vmatpush1.bf16.msra.mxu0 %v1531
    %3531 = vmatprep.subr.bf16.mxu0 0
    %3532 = vmatpush1.bf16.msra.mxu0 %v1532
    %3533 = vmatprep.subr.bf16.mxu0 0
    %3534 = vmatpush1.bf16.msra.mxu0 %v1533
    %3535 = vmatprep.subr.bf16.mxu0 0
    %3536 = vmatpush1.bf16.msra.mxu0 %v1534
    %3537 = vmatprep.subr.bf16.mxu0 0
    %3538 = vmatpush1.bf16.msra.mxu0 %v1535
    %3539 = vmatprep.subr.bf16.mxu0 0
    %3540 = vmatpush1.bf16.msra.mxu0 %v1536
    %3541 = vmatprep.subr.bf16.mxu0 0
    %3542 = vmatpush1.bf16.msra.mxu0 %v1537
    %3543 = vmatprep.subr.bf16.mxu0 0
    %3544 = vmatpush1.bf16.msra.mxu0 %v1538
    %3545 = vmatprep.mubr.bf16.mxu0 %v3413
    %3546 = vmatmul.mubr.bf16.gmra.mrb[0].mxu0 %v3412
    %v3547 = vpop.f32.mrb[0].mxu0
    %v3548 = vadd.f32 %v3508, %v3547
    %v3549 = vpop.f32.mrb[0].mxu0
    %v3550 = vpop.f32.mrb[0].mxu0
    %v3551 = vpop.f32.mrb[0].mxu0
    %3552 = vdwg.mxu0
    %3553 = vmatprep.subr.bf16.mxu0 0
    %3554 = vmatpush1.bf16.msra.mxu0 %v1539
    %3555 = vmatprep.subr.bf16.mxu0 0
    %3556 = vmatpush1.bf16.msra.mxu0 %v1540
    %3557 = vmatprep.subr.bf16.mxu0 0
    %3558 = vmatpush1.bf16.msra.mxu0 %v1541
    %3559 = vmatprep.subr.bf16.mxu0 0
    %3560 = vmatpush1.bf16.msra.mxu0 %v1542
    %3561 = vmatprep.subr.bf16.mxu0 0
    %3562 = vmatpush1.bf16.msra.mxu0 %v1543
    %3563 = vmatprep.subr.bf16.mxu0 0
    %3564 = vmatpush1.bf16.msra.mxu0 %v1544
    %3565 = vmatprep.subr.bf16.mxu0 0
    %3566 = vmatpush1.bf16.msra.mxu0 %v1545
    %3567 = vmatprep.subr.bf16.mxu0 0
    %3568 = vmatpush1.bf16.msra.mxu0 %v1546
    %3569 = vmatprep.subr.bf16.mxu0 0
    %3570 = vmatpush1.bf16.msra.mxu0 %v1547
    %3571 = vmatprep.subr.bf16.mxu0 0
    %3572 = vmatpush1.bf16.msra.mxu0 %v1548
    %3573 = vmatprep.subr.bf16.mxu0 0
    %3574 = vmatpush1.bf16.msra.mxu0 %v1549
    %3575 = vmatprep.subr.bf16.mxu0 0
    %3576 = vmatpush1.bf16.msra.mxu0 %v1550
    %3577 = vmatprep.subr.bf16.mxu0 0
    %3578 = vmatpush1.bf16.msra.mxu0 %v1551
    %3579 = vmatprep.subr.bf16.mxu0 0
    %3580 = vmatpush1.bf16.msra.mxu0 %v1552
    %3581 = vmatprep.subr.bf16.mxu0 0
    %3582 = vmatpush1.bf16.msra.mxu0 %v1553
    %3583 = vmatprep.subr.bf16.mxu0 0
    %3584 = vmatpush1.bf16.msra.mxu0 %v1554
    %3585 = vmatprep.mubr.bf16.mxu0 %v3415
    %3586 = vmatmul.mubr.bf16.gmra.mrb[0].mxu0 %v3414
    %v3587 = vpop.f32.mrb[0].mxu0
    %v3588 = vadd.f32 %v3548, %v3587
    %v3589 = vpop.f32.mrb[0].mxu0
    %v3590 = vpop.f32.mrb[0].mxu0
    %v3591 = vpop.f32.mrb[0].mxu0
    %3592 = vdwg.mxu0
    %3593 = vmatprep.subr.bf16.mxu0 0
    %3594 = vmatpush1.bf16.msra.mxu0 %v1555
    %3595 = vmatprep.subr.bf16.mxu0 0
    %3596 = vmatpush1.bf16.msra.mxu0 %v1556
    %3597 = vmatprep.subr.bf16.mxu0 0
    %3598 = vmatpush1.bf16.msra.mxu0 %v1557
    %3599 = vmatprep.subr.bf16.mxu0 0
    %3600 = vmatpush1.bf16.msra.mxu0 %v1558
    %3601 = vmatprep.subr.bf16.mxu0 0
    %3602 = vmatpush1.bf16.msra.mxu0 %v1559
    %3603 = vmatprep.subr.bf16.mxu0 0
    %3604 = vmatpush1.bf16.msra.mxu0 %v1560
    %3605 = vmatprep.subr.bf16.mxu0 0
    %3606 = vmatpush1.bf16.msra.mxu0 %v1561
    %3607 = vmatprep.subr.bf16.mxu0 0
    %3608 = vmatpush1.bf16.msra.mxu0 %v1562
    %3609 = vmatprep.subr.bf16.mxu0 0
    %3610 = vmatpush1.bf16.msra.mxu0 %v1563
    %3611 = vmatprep.subr.bf16.mxu0 0
    %3612 = vmatpush1.bf16.msra.mxu0 %v1564
    %3613 = vmatprep.subr.bf16.mxu0 0
    %3614 = vmatpush1.bf16.msra.mxu0 %v1565
    %3615 = vmatprep.subr.bf16.mxu0 0
    %3616 = vmatpush1.bf16.msra.mxu0 %v1566
    %3617 = vmatprep.subr.bf16.mxu0 0
    %3618 = vmatpush1.bf16.msra.mxu0 %v1567
    %3619 = vmatprep.subr.bf16.mxu0 0
    %3620 = vmatpush1.bf16.msra.mxu0 %v1568
    %3621 = vmatprep.subr.bf16.mxu0 0
    %3622 = vmatpush1.bf16.msra.mxu0 %v1569
    %3623 = vmatprep.subr.bf16.mxu0 0
    %3624 = vmatpush1.bf16.msra.mxu0 %v1570
    %3625 = vmatprep.mubr.bf16.mxu0 %v3417
    %3626 = vmatmul.mubr.bf16.gmra.mrb[0].mxu0 %v3416
    %v3627 = vpop.f32.mrb[0].mxu0
    %v3628 = vadd.f32 %v3588, %v3627
    %v3629 = vpop.f32.mrb[0].mxu0
    %v3630 = vpop.f32.mrb[0].mxu0
    %v3631 = vpop.f32.mrb[0].mxu0
    %3632 = vdwg.mxu0
    %3633 = vmatprep.subr.bf16.mxu0 0
    %3634 = vmatpush1.bf16.msra.mxu0 %v1571
    %3635 = vmatprep.subr.bf16.mxu0 0
    %3636 = vmatpush1.bf16.msra.mxu0 %v1572
    %3637 = vmatprep.subr.bf16.mxu0 0
    %3638 = vmatpush1.bf16.msra.mxu0 %v1573
    %3639 = vmatprep.subr.bf16.mxu0 0
    %3640 = vmatpush1.bf16.msra.mxu0 %v1574
    %3641 = vmatprep.subr.bf16.mxu0 0
    %3642 = vmatpush1.bf16.msra.mxu0 %v1575
    %3643 = vmatprep.subr.bf16.mxu0 0
    %3644 = vmatpush1.bf16.msra.mxu0 %v1576
    %3645 = vmatprep.subr.bf16.mxu0 0
    %3646 = vmatpush1.bf16.msra.mxu0 %v1577
    %3647 = vmatprep.subr.bf16.mxu0 0
    %3648 = vmatpush1.bf16.msra.mxu0 %v1578
    %3649 = vmatprep.subr.bf16.mxu0 0
    %3650 = vmatpush1.bf16.msra.mxu0 %v1579
    %3651 = vmatprep.subr.bf16.mxu0 0
    %3652 = vmatpush1.bf16.msra.mxu0 %v1580
    %3653 = vmatprep.subr.bf16.mxu0 0
    %3654 = vmatpush1.bf16.msra.mxu0 %v1581
    %3655 = vmatprep.subr.bf16.mxu0 0
    %3656 = vmatpush1.bf16.msra.mxu0 %v1582
    %3657 = vmatprep.subr.bf16.mxu0 0
    %3658 = vmatpush1.bf16.msra.mxu0 %v1583
    %3659 = vmatprep.subr.bf16.mxu0 0
    %3660 = vmatpush1.bf16.msra.mxu0 %v1584
    %3661 = vmatprep.subr.bf16.mxu0 0
    %3662 = vmatpush1.bf16.msra.mxu0 %v1585
    %3663 = vmatprep.subr.bf16.mxu0 0
    %3664 = vmatpush1.bf16.msra.mxu0 %v1586
    %3665 = vmatprep.mubr.bf16.mxu0 %v3419
    %3666 = vmatmul.mubr.bf16.gmra.mrb[0].mxu0 %v3418
    %v3667 = vpop.f32.mrb[0].mxu0
    %v3668 = vadd.f32 %v3628, %v3667
    %v3669 = vpop.f32.mrb[0].mxu0
    %v3670 = vpop.f32.mrb[0].mxu0
    %v3671 = vpop.f32.mrb[0].mxu0
    %3672 = vdwg.mxu0
    %3673 = vmatprep.subr.bf16.mxu0 0
    %3674 = vmatpush1.bf16.msra.mxu0 %v1587
    %3675 = vmatprep.subr.bf16.mxu0 0
    %3676 = vmatpush1.bf16.msra.mxu0 %v1588
    %3677 = vmatprep.subr.bf16.mxu0 0
    %3678 = vmatpush1.bf16.msra.mxu0 %v1589
    %3679 = vmatprep.subr.bf16.mxu0 0
    %3680 = vmatpush1.bf16.msra.mxu0 %v1590
    %3681 = vmatprep.subr.bf16.mxu0 0
    %3682 = vmatpush1.bf16.msra.mxu0 %v1591
    %3683 = vmatprep.subr.bf16.mxu0 0
    %3684 = vmatpush1.bf16.msra.mxu0 %v1592
    %3685 = vmatprep.subr.bf16.mxu0 0
    %3686 = vmatpush1.bf16.msra.mxu0 %v1593
    %3687 = vmatprep.subr.bf16.mxu0 0
    %3688 = vmatpush1.bf16.msra.mxu0 %v1594
    %3689 = vmatprep.subr.bf16.mxu0 0
    %3690 = vmatpush1.bf16.msra.mxu0 %v1595
    %3691 = vmatprep.subr.bf16.mxu0 0
    %3692 = vmatpush1.bf16.msra.mxu0 %v1596
    %3693 = vmatprep.subr.bf16.mxu0 0
    %3694 = vmatpush1.bf16.msra.mxu0 %v1597
    %3695 = vmatprep.subr.bf16.mxu0 0
    %3696 = vmatpush1.bf16.msra.mxu0 %v1598
    %3697 = vmatprep.subr.bf16.mxu0 0
    %3698 = vmatpush1.bf16.msra.mxu0 %v1599
    %3699 = vmatprep.subr.bf16.mxu0 0
    %3700 = vmatpush1.bf16.msra.mxu0 %v1600
    %3701 = vmatprep.subr.bf16.mxu0 0
    %3702 = vmatpush1.bf16.msra.mxu0 %v1601
    %3703 = vmatprep.subr.bf16.mxu0 0
    %3704 = vmatpush1.bf16.msra.mxu0 %v1602
    %3705 = vmatprep.mubr.bf16.mxu0 %v3421
    %3706 = vmatmul.mubr.bf16.gmra.mrb[0].mxu0 %v3420
    %v3707 = vpop.f32.mrb[0].mxu0
    %v3708 = vadd.f32 %v3668, %v3707
    %v3709 = vpop.f32.mrb[0].mxu0
    %v3710 = vpop.f32.mrb[0].mxu0
    %v3711 = vpop.f32.mrb[0].mxu0
    %3712 = vdwg.mxu0
    %3713 = vmatprep.subr.bf16.mxu0 0
    %3714 = vmatpush1.bf16.msra.mxu0 %v1603
    %3715 = vmatprep.subr.bf16.mxu0 0
    %3716 = vmatpush1.bf16.msra.mxu0 %v1604
    %3717 = vmatprep.subr.bf16.mxu0 0
    %3718 = vmatpush1.bf16.msra.mxu0 %v1605
    %3719 = vmatprep.subr.bf16.mxu0 0
    %3720 = vmatpush1.bf16.msra.mxu0 %v1606
    %3721 = vmatprep.subr.bf16.mxu0 0
    %3722 = vmatpush1.bf16.msra.mxu0 %v1607
    %3723 = vmatprep.subr.bf16.mxu0 0
    %3724 = vmatpush1.bf16.msra.mxu0 %v1608
    %3725 = vmatprep.subr.bf16.mxu0 0
    %3726 = vmatpush1.bf16.msra.mxu0 %v1609
    %3727 = vmatprep.subr.bf16.mxu0 0
    %3728 = vmatpush1.bf16.msra.mxu0 %v1610
    %3729 = vmatprep.subr.bf16.mxu0 0
    %3730 = vmatpush1.bf16.msra.mxu0 %v1611
    %3731 = vmatprep.subr.bf16.mxu0 0
    %3732 = vmatpush1.bf16.msra.mxu0 %v1612
    %3733 = vmatprep.subr.bf16.mxu0 0
    %3734 = vmatpush1.bf16.msra.mxu0 %v1613
    %3735 = vmatprep.subr.bf16.mxu0 0
    %3736 = vmatpush1.bf16.msra.mxu0 %v1614
    %3737 = vmatprep.subr.bf16.mxu0 0
    %3738 = vmatpush1.bf16.msra.mxu0 %v1615
    %3739 = vmatprep.subr.bf16.mxu0 0
    %3740 = vmatpush1.bf16.msra.mxu0 %v1616
    %3741 = vmatprep.subr.bf16.mxu0 0
    %3742 = vmatpush1.bf16.msra.mxu0 %v1617
    %3743 = vmatprep.subr.bf16.mxu0 0
    %3744 = vmatpush1.bf16.msra.mxu0 %v1618
    %3745 = vmatprep.mubr.bf16.mxu0 %v3423
    %3746 = vmatmul.mubr.bf16.gmra.mrb[0].mxu0 %v3422
    %v3747 = vpop.f32.mrb[0].mxu0
    %v3748 = vadd.f32 %v3708, %v3747
    %v3749 = vpop.f32.mrb[0].mxu0
    %v3750 = vpop.f32.mrb[0].mxu0
    %v3751 = vpop.f32.mrb[0].mxu0
    %3752 = vdwg.mxu0
    %3753 = vmatprep.subr.bf16.mxu0 0
    %3754 = vmatpush1.bf16.msra.mxu0 %v1619
    %3755 = vmatprep.subr.bf16.mxu0 0
    %3756 = vmatpush1.bf16.msra.mxu0 %v1620
    %3757 = vmatprep.subr.bf16.mxu0 0
    %3758 = vmatpush1.bf16.msra.mxu0 %v1621
    %3759 = vmatprep.subr.bf16.mxu0 0
    %3760 = vmatpush1.bf16.msra.mxu0 %v1622
    %3761 = vmatprep.subr.bf16.mxu0 0
    %3762 = vmatpush1.bf16.msra.mxu0 %v1623
    %3763 = vmatprep.subr.bf16.mxu0 0
    %3764 = vmatpush1.bf16.msra.mxu0 %v1624
    %3765 = vmatprep.subr.bf16.mxu0 0
    %3766 = vmatpush1.bf16.msra.mxu0 %v1625
    %3767 = vmatprep.subr.bf16.mxu0 0
    %3768 = vmatpush1.bf16.msra.mxu0 %v1626
    %3769 = vmatprep.subr.bf16.mxu0 0
    %3770 = vmatpush1.bf16.msra.mxu0 %v1627
    %3771 = vmatprep.subr.bf16.mxu0 0
    %3772 = vmatpush1.bf16.msra.mxu0 %v1628
    %3773 = vmatprep.subr.bf16.mxu0 0
    %3774 = vmatpush1.bf16.msra.mxu0 %v1629
    %3775 = vmatprep.subr.bf16.mxu0 0
    %3776 = vmatpush1.bf16.msra.mxu0 %v1630
    %3777 = vmatprep.subr.bf16.mxu0 0
    %3778 = vmatpush1.bf16.msra.mxu0 %v1631
    %3779 = vmatprep.subr.bf16.mxu0 0
    %3780 = vmatpush1.bf16.msra.mxu0 %v1632
    %3781 = vmatprep.subr.bf16.mxu0 0
    %3782 = vmatpush1.bf16.msra.mxu0 %v1633
    %3783 = vmatprep.subr.bf16.mxu0 0
    %3784 = vmatpush1.bf16.msra.mxu0 %v1634
    %3785 = vmatprep.mubr.bf16.mxu0 %v3425
    %3786 = vmatmul.mubr.bf16.gmra.mrb[0].mxu0 %v3424
    %v3787 = vpop.f32.mrb[0].mxu0
    %v3788 = vadd.f32 %v3748, %v3787
    %v3789 = vpop.f32.mrb[0].mxu0
    %v3790 = vpop.f32.mrb[0].mxu0
    %v3791 = vpop.f32.mrb[0].mxu0
    %3792 = vdwg.mxu0
    %3793 = vmatprep.subr.bf16.mxu0 0
    %3794 = vmatpush1.bf16.msra.mxu0 %v1635
    %3795 = vmatprep.subr.bf16.mxu0 0
    %3796 = vmatpush1.bf16.msra.mxu0 %v1636
    %3797 = vmatprep.subr.bf16.mxu0 0
    %3798 = vmatpush1.bf16.msra.mxu0 %v1637
    %3799 = vmatprep.subr.bf16.mxu0 0
    %3800 = vmatpush1.bf16.msra.mxu0 %v1638
    %3801 = vmatprep.subr.bf16.mxu0 0
    %3802 = vmatpush1.bf16.msra.mxu0 %v1639
    %3803 = vmatprep.subr.bf16.mxu0 0
    %3804 = vmatpush1.bf16.msra.mxu0 %v1640
    %3805 = vmatprep.subr.bf16.mxu0 0
    %3806 = vmatpush1.bf16.msra.mxu0 %v1641
    %3807 = vmatprep.subr.bf16.mxu0 0
    %3808 = vmatpush1.bf16.msra.mxu0 %v1642
    %3809 = vmatprep.subr.bf16.mxu0 0
    %3810 = vmatpush1.bf16.msra.mxu0 %v1643
    %3811 = vmatprep.subr.bf16.mxu0 0
    %3812 = vmatpush1.bf16.msra.mxu0 %v1644
    %3813 = vmatprep.subr.bf16.mxu0 0
    %3814 = vmatpush1.bf16.msra.mxu0 %v1645
    %3815 = vmatprep.subr.bf16.mxu0 0
    %3816 = vmatpush1.bf16.msra.mxu0 %v1646
    %3817 = vmatprep.subr.bf16.mxu0 0
    %3818 = vmatpush1.bf16.msra.mxu0 %v1647
    %3819 = vmatprep.subr.bf16.mxu0 0
    %3820 = vmatpush1.bf16.msra.mxu0 %v1648
    %3821 = vmatprep.subr.bf16.mxu0 0
    %3822 = vmatpush1.bf16.msra.mxu0 %v1649
    %3823 = vmatprep.subr.bf16.mxu0 0
    %3824 = vmatpush1.bf16.msra.mxu0 %v1650
    %3825 = vmatprep.mubr.bf16.mxu0 %v3427
    %3826 = vmatmul.mubr.bf16.gmra.mrb[0].mxu0 %v3426
    %v3827 = vpop.f32.mrb[0].mxu0
    %v3828 = vadd.f32 %v3788, %v3827
    %v3829 = vpop.f32.mrb[0].mxu0
    %v3830 = vpop.f32.mrb[0].mxu0
    %v3831 = vpop.f32.mrb[0].mxu0
    %3832 = vdwg.mxu0
    %3833 = vmatprep.subr.bf16.mxu0 0
    %3834 = vmatpush1.bf16.msra.mxu0 %v1651
    %3835 = vmatprep.subr.bf16.mxu0 0
    %3836 = vmatpush1.bf16.msra.mxu0 %v1652
    %3837 = vmatprep.subr.bf16.mxu0 0
    %3838 = vmatpush1.bf16.msra.mxu0 %v1653
    %3839 = vmatprep.subr.bf16.mxu0 0
    %3840 = vmatpush1.bf16.msra.mxu0 %v1654
    %3841 = vmatprep.subr.bf16.mxu0 0
    %3842 = vmatpush1.bf16.msra.mxu0 %v1655
    %3843 = vmatprep.subr.bf16.mxu0 0
    %3844 = vmatpush1.bf16.msra.mxu0 %v1656
    %3845 = vmatprep.subr.bf16.mxu0 0
    %3846 = vmatpush1.bf16.msra.mxu0 %v1657
    %3847 = vmatprep.subr.bf16.mxu0 0
    %3848 = vmatpush1.bf16.msra.mxu0 %v1658
    %3849 = vmatprep.subr.bf16.mxu0 0
    %3850 = vmatpush1.bf16.msra.mxu0 %v1659
    %3851 = vmatprep.subr.bf16.mxu0 0
    %3852 = vmatpush1.bf16.msra.mxu0 %v1660
    %3853 = vmatprep.subr.bf16.mxu0 0
    %3854 = vmatpush1.bf16.msra.mxu0 %v1661
    %3855 = vmatprep.subr.bf16.mxu0 0
    %3856 = vmatpush1.bf16.msra.mxu0 %v1662
    %3857 = vmatprep.subr.bf16.mxu0 0
    %3858 = vmatpush1.bf16.msra.mxu0 %v1663
    %3859 = vmatprep.subr.bf16.mxu0 0
    %3860 = vmatpush1.bf16.msra.mxu0 %v1664
    %3861 = vmatprep.subr.bf16.mxu0 0
    %3862 = vmatpush1.bf16.msra.mxu0 %v1665
    %3863 = vmatprep.subr.bf16.mxu0 0
    %3864 = vmatpush1.bf16.msra.mxu0 %v1666
    %3865 = vmatprep.mubr.bf16.mxu0 %v3429
    %3866 = vmatmul.mubr.bf16.gmra.mrb[0].mxu0 %v3428
    %v3867 = vpop.f32.mrb[0].mxu0
    %v3868 = vadd.f32 %v3828, %v3867
    %v3869 = vpop.f32.mrb[0].mxu0
    %v3870 = vpop.f32.mrb[0].mxu0
    %v3871 = vpop.f32.mrb[0].mxu0
    %3872 = vdwg.mxu0
    %3873 = vmatprep.subr.bf16.mxu0 0
    %3874 = vmatpush1.bf16.msra.mxu0 %v1667
    %3875 = vmatprep.subr.bf16.mxu0 0
    %3876 = vmatpush1.bf16.msra.mxu0 %v1668
    %3877 = vmatprep.subr.bf16.mxu0 0
    %3878 = vmatpush1.bf16.msra.mxu0 %v1669
    %3879 = vmatprep.subr.bf16.mxu0 0
    %3880 = vmatpush1.bf16.msra.mxu0 %v1670
    %3881 = vmatprep.subr.bf16.mxu0 0
    %3882 = vmatpush1.bf16.msra.mxu0 %v1671
    %3883 = vmatprep.subr.bf16.mxu0 0
    %3884 = vmatpush1.bf16.msra.mxu0 %v1672
    %3885 = vmatprep.subr.bf16.mxu0 0
    %3886 = vmatpush1.bf16.msra.mxu0 %v1673
    %3887 = vmatprep.subr.bf16.mxu0 0
    %3888 = vmatpush1.bf16.msra.mxu0 %v1674
    %3889 = vmatprep.subr.bf16.mxu0 0
    %3890 = vmatpush1.bf16.msra.mxu0 %v1675
    %3891 = vmatprep.subr.bf16.mxu0 0
    %3892 = vmatpush1.bf16.msra.mxu0 %v1676
    %3893 = vmatprep.subr.bf16.mxu0 0
    %3894 = vmatpush1.bf16.msra.mxu0 %v1677
    %3895 = vmatprep.subr.bf16.mxu0 0
    %3896 = vmatpush1.bf16.msra.mxu0 %v1678
    %3897 = vmatprep.subr.bf16.mxu0 0
    %3898 = vmatpush1.bf16.msra.mxu0 %v1679
    %3899 = vmatprep.subr.bf16.mxu0 0
    %3900 = vmatpush1.bf16.msra.mxu0 %v1680
    %3901 = vmatprep.subr.bf16.mxu0 0
    %3902 = vmatpush1.bf16.msra.mxu0 %v1681
    %3903 = vmatprep.subr.bf16.mxu0 0
    %3904 = vmatpush1.bf16.msra.mxu0 %v1682
    %3905 = vmatprep.mubr.bf16.mxu0 %v3431
    %3906 = vmatmul.mubr.bf16.gmra.mrb[0].mxu0 %v3430
    %v3907 = vpop.f32.mrb[0].mxu0
    %v3908 = vadd.f32 %v3868, %v3907
    %v3909 = vpop.f32.mrb[0].mxu0
    %v3910 = vpop.f32.mrb[0].mxu0
    %v3911 = vpop.f32.mrb[0].mxu0
    %3912 = vdwg.mxu0
    %3913 = vmatprep.subr.bf16.mxu0 0
    %3914 = vmatpush1.bf16.msra.mxu0 %v1683
    %3915 = vmatprep.subr.bf16.mxu0 0
    %3916 = vmatpush1.bf16.msra.mxu0 %v1684
    %3917 = vmatprep.subr.bf16.mxu0 0
    %3918 = vmatpush1.bf16.msra.mxu0 %v1685
    %3919 = vmatprep.subr.bf16.mxu0 0
    %3920 = vmatpush1.bf16.msra.mxu0 %v1686
    %3921 = vmatprep.subr.bf16.mxu0 0
    %3922 = vmatpush1.bf16.msra.mxu0 %v1687
    %3923 = vmatprep.subr.bf16.mxu0 0
    %3924 = vmatpush1.bf16.msra.mxu0 %v1688
    %3925 = vmatprep.subr.bf16.mxu0 0
    %3926 = vmatpush1.bf16.msra.mxu0 %v1689
    %3927 = vmatprep.subr.bf16.mxu0 0
    %3928 = vmatpush1.bf16.msra.mxu0 %v1690
    %3929 = vmatprep.subr.bf16.mxu0 0
    %3930 = vmatpush1.bf16.msra.mxu0 0
    %3931 = vmatprep.subr.bf16.mxu0 0
    %3932 = vmatpush1.bf16.msra.mxu0 0
    %3933 = vmatprep.subr.bf16.mxu0 0
    %3934 = vmatpush1.bf16.msra.mxu0 0
    %3935 = vmatprep.subr.bf16.mxu0 0
    %3936 = vmatpush1.bf16.msra.mxu0 0
    %3937 = vmatprep.subr.bf16.mxu0 0
    %3938 = vmatpush1.bf16.msra.mxu0 0
    %3939 = vmatprep.subr.bf16.mxu0 0
    %3940 = vmatpush1.bf16.msra.mxu0 0
    %3941 = vmatprep.subr.bf16.mxu0 0
    %3942 = vmatpush1.bf16.msra.mxu0 0
    %3943 = vmatprep.subr.bf16.mxu0 0
    %3944 = vmatpush1.bf16.msra.mxu0 0
    %3945 = vmatprep.mubr.bf16.mxu0 0
    %3946 = vmatmul.mubr.bf16.gmra.mrb[0].mxu0 %v3432
    %v3947 = vpop.f32.mrb[0].mxu0
    %v3948 = vadd.f32 %v3908, %v3947
    %v3949 = vpop.f32.mrb[0].mxu0
    %v3950 = vpop.f32.mrb[0].mxu0
    %v3951 = vpop.f32.mrb[0].mxu0
    %3952 = vdwg.mxu0
    %vm3953 = vcmp.ge.f32.partialorder %v3948, 0.0
    %v3954 = vmul.f32 %v3948, 0.2
    %v3955 = vsel %vm3953, %v3948, %v3954
    %3956 = vmatprep.subr.mxu0 0.0
    %3957 = vmatpush1.msra.mxu0 %v495
    %3958 = vmatprep.subr.mxu0 0.0
    %3959 = vmatpush1.msra.mxu0 %v496
    %3960 = vmatprep.subr.mxu0 0.0
    %3961 = vmatpush1.msra.mxu0 %v497
    %3962 = vmatprep.subr.mxu0 0.0
    %3963 = vmatpush1.msra.mxu0 %v498
    %3964 = vmatprep.subr.mxu0 0.0
    %3965 = vmatpush1.msra.mxu0 %v499
    %3966 = vmatprep.subr.mxu0 0.0
    %3967 = vmatpush1.msra.mxu0 %v500
    %3968 = vmatprep.subr.mxu0 0.0
    %3969 = vmatpush1.msra.mxu0 %v501
    %3970 = vmatprep.subr.mxu0 0.0
    %3971 = vmatpush1.msra.mxu0 %v502
    %3972 = vmatprep.subr.mxu0 0.0
    %3973 = vmatpush1.msra.mxu0 %v503
    %3974 = vmatprep.subr.mxu0 0.0
    %3975 = vmatpush1.msra.mxu0 %v504
    %3976 = vmatprep.subr.mxu0 0.0
    %3977 = vmatpush1.msra.mxu0 %v505
    %3978 = vmatprep.subr.mxu0 0.0
    %3979 = vmatpush1.msra.mxu0 %v506
    %3980 = vmatprep.subr.mxu0 0.0
    %3981 = vmatpush1.msra.mxu0 %v507
    %3982 = vmatprep.subr.mxu0 0.0
    %3983 = vmatpush1.msra.mxu0 %v508
    %3984 = vmatprep.subr.mxu0 0.0
    %3985 = vmatpush1.msra.mxu0 %v509
    %3986 = vmatprep.subr.mxu0 0.0
    %3987 = vmatpush1.msra.mxu0 %v510
    %3988 = vmatprep.subr.mxu0 0.0
    %3989 = vmatpush1.msra.mxu0 0.0
    %3990 = vmatprep.subr.mxu0 0.0
    %3991 = vmatpush1.msra.mxu0 0.0
    %3992 = vmatprep.subr.mxu0 0.0
    %3993 = vmatpush1.msra.mxu0 0.0
    %3994 = vmatprep.subr.mxu0 0.0
    %3995 = vmatpush1.msra.mxu0 0.0
    %3996 = vmatprep.subr.mxu0 0.0
    %3997 = vmatpush1.msra.mxu0 0.0
    %3998 = vmatprep.subr.mxu0 0.0
    %3999 = vmatpush1.msra.mxu0 0.0
    %4000 = vmatprep.subr.mxu0 0.0
    %4001 = vmatpush1.msra.mxu0 0.0
    %4002 = vmatprep.subr.mxu0 0.0
    %4003 = vmatpush1.msra.mxu0 0.0
    %4004 = vmatprep.subr.mxu0 0.0
    %4005 = vmatpush1.msra.mxu0 0.0
    %4006 = vmatprep.subr.mxu0 0.0
    %4007 = vmatpush1.msra.mxu0 0.0
    %4008 = vmatprep.subr.mxu0 0.0
    %4009 = vmatpush1.msra.mxu0 0.0
    %4010 = vmatprep.subr.mxu0 0.0
    %4011 = vmatpush1.msra.mxu0 0.0
    %4012 = vmatprep.subr.mxu0 0.0
    %4013 = vmatpush1.msra.mxu0 0.0
    %4014 = vmatprep.subr.mxu0 0.0
    %4015 = vmatpush1.msra.mxu0 0.0
    %4016 = vmatprep.subr.mxu0 0.0
    %4017 = vmatpush1.msra.mxu0 0.0
    %4018 = vmatprep.subr.mxu0 0.0
    %4019 = vmatpush1.msra.mxu0 0.0
    %4020 = vmatprep.mubr.f32.mxu0 0.0
    %4021 = vmatmul.mubr.f32.gmra.mrb[0].mxu0 %v3955
    %v4022 = vpop.f32.mrb[0].mxu0
    %v4023 = vadd.f32 %v2418, %v4022
    %v4024 = vpop.f32.mrb[0].mxu0
    %4025 = vdwg.mxu0
    %v4026 = vtanh.pop %v4023
    %4027 = vst [vmem:[#allocation14] sm:$0x3] %v4026
    // Predicated region
    $region50: #{tpu_custom_call.1} parent=1 // pred_check
      _
    $region51: #{tpu_custom_call.1} parent=1 // pred_check_branch
      %4029 = sbr.rel (0) target = $region53
    $region52: #{tpu_custom_call.1} parent=1 // pred_region
      %s4031 = ssub.s32 32, 32
      %4032 = vsyncadd [#allocation4], %s4031
      %s4034 = sshll.u32 [#allocation11], 4
      %s4035 = int_to_ptr.vmem [resolvable:$true] %s4034
      %4037 = dma.vmem_to_hbm [thread:$0]  %s4035, 32, %s7, [#allocation4]
    $region53: #{tpu_custom_call.1} parent=1 // pred_fallthru
      _
    // Predicated region
    $region54: #{tpu_custom_call.1} parent=1 // pred_check
      _
    $region55: #{tpu_custom_call.1} parent=1 // pred_check_branch
      %4039 = sbr.rel (0) target = $region57
    $region56: #{tpu_custom_call.1} parent=1 // pred_region
      %s4041 = ssub.s32 32, 32
      %4042 = vsyncadd [#allocation13], %s4041
      %s4044 = sshll.u32 [#allocation12], 4
      %s4045 = int_to_ptr.vmem [resolvable:$true] %s4044
      %4047 = dma.vmem_to_hbm [thread:$0]  %s4045, 32, %s8, [#allocation13]
    $region57: #{tpu_custom_call.1} parent=1 // pred_fallthru
      _
    // Predicated region
    $region58: #{tpu_custom_call.1} parent=1 // pred_check
      _
    $region59: #{tpu_custom_call.1} parent=1 // pred_check_branch
      %4049 = sbr.rel (0) target = $region61
    $region60: #{tpu_custom_call.1} parent=1 // pred_region
      %s4051 = ssub.s32 32, 32
      %4052 = vsyncadd [#allocation13], %s4051
      %s4054 = sshll.u32 [#allocation14], 4
      %s4055 = int_to_ptr.vmem [resolvable:$true] %s4054
      %4057 = dma.vmem_to_hbm [thread:$0]  %s4055, 32, %s9, [#allocation13]
    $region61: #{tpu_custom_call.1} parent=1 // pred_fallthru
      _
    // Predicated region
    $region62: #{tpu_custom_call.1} parent=1 // pred_check
      _
    $region63: #{tpu_custom_call.1} parent=1 // pred_check_branch
      %4059 = sbr.rel (0) target = $region65
    $region64: #{tpu_custom_call.1} parent=1 // pred_region
      %4060 = dma.done [#allocation4], 32
    $region65: #{tpu_custom_call.1} parent=1 // pred_fallthru
      _
    // Predicated region
    $region66: #{tpu_custom_call.1} parent=1 // pred_check
      _
    $region67: #{tpu_custom_call.1} parent=1 // pred_check_branch
      %4062 = sbr.rel (0) target = $region69
    $region68: #{tpu_custom_call.1} parent=1 // pred_region
      %4063 = dma.done [#allocation13], 32
    $region69: #{tpu_custom_call.1} parent=1 // pred_fallthru
      _
    // Predicated region
    $region70: #{tpu_custom_call.1} parent=1 // pred_check
      _
    $region71: #{tpu_custom_call.1} parent=1 // pred_check_branch
      %4065 = sbr.rel (0) target = $region73
    $region72: #{tpu_custom_call.1} parent=1 // pred_region
      %4066 = dma.done [#allocation13], 32
    $region73: #{tpu_custom_call.1} parent=1 // pred_fallthru
      _
    %4067 = vsyncpa [#allocation3], 1
    %4068 = vsyncpa [#allocation6], 1
    %4069 = vsyncpa [#allocation9], 1
    %4070 = vsyncpa [#allocation4], 1
    %4071 = vsyncpa [#allocation13], 1

</llo_original>
